<compile_context>
chip_gen: v7x
topology: tpu7x:2x2x1
jax: 0.10.0
libtpu: 0.0.40
codegen_flags: <defaults>
</compile_context>

<pallas_src>
import functools

import jax
import jax.numpy as jnp
from jax import lax
from jax.experimental import pallas as pl
from jax.experimental.pallas import tpu as pltpu


# ---------------------------------------------------------------------------
# Fused CBAM kernel: one batch element per grid step.
# ---------------------------------------------------------------------------
def _cbam_kernel(x_ref, w1b_ref, w2b_ref, wsp_ref, o_ref, pad_ref, sflat_ref,
                 *, h, w):
    # x_ref / o_ref : (1, C, H*W) blocks, lane-dense in H*W
    # w1b_ref       : (Ch, C+1)  = [W1 | b1]
    # w2b_ref       : (C, Ch+1)  = [W2 | b2]
    # wsp_ref       : (99,) f32 in SMEM = 98 conv taps (ci, kh, kw) + bias
    # pad_ref       : VMEM scratch (2, H+6, W+6)  zero-padded pooled maps
    # sflat_ref     : VMEM scratch (1, H*W)       flattened spatial gate
    c = x_ref.shape[1]
    hw = h * w
    ch = w1b_ref.shape[0]
    hp, wp = h + 6, w + 6

    # Upcast once at the VMEM boundary (supports bf16 HBM I/O; v5e has no
    # native bf16 VPU/EUP math).
    x = x_ref[0].astype(jnp.float32)                         # (C, HW)

    # ---------------- ChannelGate ----------------
    avg = jnp.sum(x, axis=-1, keepdims=True) * (1.0 / hw)    # (C, 1)
    mx = jnp.max(x, axis=-1, keepdims=True)                  # (C, 1)
    pooled = jnp.concatenate([avg, mx], axis=-1)             # (C, 2)

    w1 = w1b_ref[:, :c]                                      # (Ch, C)
    b1 = w1b_ref[:, c:]                                      # (Ch, 1)
    w2 = w2b_ref[:, :ch]                                     # (C, Ch)
    b2 = w2b_ref[:, ch:]                                     # (C, 1)

    # Shared MLP on both pooled columns at once (two small MXU matmuls).
    hidden = jnp.maximum(
        jnp.dot(w1, pooled, preferred_element_type=jnp.float32) + b1, 0.0)
    att2 = jnp.dot(w2, hidden, preferred_element_type=jnp.float32)   # (C, 2)
    att = att2[:, 0:1] + att2[:, 1:2] + 2.0 * b2     # b2 added once per branch
    cscale = jax.nn.sigmoid(att)                               # (C, 1)

    y = x * cscale                                             # (C, HW), on-chip only

    # ---------------- SpatialGate ----------------
    # Channel pool (max & mean over C) on the flat lane-dense layout.
    cmax = jnp.max(y, axis=0, keepdims=True)                   # (1, HW)
    cmean = jnp.sum(y, axis=0, keepdims=True) * (1.0 / c)      # (1, HW)

    # Zero only the 3-wide halo; the interior is fully overwritten below.
    for ci in range(2):
        pad_ref[ci, 0:3, :] = jnp.zeros((3, wp), jnp.float32)
        pad_ref[ci, 3 + h:hp, :] = jnp.zeros((3, wp), jnp.float32)
        pad_ref[ci, :, 0:3] = jnp.zeros((hp, 3), jnp.float32)
        pad_ref[ci, :, 3 + w:wp] = jnp.zeros((hp, 3), jnp.float32)

    # Re-tile the tiny pooled maps into the 2D padded scratch (one row store
    # per image row; no big-value reshape).
    for i in range(h):
        pad_ref[0, 3 + i:4 + i, 3:3 + w] = cmax[:, i * w:(i + 1) * w]
        pad_ref[1, 3 + i:4 + i, 3:3 + w] = cmean[:, i * w:(i + 1) * w]

    # Implicit 7x7 conv, Cin=2 -> Cout=1: 14 hoisted band loads, 7 lane-shift
    # taps per band, 4 independent accumulators (fills VALU slots).
    accs = [jnp.zeros((h, w), jnp.float32) for _ in range(4)]
    for ci in range(2):
        for kh in range(7):
            band = pad_ref[ci, kh:kh + h, :]                   # (H, W+6)
            for kw in range(7):
                t = ci * 49 + kh * 7 + kw
                accs[t % 4] = accs[t % 4] + band[:, kw:kw + w] * wsp_ref[t]
    acc = (accs[0] + accs[1]) + (accs[2] + accs[3]) + wsp_ref[98]   # + bias
    sgate = jax.nn.sigmoid(acc)                                # (H, W)

    # Flatten the small gate back to (1, HW) through scratch so the final
    # big store stays lane-dense.
    for i in range(h):
        sflat_ref[:, i * w:(i + 1) * w] = sgate[i:i + 1, :]

    o_ref[0] = (y * sflat_ref[...]).astype(o_ref.dtype)


# ---------------------------------------------------------------------------
# Wrapper: full CBAM forward in a single fused pallas_call.
# ---------------------------------------------------------------------------
def cbam_forward(x, params):
    """x: (N, C, H, W). params hold PyTorch-shaped CBAM parameters."""
    N, C, H, W = x.shape
    w1 = params["mlp_w1"].astype(jnp.float32)       # (Ch, C)
    b1 = params["mlp_b1"].astype(jnp.float32)       # (Ch,)
    w2 = params["mlp_w2"].astype(jnp.float32)       # (C, Ch)
    b2 = params["mlp_b2"].astype(jnp.float32)       # (C,)
    wsp = params["spatial_w"].astype(jnp.float32)   # (1, 2, 7, 7)
    bsp = params["spatial_b"].astype(jnp.float32)   # (1,)
    Ch = w1.shape[0]
    HW = H * W

    x_flat = x.reshape(N, C, HW)                    # free metadata reshape

    # Pack MLP params as [W | b]: fewer tiny inputs, zero-cost ref slices.
    w1b = jnp.concatenate([w1, b1[:, None]], axis=1)          # (Ch, C+1)
    w2b = jnp.concatenate([w2, b2[:, None]], axis=1)          # (C, Ch+1)
    # 98 conv taps (ci, kh, kw ordering) + bias, consumed as SMEM scalars.
    wsp_flat = jnp.concatenate([wsp.reshape(-1), bsp.reshape(-1)])   # (99,)

    itemsize = jnp.dtype(x.dtype).itemsize
    blk_bytes = C * HW * itemsize
    need = (4 * blk_bytes                        # in + out, double-buffered
            + C * HW * 4                         # on-chip gated intermediate y
            + (2 * (H + 6) * (W + 6) + HW) * 4   # scratch
            + (Ch * (C + 1) + C * (Ch + 1)) * 4  # packed params
            + (2 << 20))                         # slack
    vmem_limit = int(min(64 * 2**20, max(need, 16 * 2**20)))  # v7x-safe cap

    cost = pl.CostEstimate(
        flops=int(N * (6 * C * HW + 196 * HW + 8 * C * Ch)),
        transcendentals=int(N * (C + HW)),
        bytes_accessed=int(2 * N * C * HW * itemsize),
    )

    out_flat = pl.pallas_call(
        functools.partial(_cbam_kernel, h=H, w=W),
        out_shape=jax.ShapeDtypeStruct((N, C, HW), x.dtype),
        grid=(N,),
        in_specs=[
            pl.BlockSpec((1, C, HW), lambda n: (n, 0, 0)),      # x (lane dense)
            pl.BlockSpec((Ch, C + 1), lambda n: (0, 0)),        # [W1 | b1]
            pl.BlockSpec((C, Ch + 1), lambda n: (0, 0)),        # [W2 | b2]
            pl.BlockSpec(memory_space=pltpu.MemorySpace.SMEM),  # conv taps+bias
        ],
        out_specs=pl.BlockSpec((1, C, HW), lambda n: (n, 0, 0)),
        scratch_shapes=[
            pltpu.VMEM((2, H + 6, W + 6), jnp.float32),   # padded pooled maps
            pltpu.VMEM((1, HW), jnp.float32),             # flattened spatial gate
        ],
        compiler_params=pltpu.CompilerParams(
            dimension_semantics=("parallel",),
            vmem_limit_bytes=vmem_limit),
        cost_estimate=cost,
    )(x_flat, w1b, w2b, wsp_flat)

    return out_flat.reshape(N, C, H, W)               # free metadata reshape


# ---------------------------------------------------------------------------
# Pure-JAX reference (mirrors the PyTorch module) for correctness checking.
# ---------------------------------------------------------------------------
def _cbam_reference(x, params):
    w1, b1 = params["mlp_w1"], params["mlp_b1"]
    w2, b2 = params["mlp_w2"], params["mlp_b2"]
    wsp, bsp = params["spatial_w"], params["spatial_b"]

    avg = jnp.mean(x, axis=(2, 3))
    mx = jnp.max(x, axis=(2, 3))

    def mlp(p):
        return jnp.maximum(p @ w1.T + b1, 0.0) @ w2.T + b2

    att = mlp(avg) + mlp(mx)
    cscale = jax.nn.sigmoid(att)[:, :, None, None]
    y = x * cscale

    comp = jnp.stack([jnp.max(y, axis=1), jnp.mean(y, axis=1)], axis=1)
    conv = lax.conv_general_dilated(
        comp, wsp, window_strides=(1, 1), padding=((3, 3), (3, 3)),
        dimension_numbers=("NCHW", "OIHW", "NCHW")) + bsp.reshape(1, 1, 1, 1)
    sscale = jax.nn.sigmoid(conv)
    return y * sscale


if __name__ == "__main__":
    # CBAM(gate_channels=32, reduction_ratio=16) on a (2, 32, 16, 16) input.
    N, C, H, W = 2, 32, 16, 16
    reduction_ratio = 16
    Ch = C // reduction_ratio

    key = jax.random.PRNGKey(0)
    kx, k1, k2, k3, k4, k5, k6 = jax.random.split(key, 7)
    x = jax.random.normal(kx, (N, C, H, W), dtype=jnp.float32)
    params = {
        "mlp_w1": jax.random.normal(k1, (Ch, C), dtype=jnp.float32) * 0.2,
        "mlp_b1": jax.random.normal(k2, (Ch,), dtype=jnp.float32) * 0.1,
        "mlp_w2": jax.random.normal(k3, (C, Ch), dtype=jnp.float32) * 0.2,
        "mlp_b2": jax.random.normal(k4, (C,), dtype=jnp.float32) * 0.1,
        "spatial_w": jax.random.normal(k5, (1, 2, 7, 7), dtype=jnp.float32) * 0.1,
        "spatial_b": jax.random.normal(k6, (1,), dtype=jnp.float32) * 0.1,
    }

    out = jax.block_until_ready(jax.jit(cbam_forward)(x, params))
    ref = jax.block_until_ready(_cbam_reference(x, params))

    assert out.shape == (N, C, H, W), out.shape
    err = float(jnp.max(jnp.abs(out - ref)))
    assert jnp.allclose(out, ref, atol=1e-4, rtol=1e-4), err
    print("KERNEL_OK")
</pallas_src>

<mosaic_0001>
module attributes {stable_mosaic.version = 11 : i64} {
  func.func @_cbam_kernel(%arg0: i32, %arg1: memref<1x32x256xf32, #tpu.memory_space<vmem>>, %arg2: memref<2x33xf32, #tpu.memory_space<vmem>>, %arg3: memref<32x3xf32, #tpu.memory_space<vmem>>, %arg4: memref<99xf32, #tpu.memory_space<smem>>, %arg5: memref<1x32x256xf32, #tpu.memory_space<vmem>>, %arg6: memref<2x22x22xf32, #tpu.memory_space<vmem>>, %arg7: memref<1x256xf32, #tpu.memory_space<vmem>>) attributes {dimension_semantics = [#tpu.dimension_semantics<parallel>], iteration_bounds = array<i64: 2>, scalar_prefetch = 0 : i64, scratch_operands = 2 : i64, tpu.core_type = #tpu.core_type<tc>, window_params = [{transform_indices = @transform_0, window_bounds = array<i64: 1, 32, 256>}, {pipeline_mode = #tpu.pipeline_mode<synchronous>, transform_indices = @transform_1, window_bounds = array<i64: 2, 33>}, {pipeline_mode = #tpu.pipeline_mode<synchronous>, transform_indices = @transform_2, window_bounds = array<i64: 32, 3>}, {transform_indices = @transform_3, window_bounds = array<i64: 99>}, {transform_indices = @transform_4, window_bounds = array<i64: 1, 32, 256>}]} {
    %c0 = arith.constant 0 : index
    %c0_0 = arith.constant 0 : index
    %c0_1 = arith.constant 0 : index
    %0 = vector.load %arg1[%c0, %c0_0, %c0_1] : memref<1x32x256xf32, #tpu.memory_space<vmem>>, vector<1x32x256xf32>
    %1 = vector.shape_cast %0 : vector<1x32x256xf32> to vector<32x256xf32>
    %cst = arith.constant dense<0.000000e+00> : vector<32xf32>
    %2 = vector.multi_reduction <add>, %1, %cst [1] : vector<32x256xf32> to vector<32xf32>
    %3 = vector.shape_cast %2 : vector<32xf32> to vector<32x1xf32>
    %cst_2 = arith.constant 3.906250e-03 : f32
    %4 = vector.broadcast %cst_2 : f32 to vector<32x1xf32>
    %5 = arith.mulf %3, %4 : vector<32x1xf32>
    %cst_3 = arith.constant dense<0xFF800000> : vector<32xf32>
    %6 = vector.multi_reduction <maximumf>, %1, %cst_3 [1] : vector<32x256xf32> to vector<32xf32>
    %7 = vector.shape_cast %6 : vector<32xf32> to vector<32x1xf32>
    %8 = tpu.concatenate %5, %7 in 1 : vector<32x1xf32>, vector<32x1xf32> -> vector<32x2xf32>
    %c0_4 = arith.constant 0 : index
    %c0_5 = arith.constant 0 : index
    %9 = vector.load %arg2[%c0_4, %c0_5] : memref<2x33xf32, #tpu.memory_space<vmem>>, vector<2x32xf32>
    %c0_6 = arith.constant 0 : index
    %c32 = arith.constant 32 : index
    %10 = vector.load %arg2[%c0_6, %c32] : memref<2x33xf32, #tpu.memory_space<vmem>>, vector<2x1xf32>
    %c0_7 = arith.constant 0 : index
    %c0_8 = arith.constant 0 : index
    %11 = vector.load %arg3[%c0_7, %c0_8] : memref<32x3xf32, #tpu.memory_space<vmem>>, vector<32x2xf32>
    %c0_9 = arith.constant 0 : index
    %c2 = arith.constant 2 : index
    %12 = vector.load %arg3[%c0_9, %c2] : memref<32x3xf32, #tpu.memory_space<vmem>>, vector<32x1xf32>
    %cst_10 = arith.constant dense<0.000000e+00> : vector<2x2xf32>
    %13 = tpu.matmul %9, %8, %cst_10 {dimension_numbers = #tpu.dot_dimension_numbers<[1], [0], [0], [1], [0, 0, 1, 1], [], []>} : vector<2x32xf32>, vector<32x2xf32>, vector<2x2xf32> -> vector<2x2xf32>
    %14 = vector.broadcast %10 : vector<2x1xf32> to vector<2x2xf32>
    %15 = arith.addf %13, %14 : vector<2x2xf32>
    %cst_11 = arith.constant 0.000000e+00 : f32
    %16 = vector.broadcast %cst_11 : f32 to vector<2x2xf32>
    %17 = arith.maximumf %15, %16 : vector<2x2xf32>
    %cst_12 = arith.constant dense<0.000000e+00> : vector<32x2xf32>
    %18 = tpu.matmul %11, %17, %cst_12 {dimension_numbers = #tpu.dot_dimension_numbers<[1], [0], [0], [1], [0, 0, 1, 1], [], []>} : vector<32x2xf32>, vector<2x2xf32>, vector<32x2xf32> -> vector<32x2xf32>
    %19 = vector.extract_strided_slice %18 {offsets = [0, 0], sizes = [32, 1], strides = [1, 1]} : vector<32x2xf32> to vector<32x1xf32>
    %20 = vector.extract_strided_slice %18 {offsets = [0, 1], sizes = [32, 1], strides = [1, 1]} : vector<32x2xf32> to vector<32x1xf32>
    %21 = arith.addf %19, %20 : vector<32x1xf32>
    %cst_13 = arith.constant 2.000000e+00 : f32
    %22 = vector.broadcast %cst_13 : f32 to vector<32x1xf32>
    %23 = arith.mulf %22, %12 : vector<32x1xf32>
    %24 = arith.addf %21, %23 : vector<32x1xf32>
    %25 = arith.negf %24 : vector<32x1xf32>
    %26 = math.exp %25 : vector<32x1xf32>
    %cst_14 = arith.constant 1.000000e+00 : f32
    %27 = vector.broadcast %cst_14 : f32 to vector<32x1xf32>
    %28 = arith.addf %27, %26 : vector<32x1xf32>
    %29 = arith.divf %27, %28 : vector<32x1xf32>
    %30 = vector.broadcast %29 : vector<32x1xf32> to vector<32x256xf32>
    %31 = arith.mulf %1, %30 : vector<32x256xf32>
    %cst_15 = arith.constant dense<0xFF800000> : vector<256xf32>
    %32 = vector.multi_reduction <maximumf>, %31, %cst_15 [0] : vector<32x256xf32> to vector<256xf32>
    %33 = vector.shape_cast %32 : vector<256xf32> to vector<1x256xf32>
    %cst_16 = arith.constant dense<0.000000e+00> : vector<256xf32>
    %34 = vector.multi_reduction <add>, %31, %cst_16 [0] : vector<32x256xf32> to vector<256xf32>
    %35 = vector.shape_cast %34 : vector<256xf32> to vector<1x256xf32>
    %cst_17 = arith.constant 3.125000e-02 : f32
    %36 = vector.broadcast %cst_17 : f32 to vector<1x256xf32>
    %37 = arith.mulf %35, %36 : vector<1x256xf32>
    %cst_18 = arith.constant 0.000000e+00 : f32
    %38 = vector.broadcast %cst_18 : f32 to vector<3x22xf32>
    %c0_19 = arith.constant 0 : index
    %c0_20 = arith.constant 0 : index
    %c0_21 = arith.constant 0 : index
    %39 = vector.load %arg6[%c0_19, %c0_20, %c0_21] : memref<2x22x22xf32, #tpu.memory_space<vmem>>, vector<1x3x22xf32>
    %40 = vector.shape_cast %39 : vector<1x3x22xf32> to vector<3x22xf32>
    %41 = vector.shape_cast %38 : vector<3x22xf32> to vector<1x3x22xf32>
    tpu.vector_store %arg6[%c0_19, %c0_20, %c0_21], %41 {strides = array<i32>} : memref<2x22x22xf32, #tpu.memory_space<vmem>>, vector<1x3x22xf32>,
    %cst_22 = arith.constant 0.000000e+00 : f32
    %42 = vector.broadcast %cst_22 : f32 to vector<3x22xf32>
    %c0_23 = arith.constant 0 : index
    %c19 = arith.constant 19 : index
    %c0_24 = arith.constant 0 : index
    %43 = vector.load %arg6[%c0_23, %c19, %c0_24] : memref<2x22x22xf32, #tpu.memory_space<vmem>>, vector<1x3x22xf32>
    %44 = vector.shape_cast %43 : vector<1x3x22xf32> to vector<3x22xf32>
    %45 = vector.shape_cast %42 : vector<3x22xf32> to vector<1x3x22xf32>
    tpu.vector_store %arg6[%c0_23, %c19, %c0_24], %45 {strides = array<i32>} : memref<2x22x22xf32, #tpu.memory_space<vmem>>, vector<1x3x22xf32>,
    %cst_25 = arith.constant 0.000000e+00 : f32
    %46 = vector.broadcast %cst_25 : f32 to vector<22x3xf32>
    %c0_26 = arith.constant 0 : index
    %c0_27 = arith.constant 0 : index
    %c0_28 = arith.constant 0 : index
    %47 = vector.load %arg6[%c0_26, %c0_27, %c0_28] : memref<2x22x22xf32, #tpu.memory_space<vmem>>, vector<1x22x3xf32>
    %48 = vector.shape_cast %47 : vector<1x22x3xf32> to vector<22x3xf32>
    %49 = vector.shape_cast %46 : vector<22x3xf32> to vector<1x22x3xf32>
    tpu.vector_store %arg6[%c0_26, %c0_27, %c0_28], %49 {strides = array<i32>} : memref<2x22x22xf32, #tpu.memory_space<vmem>>, vector<1x22x3xf32>,
    %cst_29 = arith.constant 0.000000e+00 : f32
    %50 = vector.broadcast %cst_29 : f32 to vector<22x3xf32>
    %c0_30 = arith.constant 0 : index
    %c0_31 = arith.constant 0 : index
    %c19_32 = arith.constant 19 : index
    %51 = vector.load %arg6[%c0_30, %c0_31, %c19_32] : memref<2x22x22xf32, #tpu.memory_space<vmem>>, vector<1x22x3xf32>
    %52 = vector.shape_cast %51 : vector<1x22x3xf32> to vector<22x3xf32>
    %53 = vector.shape_cast %50 : vector<22x3xf32> to vector<1x22x3xf32>
    tpu.vector_store %arg6[%c0_30, %c0_31, %c19_32], %53 {strides = array<i32>} : memref<2x22x22xf32, #tpu.memory_space<vmem>>, vector<1x22x3xf32>,
    %cst_33 = arith.constant 0.000000e+00 : f32
    %54 = vector.broadcast %cst_33 : f32 to vector<3x22xf32>
    %c1 = arith.constant 1 : index
    %c0_34 = arith.constant 0 : index
    %c0_35 = arith.constant 0 : index
    %55 = vector.load %arg6[%c1, %c0_34, %c0_35] : memref<2x22x22xf32, #tpu.memory_space<vmem>>, vector<1x3x22xf32>
    %56 = vector.shape_cast %55 : vector<1x3x22xf32> to vector<3x22xf32>
    %57 = vector.shape_cast %54 : vector<3x22xf32> to vector<1x3x22xf32>
    tpu.vector_store %arg6[%c1, %c0_34, %c0_35], %57 {strides = array<i32>} : memref<2x22x22xf32, #tpu.memory_space<vmem>>, vector<1x3x22xf32>,
    %cst_36 = arith.constant 0.000000e+00 : f32
    %58 = vector.broadcast %cst_36 : f32 to vector<3x22xf32>
    %c1_37 = arith.constant 1 : index
    %c19_38 = arith.constant 19 : index
    %c0_39 = arith.constant 0 : index
    %59 = vector.load %arg6[%c1_37, %c19_38, %c0_39] : memref<2x22x22xf32, #tpu.memory_space<vmem>>, vector<1x3x22xf32>
    %60 = vector.shape_cast %59 : vector<1x3x22xf32> to vector<3x22xf32>
    %61 = vector.shape_cast %58 : vector<3x22xf32> to vector<1x3x22xf32>
    tpu.vector_store %arg6[%c1_37, %c19_38, %c0_39], %61 {strides = array<i32>} : memref<2x22x22xf32, #tpu.memory_space<vmem>>, vector<1x3x22xf32>,
    %cst_40 = arith.constant 0.000000e+00 : f32
    %62 = vector.broadcast %cst_40 : f32 to vector<22x3xf32>
    %c1_41 = arith.constant 1 : index
    %c0_42 = arith.constant 0 : index
    %c0_43 = arith.constant 0 : index
    %63 = vector.load %arg6[%c1_41, %c0_42, %c0_43] : memref<2x22x22xf32, #tpu.memory_space<vmem>>, vector<1x22x3xf32>
    %64 = vector.shape_cast %63 : vector<1x22x3xf32> to vector<22x3xf32>
    %65 = vector.shape_cast %62 : vector<22x3xf32> to vector<1x22x3xf32>
    tpu.vector_store %arg6[%c1_41, %c0_42, %c0_43], %65 {strides = array<i32>} : memref<2x22x22xf32, #tpu.memory_space<vmem>>, vector<1x22x3xf32>,
    %cst_44 = arith.constant 0.000000e+00 : f32
    %66 = vector.broadcast %cst_44 : f32 to vector<22x3xf32>
    %c1_45 = arith.constant 1 : index
    %c0_46 = arith.constant 0 : index
    %c19_47 = arith.constant 19 : index
    %67 = vector.load %arg6[%c1_45, %c0_46, %c19_47] : memref<2x22x22xf32, #tpu.memory_space<vmem>>, vector<1x22x3xf32>
    %68 = vector.shape_cast %67 : vector<1x22x3xf32> to vector<22x3xf32>
    %69 = vector.shape_cast %66 : vector<22x3xf32> to vector<1x22x3xf32>
    tpu.vector_store %arg6[%c1_45, %c0_46, %c19_47], %69 {strides = array<i32>} : memref<2x22x22xf32, #tpu.memory_space<vmem>>, vector<1x22x3xf32>,
    %70 = vector.extract_strided_slice %33 {offsets = [0, 0], sizes = [1, 16], strides = [1, 1]} : vector<1x256xf32> to vector<1x16xf32>
    %c0_48 = arith.constant 0 : index
    %c3 = arith.constant 3 : index
    %c3_49 = arith.constant 3 : index
    %71 = vector.load %arg6[%c0_48, %c3, %c3_49] : memref<2x22x22xf32, #tpu.memory_space<vmem>>, vector<1x1x16xf32>
    %72 = vector.shape_cast %71 : vector<1x1x16xf32> to vector<1x16xf32>
    %73 = vector.shape_cast %70 : vector<1x16xf32> to vector<1x1x16xf32>
    tpu.vector_store %arg6[%c0_48, %c3, %c3_49], %73 {strides = array<i32>} : memref<2x22x22xf32, #tpu.memory_space<vmem>>, vector<1x1x16xf32>,
    %74 = vector.extract_strided_slice %37 {offsets = [0, 0], sizes = [1, 16], strides = [1, 1]} : vector<1x256xf32> to vector<1x16xf32>
    %c1_50 = arith.constant 1 : index
    %c3_51 = arith.constant 3 : index
    %c3_52 = arith.constant 3 : index
    %75 = vector.load %arg6[%c1_50, %c3_51, %c3_52] : memref<2x22x22xf32, #tpu.memory_space<vmem>>, vector<1x1x16xf32>
    %76 = vector.shape_cast %75 : vector<1x1x16xf32> to vector<1x16xf32>
    %77 = vector.shape_cast %74 : vector<1x16xf32> to vector<1x1x16xf32>
    tpu.vector_store %arg6[%c1_50, %c3_51, %c3_52], %77 {strides = array<i32>} : memref<2x22x22xf32, #tpu.memory_space<vmem>>, vector<1x1x16xf32>,
    %78 = vector.extract_strided_slice %33 {offsets = [0, 16], sizes = [1, 16], strides = [1, 1]} : vector<1x256xf32> to vector<1x16xf32>
    %c0_53 = arith.constant 0 : index
    %c4 = arith.constant 4 : index
    %c3_54 = arith.constant 3 : index
    %79 = vector.load %arg6[%c0_53, %c4, %c3_54] : memref<2x22x22xf32, #tpu.memory_space<vmem>>, vector<1x1x16xf32>
    %80 = vector.shape_cast %79 : vector<1x1x16xf32> to vector<1x16xf32>
    %81 = vector.shape_cast %78 : vector<1x16xf32> to vector<1x1x16xf32>
    tpu.vector_store %arg6[%c0_53, %c4, %c3_54], %81 {strides = array<i32>} : memref<2x22x22xf32, #tpu.memory_space<vmem>>, vector<1x1x16xf32>,
    %82 = vector.extract_strided_slice %37 {offsets = [0, 16], sizes = [1, 16], strides = [1, 1]} : vector<1x256xf32> to vector<1x16xf32>
    %c1_55 = arith.constant 1 : index
    %c4_56 = arith.constant 4 : index
    %c3_57 = arith.constant 3 : index
    %83 = vector.load %arg6[%c1_55, %c4_56, %c3_57] : memref<2x22x22xf32, #tpu.memory_space<vmem>>, vector<1x1x16xf32>
    %84 = vector.shape_cast %83 : vector<1x1x16xf32> to vector<1x16xf32>
    %85 = vector.shape_cast %82 : vector<1x16xf32> to vector<1x1x16xf32>
    tpu.vector_store %arg6[%c1_55, %c4_56, %c3_57], %85 {strides = array<i32>} : memref<2x22x22xf32, #tpu.memory_space<vmem>>, vector<1x1x16xf32>,
    %86 = vector.extract_strided_slice %33 {offsets = [0, 32], sizes = [1, 16], strides = [1, 1]} : vector<1x256xf32> to vector<1x16xf32>
    %c0_58 = arith.constant 0 : index
    %c5 = arith.constant 5 : index
    %c3_59 = arith.constant 3 : index
    %87 = vector.load %arg6[%c0_58, %c5, %c3_59] : memref<2x22x22xf32, #tpu.memory_space<vmem>>, vector<1x1x16xf32>
    %88 = vector.shape_cast %87 : vector<1x1x16xf32> to vector<1x16xf32>
    %89 = vector.shape_cast %86 : vector<1x16xf32> to vector<1x1x16xf32>
    tpu.vector_store %arg6[%c0_58, %c5, %c3_59], %89 {strides = array<i32>} : memref<2x22x22xf32, #tpu.memory_space<vmem>>, vector<1x1x16xf32>,
    %90 = vector.extract_strided_slice %37 {offsets = [0, 32], sizes = [1, 16], strides = [1, 1]} : vector<1x256xf32> to vector<1x16xf32>
    %c1_60 = arith.constant 1 : index
    %c5_61 = arith.constant 5 : index
    %c3_62 = arith.constant 3 : index
    %91 = vector.load %arg6[%c1_60, %c5_61, %c3_62] : memref<2x22x22xf32, #tpu.memory_space<vmem>>, vector<1x1x16xf32>
    %92 = vector.shape_cast %91 : vector<1x1x16xf32> to vector<1x16xf32>
    %93 = vector.shape_cast %90 : vector<1x16xf32> to vector<1x1x16xf32>
    tpu.vector_store %arg6[%c1_60, %c5_61, %c3_62], %93 {strides = array<i32>} : memref<2x22x22xf32, #tpu.memory_space<vmem>>, vector<1x1x16xf32>,
    %94 = vector.extract_strided_slice %33 {offsets = [0, 48], sizes = [1, 16], strides = [1, 1]} : vector<1x256xf32> to vector<1x16xf32>
    %c0_63 = arith.constant 0 : index
    %c6 = arith.constant 6 : index
    %c3_64 = arith.constant 3 : index
    %95 = vector.load %arg6[%c0_63, %c6, %c3_64] : memref<2x22x22xf32, #tpu.memory_space<vmem>>, vector<1x1x16xf32>
    %96 = vector.shape_cast %95 : vector<1x1x16xf32> to vector<1x16xf32>
    %97 = vector.shape_cast %94 : vector<1x16xf32> to vector<1x1x16xf32>
    tpu.vector_store %arg6[%c0_63, %c6, %c3_64], %97 {strides = array<i32>} : memref<2x22x22xf32, #tpu.memory_space<vmem>>, vector<1x1x16xf32>,
    %98 = vector.extract_strided_slice %37 {offsets = [0, 48], sizes = [1, 16], strides = [1, 1]} : vector<1x256xf32> to vector<1x16xf32>
    %c1_65 = arith.constant 1 : index
    %c6_66 = arith.constant 6 : index
    %c3_67 = arith.constant 3 : index
    %99 = vector.load %arg6[%c1_65, %c6_66, %c3_67] : memref<2x22x22xf32, #tpu.memory_space<vmem>>, vector<1x1x16xf32>
    %100 = vector.shape_cast %99 : vector<1x1x16xf32> to vector<1x16xf32>
    %101 = vector.shape_cast %98 : vector<1x16xf32> to vector<1x1x16xf32>
    tpu.vector_store %arg6[%c1_65, %c6_66, %c3_67], %101 {strides = array<i32>} : memref<2x22x22xf32, #tpu.memory_space<vmem>>, vector<1x1x16xf32>,
    %102 = vector.extract_strided_slice %33 {offsets = [0, 64], sizes = [1, 16], strides = [1, 1]} : vector<1x256xf32> to vector<1x16xf32>
    %c0_68 = arith.constant 0 : index
    %c7 = arith.constant 7 : index
    %c3_69 = arith.constant 3 : index
    %103 = vector.load %arg6[%c0_68, %c7, %c3_69] : memref<2x22x22xf32, #tpu.memory_space<vmem>>, vector<1x1x16xf32>
    %104 = vector.shape_cast %103 : vector<1x1x16xf32> to vector<1x16xf32>
    %105 = vector.shape_cast %102 : vector<1x16xf32> to vector<1x1x16xf32>
    tpu.vector_store %arg6[%c0_68, %c7, %c3_69], %105 {strides = array<i32>} : memref<2x22x22xf32, #tpu.memory_space<vmem>>, vector<1x1x16xf32>,
    %106 = vector.extract_strided_slice %37 {offsets = [0, 64], sizes = [1, 16], strides = [1, 1]} : vector<1x256xf32> to vector<1x16xf32>
    %c1_70 = arith.constant 1 : index
    %c7_71 = arith.constant 7 : index
    %c3_72 = arith.constant 3 : index
    %107 = vector.load %arg6[%c1_70, %c7_71, %c3_72] : memref<2x22x22xf32, #tpu.memory_space<vmem>>, vector<1x1x16xf32>
    %108 = vector.shape_cast %107 : vector<1x1x16xf32> to vector<1x16xf32>
    %109 = vector.shape_cast %106 : vector<1x16xf32> to vector<1x1x16xf32>
    tpu.vector_store %arg6[%c1_70, %c7_71, %c3_72], %109 {strides = array<i32>} : memref<2x22x22xf32, #tpu.memory_space<vmem>>, vector<1x1x16xf32>,
    %110 = vector.extract_strided_slice %33 {offsets = [0, 80], sizes = [1, 16], strides = [1, 1]} : vector<1x256xf32> to vector<1x16xf32>
    %c0_73 = arith.constant 0 : index
    %c8 = arith.constant 8 : index
    %c3_74 = arith.constant 3 : index
    %111 = vector.load %arg6[%c0_73, %c8, %c3_74] : memref<2x22x22xf32, #tpu.memory_space<vmem>>, vector<1x1x16xf32>
    %112 = vector.shape_cast %111 : vector<1x1x16xf32> to vector<1x16xf32>
    %113 = vector.shape_cast %110 : vector<1x16xf32> to vector<1x1x16xf32>
    tpu.vector_store %arg6[%c0_73, %c8, %c3_74], %113 {strides = array<i32>} : memref<2x22x22xf32, #tpu.memory_space<vmem>>, vector<1x1x16xf32>,
    %114 = vector.extract_strided_slice %37 {offsets = [0, 80], sizes = [1, 16], strides = [1, 1]} : vector<1x256xf32> to vector<1x16xf32>
    %c1_75 = arith.constant 1 : index
    %c8_76 = arith.constant 8 : index
    %c3_77 = arith.constant 3 : index
    %115 = vector.load %arg6[%c1_75, %c8_76, %c3_77] : memref<2x22x22xf32, #tpu.memory_space<vmem>>, vector<1x1x16xf32>
    %116 = vector.shape_cast %115 : vector<1x1x16xf32> to vector<1x16xf32>
    %117 = vector.shape_cast %114 : vector<1x16xf32> to vector<1x1x16xf32>
    tpu.vector_store %arg6[%c1_75, %c8_76, %c3_77], %117 {strides = array<i32>} : memref<2x22x22xf32, #tpu.memory_space<vmem>>, vector<1x1x16xf32>,
    %118 = vector.extract_strided_slice %33 {offsets = [0, 96], sizes = [1, 16], strides = [1, 1]} : vector<1x256xf32> to vector<1x16xf32>
    %c0_78 = arith.constant 0 : index
    %c9 = arith.constant 9 : index
    %c3_79 = arith.constant 3 : index
    %119 = vector.load %arg6[%c0_78, %c9, %c3_79] : memref<2x22x22xf32, #tpu.memory_space<vmem>>, vector<1x1x16xf32>
    %120 = vector.shape_cast %119 : vector<1x1x16xf32> to vector<1x16xf32>
    %121 = vector.shape_cast %118 : vector<1x16xf32> to vector<1x1x16xf32>
    tpu.vector_store %arg6[%c0_78, %c9, %c3_79], %121 {strides = array<i32>} : memref<2x22x22xf32, #tpu.memory_space<vmem>>, vector<1x1x16xf32>,
    %122 = vector.extract_strided_slice %37 {offsets = [0, 96], sizes = [1, 16], strides = [1, 1]} : vector<1x256xf32> to vector<1x16xf32>
    %c1_80 = arith.constant 1 : index
    %c9_81 = arith.constant 9 : index
    %c3_82 = arith.constant 3 : index
    %123 = vector.load %arg6[%c1_80, %c9_81, %c3_82] : memref<2x22x22xf32, #tpu.memory_space<vmem>>, vector<1x1x16xf32>
    %124 = vector.shape_cast %123 : vector<1x1x16xf32> to vector<1x16xf32>
    %125 = vector.shape_cast %122 : vector<1x16xf32> to vector<1x1x16xf32>
    tpu.vector_store %arg6[%c1_80, %c9_81, %c3_82], %125 {strides = array<i32>} : memref<2x22x22xf32, #tpu.memory_space<vmem>>, vector<1x1x16xf32>,
    %126 = vector.extract_strided_slice %33 {offsets = [0, 112], sizes = [1, 16], strides = [1, 1]} : vector<1x256xf32> to vector<1x16xf32>
    %c0_83 = arith.constant 0 : index
    %c10 = arith.constant 10 : index
    %c3_84 = arith.constant 3 : index
    %127 = vector.load %arg6[%c0_83, %c10, %c3_84] : memref<2x22x22xf32, #tpu.memory_space<vmem>>, vector<1x1x16xf32>
    %128 = vector.shape_cast %127 : vector<1x1x16xf32> to vector<1x16xf32>
    %129 = vector.shape_cast %126 : vector<1x16xf32> to vector<1x1x16xf32>
    tpu.vector_store %arg6[%c0_83, %c10, %c3_84], %129 {strides = array<i32>} : memref<2x22x22xf32, #tpu.memory_space<vmem>>, vector<1x1x16xf32>,
    %130 = vector.extract_strided_slice %37 {offsets = [0, 112], sizes = [1, 16], strides = [1, 1]} : vector<1x256xf32> to vector<1x16xf32>
    %c1_85 = arith.constant 1 : index
    %c10_86 = arith.constant 10 : index
    %c3_87 = arith.constant 3 : index
    %131 = vector.load %arg6[%c1_85, %c10_86, %c3_87] : memref<2x22x22xf32, #tpu.memory_space<vmem>>, vector<1x1x16xf32>
    %132 = vector.shape_cast %131 : vector<1x1x16xf32> to vector<1x16xf32>
    %133 = vector.shape_cast %130 : vector<1x16xf32> to vector<1x1x16xf32>
    tpu.vector_store %arg6[%c1_85, %c10_86, %c3_87], %133 {strides = array<i32>} : memref<2x22x22xf32, #tpu.memory_space<vmem>>, vector<1x1x16xf32>,
    %134 = vector.extract_strided_slice %33 {offsets = [0, 128], sizes = [1, 16], strides = [1, 1]} : vector<1x256xf32> to vector<1x16xf32>
    %c0_88 = arith.constant 0 : index
    %c11 = arith.constant 11 : index
    %c3_89 = arith.constant 3 : index
    %135 = vector.load %arg6[%c0_88, %c11, %c3_89] : memref<2x22x22xf32, #tpu.memory_space<vmem>>, vector<1x1x16xf32>
    %136 = vector.shape_cast %135 : vector<1x1x16xf32> to vector<1x16xf32>
    %137 = vector.shape_cast %134 : vector<1x16xf32> to vector<1x1x16xf32>
    tpu.vector_store %arg6[%c0_88, %c11, %c3_89], %137 {strides = array<i32>} : memref<2x22x22xf32, #tpu.memory_space<vmem>>, vector<1x1x16xf32>,
    %138 = vector.extract_strided_slice %37 {offsets = [0, 128], sizes = [1, 16], strides = [1, 1]} : vector<1x256xf32> to vector<1x16xf32>
    %c1_90 = arith.constant 1 : index
    %c11_91 = arith.constant 11 : index
    %c3_92 = arith.constant 3 : index
    %139 = vector.load %arg6[%c1_90, %c11_91, %c3_92] : memref<2x22x22xf32, #tpu.memory_space<vmem>>, vector<1x1x16xf32>
    %140 = vector.shape_cast %139 : vector<1x1x16xf32> to vector<1x16xf32>
    %141 = vector.shape_cast %138 : vector<1x16xf32> to vector<1x1x16xf32>
    tpu.vector_store %arg6[%c1_90, %c11_91, %c3_92], %141 {strides = array<i32>} : memref<2x22x22xf32, #tpu.memory_space<vmem>>, vector<1x1x16xf32>,
    %142 = vector.extract_strided_slice %33 {offsets = [0, 144], sizes = [1, 16], strides = [1, 1]} : vector<1x256xf32> to vector<1x16xf32>
    %c0_93 = arith.constant 0 : index
    %c12 = arith.constant 12 : index
    %c3_94 = arith.constant 3 : index
    %143 = vector.load %arg6[%c0_93, %c12, %c3_94] : memref<2x22x22xf32, #tpu.memory_space<vmem>>, vector<1x1x16xf32>
    %144 = vector.shape_cast %143 : vector<1x1x16xf32> to vector<1x16xf32>
    %145 = vector.shape_cast %142 : vector<1x16xf32> to vector<1x1x16xf32>
    tpu.vector_store %arg6[%c0_93, %c12, %c3_94], %145 {strides = array<i32>} : memref<2x22x22xf32, #tpu.memory_space<vmem>>, vector<1x1x16xf32>,
    %146 = vector.extract_strided_slice %37 {offsets = [0, 144], sizes = [1, 16], strides = [1, 1]} : vector<1x256xf32> to vector<1x16xf32>
    %c1_95 = arith.constant 1 : index
    %c12_96 = arith.constant 12 : index
    %c3_97 = arith.constant 3 : index
    %147 = vector.load %arg6[%c1_95, %c12_96, %c3_97] : memref<2x22x22xf32, #tpu.memory_space<vmem>>, vector<1x1x16xf32>
    %148 = vector.shape_cast %147 : vector<1x1x16xf32> to vector<1x16xf32>
    %149 = vector.shape_cast %146 : vector<1x16xf32> to vector<1x1x16xf32>
    tpu.vector_store %arg6[%c1_95, %c12_96, %c3_97], %149 {strides = array<i32>} : memref<2x22x22xf32, #tpu.memory_space<vmem>>, vector<1x1x16xf32>,
    %150 = vector.extract_strided_slice %33 {offsets = [0, 160], sizes = [1, 16], strides = [1, 1]} : vector<1x256xf32> to vector<1x16xf32>
    %c0_98 = arith.constant 0 : index
    %c13 = arith.constant 13 : index
    %c3_99 = arith.constant 3 : index
    %151 = vector.load %arg6[%c0_98, %c13, %c3_99] : memref<2x22x22xf32, #tpu.memory_space<vmem>>, vector<1x1x16xf32>
    %152 = vector.shape_cast %151 : vector<1x1x16xf32> to vector<1x16xf32>
    %153 = vector.shape_cast %150 : vector<1x16xf32> to vector<1x1x16xf32>
    tpu.vector_store %arg6[%c0_98, %c13, %c3_99], %153 {strides = array<i32>} : memref<2x22x22xf32, #tpu.memory_space<vmem>>, vector<1x1x16xf32>,
    %154 = vector.extract_strided_slice %37 {offsets = [0, 160], sizes = [1, 16], strides = [1, 1]} : vector<1x256xf32> to vector<1x16xf32>
    %c1_100 = arith.constant 1 : index
    %c13_101 = arith.constant 13 : index
    %c3_102 = arith.constant 3 : index
    %155 = vector.load %arg6[%c1_100, %c13_101, %c3_102] : memref<2x22x22xf32, #tpu.memory_space<vmem>>, vector<1x1x16xf32>
    %156 = vector.shape_cast %155 : vector<1x1x16xf32> to vector<1x16xf32>
    %157 = vector.shape_cast %154 : vector<1x16xf32> to vector<1x1x16xf32>
    tpu.vector_store %arg6[%c1_100, %c13_101, %c3_102], %157 {strides = array<i32>} : memref<2x22x22xf32, #tpu.memory_space<vmem>>, vector<1x1x16xf32>,
    %158 = vector.extract_strided_slice %33 {offsets = [0, 176], sizes = [1, 16], strides = [1, 1]} : vector<1x256xf32> to vector<1x16xf32>
    %c0_103 = arith.constant 0 : index
    %c14 = arith.constant 14 : index
    %c3_104 = arith.constant 3 : index
    %159 = vector.load %arg6[%c0_103, %c14, %c3_104] : memref<2x22x22xf32, #tpu.memory_space<vmem>>, vector<1x1x16xf32>
    %160 = vector.shape_cast %159 : vector<1x1x16xf32> to vector<1x16xf32>
    %161 = vector.shape_cast %158 : vector<1x16xf32> to vector<1x1x16xf32>
    tpu.vector_store %arg6[%c0_103, %c14, %c3_104], %161 {strides = array<i32>} : memref<2x22x22xf32, #tpu.memory_space<vmem>>, vector<1x1x16xf32>,
    %162 = vector.extract_strided_slice %37 {offsets = [0, 176], sizes = [1, 16], strides = [1, 1]} : vector<1x256xf32> to vector<1x16xf32>
    %c1_105 = arith.constant 1 : index
    %c14_106 = arith.constant 14 : index
    %c3_107 = arith.constant 3 : index
    %163 = vector.load %arg6[%c1_105, %c14_106, %c3_107] : memref<2x22x22xf32, #tpu.memory_space<vmem>>, vector<1x1x16xf32>
    %164 = vector.shape_cast %163 : vector<1x1x16xf32> to vector<1x16xf32>
    %165 = vector.shape_cast %162 : vector<1x16xf32> to vector<1x1x16xf32>
    tpu.vector_store %arg6[%c1_105, %c14_106, %c3_107], %165 {strides = array<i32>} : memref<2x22x22xf32, #tpu.memory_space<vmem>>, vector<1x1x16xf32>,
    %166 = vector.extract_strided_slice %33 {offsets = [0, 192], sizes = [1, 16], strides = [1, 1]} : vector<1x256xf32> to vector<1x16xf32>
    %c0_108 = arith.constant 0 : index
    %c15 = arith.constant 15 : index
    %c3_109 = arith.constant 3 : index
    %167 = vector.load %arg6[%c0_108, %c15, %c3_109] : memref<2x22x22xf32, #tpu.memory_space<vmem>>, vector<1x1x16xf32>
    %168 = vector.shape_cast %167 : vector<1x1x16xf32> to vector<1x16xf32>
    %169 = vector.shape_cast %166 : vector<1x16xf32> to vector<1x1x16xf32>
    tpu.vector_store %arg6[%c0_108, %c15, %c3_109], %169 {strides = array<i32>} : memref<2x22x22xf32, #tpu.memory_space<vmem>>, vector<1x1x16xf32>,
    %170 = vector.extract_strided_slice %37 {offsets = [0, 192], sizes = [1, 16], strides = [1, 1]} : vector<1x256xf32> to vector<1x16xf32>
    %c1_110 = arith.constant 1 : index
    %c15_111 = arith.constant 15 : index
    %c3_112 = arith.constant 3 : index
    %171 = vector.load %arg6[%c1_110, %c15_111, %c3_112] : memref<2x22x22xf32, #tpu.memory_space<vmem>>, vector<1x1x16xf32>
    %172 = vector.shape_cast %171 : vector<1x1x16xf32> to vector<1x16xf32>
    %173 = vector.shape_cast %170 : vector<1x16xf32> to vector<1x1x16xf32>
    tpu.vector_store %arg6[%c1_110, %c15_111, %c3_112], %173 {strides = array<i32>} : memref<2x22x22xf32, #tpu.memory_space<vmem>>, vector<1x1x16xf32>,
    %174 = vector.extract_strided_slice %33 {offsets = [0, 208], sizes = [1, 16], strides = [1, 1]} : vector<1x256xf32> to vector<1x16xf32>
    %c0_113 = arith.constant 0 : index
    %c16 = arith.constant 16 : index
    %c3_114 = arith.constant 3 : index
    %175 = vector.load %arg6[%c0_113, %c16, %c3_114] : memref<2x22x22xf32, #tpu.memory_space<vmem>>, vector<1x1x16xf32>
    %176 = vector.shape_cast %175 : vector<1x1x16xf32> to vector<1x16xf32>
    %177 = vector.shape_cast %174 : vector<1x16xf32> to vector<1x1x16xf32>
    tpu.vector_store %arg6[%c0_113, %c16, %c3_114], %177 {strides = array<i32>} : memref<2x22x22xf32, #tpu.memory_space<vmem>>, vector<1x1x16xf32>,
    %178 = vector.extract_strided_slice %37 {offsets = [0, 208], sizes = [1, 16], strides = [1, 1]} : vector<1x256xf32> to vector<1x16xf32>
    %c1_115 = arith.constant 1 : index
    %c16_116 = arith.constant 16 : index
    %c3_117 = arith.constant 3 : index
    %179 = vector.load %arg6[%c1_115, %c16_116, %c3_117] : memref<2x22x22xf32, #tpu.memory_space<vmem>>, vector<1x1x16xf32>
    %180 = vector.shape_cast %179 : vector<1x1x16xf32> to vector<1x16xf32>
    %181 = vector.shape_cast %178 : vector<1x16xf32> to vector<1x1x16xf32>
    tpu.vector_store %arg6[%c1_115, %c16_116, %c3_117], %181 {strides = array<i32>} : memref<2x22x22xf32, #tpu.memory_space<vmem>>, vector<1x1x16xf32>,
    %182 = vector.extract_strided_slice %33 {offsets = [0, 224], sizes = [1, 16], strides = [1, 1]} : vector<1x256xf32> to vector<1x16xf32>
    %c0_118 = arith.constant 0 : index
    %c17 = arith.constant 17 : index
    %c3_119 = arith.constant 3 : index
    %183 = vector.load %arg6[%c0_118, %c17, %c3_119] : memref<2x22x22xf32, #tpu.memory_space<vmem>>, vector<1x1x16xf32>
    %184 = vector.shape_cast %183 : vector<1x1x16xf32> to vector<1x16xf32>
    %185 = vector.shape_cast %182 : vector<1x16xf32> to vector<1x1x16xf32>
    tpu.vector_store %arg6[%c0_118, %c17, %c3_119], %185 {strides = array<i32>} : memref<2x22x22xf32, #tpu.memory_space<vmem>>, vector<1x1x16xf32>,
    %186 = vector.extract_strided_slice %37 {offsets = [0, 224], sizes = [1, 16], strides = [1, 1]} : vector<1x256xf32> to vector<1x16xf32>
    %c1_120 = arith.constant 1 : index
    %c17_121 = arith.constant 17 : index
    %c3_122 = arith.constant 3 : index
    %187 = vector.load %arg6[%c1_120, %c17_121, %c3_122] : memref<2x22x22xf32, #tpu.memory_space<vmem>>, vector<1x1x16xf32>
    %188 = vector.shape_cast %187 : vector<1x1x16xf32> to vector<1x16xf32>
    %189 = vector.shape_cast %186 : vector<1x16xf32> to vector<1x1x16xf32>
    tpu.vector_store %arg6[%c1_120, %c17_121, %c3_122], %189 {strides = array<i32>} : memref<2x22x22xf32, #tpu.memory_space<vmem>>, vector<1x1x16xf32>,
    %190 = vector.extract_strided_slice %33 {offsets = [0, 240], sizes = [1, 16], strides = [1, 1]} : vector<1x256xf32> to vector<1x16xf32>
    %c0_123 = arith.constant 0 : index
    %c18 = arith.constant 18 : index
    %c3_124 = arith.constant 3 : index
    %191 = vector.load %arg6[%c0_123, %c18, %c3_124] : memref<2x22x22xf32, #tpu.memory_space<vmem>>, vector<1x1x16xf32>
    %192 = vector.shape_cast %191 : vector<1x1x16xf32> to vector<1x16xf32>
    %193 = vector.shape_cast %190 : vector<1x16xf32> to vector<1x1x16xf32>
    tpu.vector_store %arg6[%c0_123, %c18, %c3_124], %193 {strides = array<i32>} : memref<2x22x22xf32, #tpu.memory_space<vmem>>, vector<1x1x16xf32>,
    %194 = vector.extract_strided_slice %37 {offsets = [0, 240], sizes = [1, 16], strides = [1, 1]} : vector<1x256xf32> to vector<1x16xf32>
    %c1_125 = arith.constant 1 : index
    %c18_126 = arith.constant 18 : index
    %c3_127 = arith.constant 3 : index
    %195 = vector.load %arg6[%c1_125, %c18_126, %c3_127] : memref<2x22x22xf32, #tpu.memory_space<vmem>>, vector<1x1x16xf32>
    %196 = vector.shape_cast %195 : vector<1x1x16xf32> to vector<1x16xf32>
    %197 = vector.shape_cast %194 : vector<1x16xf32> to vector<1x1x16xf32>
    tpu.vector_store %arg6[%c1_125, %c18_126, %c3_127], %197 {strides = array<i32>} : memref<2x22x22xf32, #tpu.memory_space<vmem>>, vector<1x1x16xf32>,
    %cst_128 = arith.constant 0.000000e+00 : f32
    %198 = vector.broadcast %cst_128 : f32 to vector<16x16xf32>
    %cst_129 = arith.constant 0.000000e+00 : f32
    %199 = vector.broadcast %cst_129 : f32 to vector<16x16xf32>
    %cst_130 = arith.constant 0.000000e+00 : f32
    %200 = vector.broadcast %cst_130 : f32 to vector<16x16xf32>
    %cst_131 = arith.constant 0.000000e+00 : f32
    %201 = vector.broadcast %cst_131 : f32 to vector<16x16xf32>
    %c0_132 = arith.constant 0 : index
    %c0_133 = arith.constant 0 : index
    %c0_134 = arith.constant 0 : index
    %202 = vector.load %arg6[%c0_132, %c0_133, %c0_134] : memref<2x22x22xf32, #tpu.memory_space<vmem>>, vector<1x16x22xf32>
    %203 = vector.shape_cast %202 : vector<1x16x22xf32> to vector<16x22xf32>
    %204 = vector.extract_strided_slice %203 {offsets = [0, 0], sizes = [16, 16], strides = [1, 1]} : vector<16x22xf32> to vector<16x16xf32>
    %c0_135 = arith.constant 0 : index
    %205 = memref.load %arg4[%c0_135] : memref<99xf32, #tpu.memory_space<smem>>
    %206 = vector.broadcast %205 : f32 to vector<16x16xf32>
    %207 = arith.mulf %204, %206 : vector<16x16xf32>
    %208 = arith.addf %198, %207 : vector<16x16xf32>
    %209 = vector.extract_strided_slice %203 {offsets = [0, 1], sizes = [16, 16], strides = [1, 1]} : vector<16x22xf32> to vector<16x16xf32>
    %c1_136 = arith.constant 1 : index
    %210 = memref.load %arg4[%c1_136] : memref<99xf32, #tpu.memory_space<smem>>
    %211 = vector.broadcast %210 : f32 to vector<16x16xf32>
    %212 = arith.mulf %209, %211 : vector<16x16xf32>
    %213 = arith.addf %199, %212 : vector<16x16xf32>
    %214 = vector.extract_strided_slice %203 {offsets = [0, 2], sizes = [16, 16], strides = [1, 1]} : vector<16x22xf32> to vector<16x16xf32>
    %c2_137 = arith.constant 2 : index
    %215 = memref.load %arg4[%c2_137] : memref<99xf32, #tpu.memory_space<smem>>
    %216 = vector.broadcast %215 : f32 to vector<16x16xf32>
    %217 = arith.mulf %214, %216 : vector<16x16xf32>
    %218 = arith.addf %200, %217 : vector<16x16xf32>
    %219 = vector.extract_strided_slice %203 {offsets = [0, 3], sizes = [16, 16], strides = [1, 1]} : vector<16x22xf32> to vector<16x16xf32>
    %c3_138 = arith.constant 3 : index
    %220 = memref.load %arg4[%c3_138] : memref<99xf32, #tpu.memory_space<smem>>
    %221 = vector.broadcast %220 : f32 to vector<16x16xf32>
    %222 = arith.mulf %219, %221 : vector<16x16xf32>
    %223 = arith.addf %201, %222 : vector<16x16xf32>
    %224 = vector.extract_strided_slice %203 {offsets = [0, 4], sizes = [16, 16], strides = [1, 1]} : vector<16x22xf32> to vector<16x16xf32>
    %c4_139 = arith.constant 4 : index
    %225 = memref.load %arg4[%c4_139] : memref<99xf32, #tpu.memory_space<smem>>
    %226 = vector.broadcast %225 : f32 to vector<16x16xf32>
    %227 = arith.mulf %224, %226 : vector<16x16xf32>
    %228 = arith.addf %208, %227 : vector<16x16xf32>
    %229 = vector.extract_strided_slice %203 {offsets = [0, 5], sizes = [16, 16], strides = [1, 1]} : vector<16x22xf32> to vector<16x16xf32>
    %c5_140 = arith.constant 5 : index
    %230 = memref.load %arg4[%c5_140] : memref<99xf32, #tpu.memory_space<smem>>
    %231 = vector.broadcast %230 : f32 to vector<16x16xf32>
    %232 = arith.mulf %229, %231 : vector<16x16xf32>
    %233 = arith.addf %213, %232 : vector<16x16xf32>
    %234 = vector.extract_strided_slice %203 {offsets = [0, 6], sizes = [16, 16], strides = [1, 1]} : vector<16x22xf32> to vector<16x16xf32>
    %c6_141 = arith.constant 6 : index
    %235 = memref.load %arg4[%c6_141] : memref<99xf32, #tpu.memory_space<smem>>
    %236 = vector.broadcast %235 : f32 to vector<16x16xf32>
    %237 = arith.mulf %234, %236 : vector<16x16xf32>
    %238 = arith.addf %218, %237 : vector<16x16xf32>
    %c0_142 = arith.constant 0 : index
    %c1_143 = arith.constant 1 : index
    %c0_144 = arith.constant 0 : index
    %239 = vector.load %arg6[%c0_142, %c1_143, %c0_144] : memref<2x22x22xf32, #tpu.memory_space<vmem>>, vector<1x16x22xf32>
    %240 = vector.shape_cast %239 : vector<1x16x22xf32> to vector<16x22xf32>
    %241 = vector.extract_strided_slice %240 {offsets = [0, 0], sizes = [16, 16], strides = [1, 1]} : vector<16x22xf32> to vector<16x16xf32>
    %c7_145 = arith.constant 7 : index
    %242 = memref.load %arg4[%c7_145] : memref<99xf32, #tpu.memory_space<smem>>
    %243 = vector.broadcast %242 : f32 to vector<16x16xf32>
    %244 = arith.mulf %241, %243 : vector<16x16xf32>
    %245 = arith.addf %223, %244 : vector<16x16xf32>
    %246 = vector.extract_strided_slice %240 {offsets = [0, 1], sizes = [16, 16], strides = [1, 1]} : vector<16x22xf32> to vector<16x16xf32>
    %c8_146 = arith.constant 8 : index
    %247 = memref.load %arg4[%c8_146] : memref<99xf32, #tpu.memory_space<smem>>
    %248 = vector.broadcast %247 : f32 to vector<16x16xf32>
    %249 = arith.mulf %246, %248 : vector<16x16xf32>
    %250 = arith.addf %228, %249 : vector<16x16xf32>
    %251 = vector.extract_strided_slice %240 {offsets = [0, 2], sizes = [16, 16], strides = [1, 1]} : vector<16x22xf32> to vector<16x16xf32>
    %c9_147 = arith.constant 9 : index
    %252 = memref.load %arg4[%c9_147] : memref<99xf32, #tpu.memory_space<smem>>
    %253 = vector.broadcast %252 : f32 to vector<16x16xf32>
    %254 = arith.mulf %251, %253 : vector<16x16xf32>
    %255 = arith.addf %233, %254 : vector<16x16xf32>
    %256 = vector.extract_strided_slice %240 {offsets = [0, 3], sizes = [16, 16], strides = [1, 1]} : vector<16x22xf32> to vector<16x16xf32>
    %c10_148 = arith.constant 10 : index
    %257 = memref.load %arg4[%c10_148] : memref<99xf32, #tpu.memory_space<smem>>
    %258 = vector.broadcast %257 : f32 to vector<16x16xf32>
    %259 = arith.mulf %256, %258 : vector<16x16xf32>
    %260 = arith.addf %238, %259 : vector<16x16xf32>
    %261 = vector.extract_strided_slice %240 {offsets = [0, 4], sizes = [16, 16], strides = [1, 1]} : vector<16x22xf32> to vector<16x16xf32>
    %c11_149 = arith.constant 11 : index
    %262 = memref.load %arg4[%c11_149] : memref<99xf32, #tpu.memory_space<smem>>
    %263 = vector.broadcast %262 : f32 to vector<16x16xf32>
    %264 = arith.mulf %261, %263 : vector<16x16xf32>
    %265 = arith.addf %245, %264 : vector<16x16xf32>
    %266 = vector.extract_strided_slice %240 {offsets = [0, 5], sizes = [16, 16], strides = [1, 1]} : vector<16x22xf32> to vector<16x16xf32>
    %c12_150 = arith.constant 12 : index
    %267 = memref.load %arg4[%c12_150] : memref<99xf32, #tpu.memory_space<smem>>
    %268 = vector.broadcast %267 : f32 to vector<16x16xf32>
    %269 = arith.mulf %266, %268 : vector<16x16xf32>
    %270 = arith.addf %250, %269 : vector<16x16xf32>
    %271 = vector.extract_strided_slice %240 {offsets = [0, 6], sizes = [16, 16], strides = [1, 1]} : vector<16x22xf32> to vector<16x16xf32>
    %c13_151 = arith.constant 13 : index
    %272 = memref.load %arg4[%c13_151] : memref<99xf32, #tpu.memory_space<smem>>
    %273 = vector.broadcast %272 : f32 to vector<16x16xf32>
    %274 = arith.mulf %271, %273 : vector<16x16xf32>
    %275 = arith.addf %255, %274 : vector<16x16xf32>
    %c0_152 = arith.constant 0 : index
    %c2_153 = arith.constant 2 : index
    %c0_154 = arith.constant 0 : index
    %276 = vector.load %arg6[%c0_152, %c2_153, %c0_154] : memref<2x22x22xf32, #tpu.memory_space<vmem>>, vector<1x16x22xf32>
    %277 = vector.shape_cast %276 : vector<1x16x22xf32> to vector<16x22xf32>
    %278 = vector.extract_strided_slice %277 {offsets = [0, 0], sizes = [16, 16], strides = [1, 1]} : vector<16x22xf32> to vector<16x16xf32>
    %c14_155 = arith.constant 14 : index
    %279 = memref.load %arg4[%c14_155] : memref<99xf32, #tpu.memory_space<smem>>
    %280 = vector.broadcast %279 : f32 to vector<16x16xf32>
    %281 = arith.mulf %278, %280 : vector<16x16xf32>
    %282 = arith.addf %260, %281 : vector<16x16xf32>
    %283 = vector.extract_strided_slice %277 {offsets = [0, 1], sizes = [16, 16], strides = [1, 1]} : vector<16x22xf32> to vector<16x16xf32>
    %c15_156 = arith.constant 15 : index
    %284 = memref.load %arg4[%c15_156] : memref<99xf32, #tpu.memory_space<smem>>
    %285 = vector.broadcast %284 : f32 to vector<16x16xf32>
    %286 = arith.mulf %283, %285 : vector<16x16xf32>
    %287 = arith.addf %265, %286 : vector<16x16xf32>
    %288 = vector.extract_strided_slice %277 {offsets = [0, 2], sizes = [16, 16], strides = [1, 1]} : vector<16x22xf32> to vector<16x16xf32>
    %c16_157 = arith.constant 16 : index
    %289 = memref.load %arg4[%c16_157] : memref<99xf32, #tpu.memory_space<smem>>
    %290 = vector.broadcast %289 : f32 to vector<16x16xf32>
    %291 = arith.mulf %288, %290 : vector<16x16xf32>
    %292 = arith.addf %270, %291 : vector<16x16xf32>
    %293 = vector.extract_strided_slice %277 {offsets = [0, 3], sizes = [16, 16], strides = [1, 1]} : vector<16x22xf32> to vector<16x16xf32>
    %c17_158 = arith.constant 17 : index
    %294 = memref.load %arg4[%c17_158] : memref<99xf32, #tpu.memory_space<smem>>
    %295 = vector.broadcast %294 : f32 to vector<16x16xf32>
    %296 = arith.mulf %293, %295 : vector<16x16xf32>
    %297 = arith.addf %275, %296 : vector<16x16xf32>
    %298 = vector.extract_strided_slice %277 {offsets = [0, 4], sizes = [16, 16], strides = [1, 1]} : vector<16x22xf32> to vector<16x16xf32>
    %c18_159 = arith.constant 18 : index
    %299 = memref.load %arg4[%c18_159] : memref<99xf32, #tpu.memory_space<smem>>
    %300 = vector.broadcast %299 : f32 to vector<16x16xf32>
    %301 = arith.mulf %298, %300 : vector<16x16xf32>
    %302 = arith.addf %282, %301 : vector<16x16xf32>
    %303 = vector.extract_strided_slice %277 {offsets = [0, 5], sizes = [16, 16], strides = [1, 1]} : vector<16x22xf32> to vector<16x16xf32>
    %c19_160 = arith.constant 19 : index
    %304 = memref.load %arg4[%c19_160] : memref<99xf32, #tpu.memory_space<smem>>
    %305 = vector.broadcast %304 : f32 to vector<16x16xf32>
    %306 = arith.mulf %303, %305 : vector<16x16xf32>
    %307 = arith.addf %287, %306 : vector<16x16xf32>
    %308 = vector.extract_strided_slice %277 {offsets = [0, 6], sizes = [16, 16], strides = [1, 1]} : vector<16x22xf32> to vector<16x16xf32>
    %c20 = arith.constant 20 : index
    %309 = memref.load %arg4[%c20] : memref<99xf32, #tpu.memory_space<smem>>
    %310 = vector.broadcast %309 : f32 to vector<16x16xf32>
    %311 = arith.mulf %308, %310 : vector<16x16xf32>
    %312 = arith.addf %292, %311 : vector<16x16xf32>
    %c0_161 = arith.constant 0 : index
    %c3_162 = arith.constant 3 : index
    %c0_163 = arith.constant 0 : index
    %313 = vector.load %arg6[%c0_161, %c3_162, %c0_163] : memref<2x22x22xf32, #tpu.memory_space<vmem>>, vector<1x16x22xf32>
    %314 = vector.shape_cast %313 : vector<1x16x22xf32> to vector<16x22xf32>
    %315 = vector.extract_strided_slice %314 {offsets = [0, 0], sizes = [16, 16], strides = [1, 1]} : vector<16x22xf32> to vector<16x16xf32>
    %c21 = arith.constant 21 : index
    %316 = memref.load %arg4[%c21] : memref<99xf32, #tpu.memory_space<smem>>
    %317 = vector.broadcast %316 : f32 to vector<16x16xf32>
    %318 = arith.mulf %315, %317 : vector<16x16xf32>
    %319 = arith.addf %297, %318 : vector<16x16xf32>
    %320 = vector.extract_strided_slice %314 {offsets = [0, 1], sizes = [16, 16], strides = [1, 1]} : vector<16x22xf32> to vector<16x16xf32>
    %c22 = arith.constant 22 : index
    %321 = memref.load %arg4[%c22] : memref<99xf32, #tpu.memory_space<smem>>
    %322 = vector.broadcast %321 : f32 to vector<16x16xf32>
    %323 = arith.mulf %320, %322 : vector<16x16xf32>
    %324 = arith.addf %302, %323 : vector<16x16xf32>
    %325 = vector.extract_strided_slice %314 {offsets = [0, 2], sizes = [16, 16], strides = [1, 1]} : vector<16x22xf32> to vector<16x16xf32>
    %c23 = arith.constant 23 : index
    %326 = memref.load %arg4[%c23] : memref<99xf32, #tpu.memory_space<smem>>
    %327 = vector.broadcast %326 : f32 to vector<16x16xf32>
    %328 = arith.mulf %325, %327 : vector<16x16xf32>
    %329 = arith.addf %307, %328 : vector<16x16xf32>
    %330 = vector.extract_strided_slice %314 {offsets = [0, 3], sizes = [16, 16], strides = [1, 1]} : vector<16x22xf32> to vector<16x16xf32>
    %c24 = arith.constant 24 : index
    %331 = memref.load %arg4[%c24] : memref<99xf32, #tpu.memory_space<smem>>
    %332 = vector.broadcast %331 : f32 to vector<16x16xf32>
    %333 = arith.mulf %330, %332 : vector<16x16xf32>
    %334 = arith.addf %312, %333 : vector<16x16xf32>
    %335 = vector.extract_strided_slice %314 {offsets = [0, 4], sizes = [16, 16], strides = [1, 1]} : vector<16x22xf32> to vector<16x16xf32>
    %c25 = arith.constant 25 : index
    %336 = memref.load %arg4[%c25] : memref<99xf32, #tpu.memory_space<smem>>
    %337 = vector.broadcast %336 : f32 to vector<16x16xf32>
    %338 = arith.mulf %335, %337 : vector<16x16xf32>
    %339 = arith.addf %319, %338 : vector<16x16xf32>
    %340 = vector.extract_strided_slice %314 {offsets = [0, 5], sizes = [16, 16], strides = [1, 1]} : vector<16x22xf32> to vector<16x16xf32>
    %c26 = arith.constant 26 : index
    %341 = memref.load %arg4[%c26] : memref<99xf32, #tpu.memory_space<smem>>
    %342 = vector.broadcast %341 : f32 to vector<16x16xf32>
    %343 = arith.mulf %340, %342 : vector<16x16xf32>
    %344 = arith.addf %324, %343 : vector<16x16xf32>
    %345 = vector.extract_strided_slice %314 {offsets = [0, 6], sizes = [16, 16], strides = [1, 1]} : vector<16x22xf32> to vector<16x16xf32>
    %c27 = arith.constant 27 : index
    %346 = memref.load %arg4[%c27] : memref<99xf32, #tpu.memory_space<smem>>
    %347 = vector.broadcast %346 : f32 to vector<16x16xf32>
    %348 = arith.mulf %345, %347 : vector<16x16xf32>
    %349 = arith.addf %329, %348 : vector<16x16xf32>
    %c0_164 = arith.constant 0 : index
    %c4_165 = arith.constant 4 : index
    %c0_166 = arith.constant 0 : index
    %350 = vector.load %arg6[%c0_164, %c4_165, %c0_166] : memref<2x22x22xf32, #tpu.memory_space<vmem>>, vector<1x16x22xf32>
    %351 = vector.shape_cast %350 : vector<1x16x22xf32> to vector<16x22xf32>
    %352 = vector.extract_strided_slice %351 {offsets = [0, 0], sizes = [16, 16], strides = [1, 1]} : vector<16x22xf32> to vector<16x16xf32>
    %c28 = arith.constant 28 : index
    %353 = memref.load %arg4[%c28] : memref<99xf32, #tpu.memory_space<smem>>
    %354 = vector.broadcast %353 : f32 to vector<16x16xf32>
    %355 = arith.mulf %352, %354 : vector<16x16xf32>
    %356 = arith.addf %334, %355 : vector<16x16xf32>
    %357 = vector.extract_strided_slice %351 {offsets = [0, 1], sizes = [16, 16], strides = [1, 1]} : vector<16x22xf32> to vector<16x16xf32>
    %c29 = arith.constant 29 : index
    %358 = memref.load %arg4[%c29] : memref<99xf32, #tpu.memory_space<smem>>
    %359 = vector.broadcast %358 : f32 to vector<16x16xf32>
    %360 = arith.mulf %357, %359 : vector<16x16xf32>
    %361 = arith.addf %339, %360 : vector<16x16xf32>
    %362 = vector.extract_strided_slice %351 {offsets = [0, 2], sizes = [16, 16], strides = [1, 1]} : vector<16x22xf32> to vector<16x16xf32>
    %c30 = arith.constant 30 : index
    %363 = memref.load %arg4[%c30] : memref<99xf32, #tpu.memory_space<smem>>
    %364 = vector.broadcast %363 : f32 to vector<16x16xf32>
    %365 = arith.mulf %362, %364 : vector<16x16xf32>
    %366 = arith.addf %344, %365 : vector<16x16xf32>
    %367 = vector.extract_strided_slice %351 {offsets = [0, 3], sizes = [16, 16], strides = [1, 1]} : vector<16x22xf32> to vector<16x16xf32>
    %c31 = arith.constant 31 : index
    %368 = memref.load %arg4[%c31] : memref<99xf32, #tpu.memory_space<smem>>
    %369 = vector.broadcast %368 : f32 to vector<16x16xf32>
    %370 = arith.mulf %367, %369 : vector<16x16xf32>
    %371 = arith.addf %349, %370 : vector<16x16xf32>
    %372 = vector.extract_strided_slice %351 {offsets = [0, 4], sizes = [16, 16], strides = [1, 1]} : vector<16x22xf32> to vector<16x16xf32>
    %c32_167 = arith.constant 32 : index
    %373 = memref.load %arg4[%c32_167] : memref<99xf32, #tpu.memory_space<smem>>
    %374 = vector.broadcast %373 : f32 to vector<16x16xf32>
    %375 = arith.mulf %372, %374 : vector<16x16xf32>
    %376 = arith.addf %356, %375 : vector<16x16xf32>
    %377 = vector.extract_strided_slice %351 {offsets = [0, 5], sizes = [16, 16], strides = [1, 1]} : vector<16x22xf32> to vector<16x16xf32>
    %c33 = arith.constant 33 : index
    %378 = memref.load %arg4[%c33] : memref<99xf32, #tpu.memory_space<smem>>
    %379 = vector.broadcast %378 : f32 to vector<16x16xf32>
    %380 = arith.mulf %377, %379 : vector<16x16xf32>
    %381 = arith.addf %361, %380 : vector<16x16xf32>
    %382 = vector.extract_strided_slice %351 {offsets = [0, 6], sizes = [16, 16], strides = [1, 1]} : vector<16x22xf32> to vector<16x16xf32>
    %c34 = arith.constant 34 : index
    %383 = memref.load %arg4[%c34] : memref<99xf32, #tpu.memory_space<smem>>
    %384 = vector.broadcast %383 : f32 to vector<16x16xf32>
    %385 = arith.mulf %382, %384 : vector<16x16xf32>
    %386 = arith.addf %366, %385 : vector<16x16xf32>
    %c0_168 = arith.constant 0 : index
    %c5_169 = arith.constant 5 : index
    %c0_170 = arith.constant 0 : index
    %387 = vector.load %arg6[%c0_168, %c5_169, %c0_170] : memref<2x22x22xf32, #tpu.memory_space<vmem>>, vector<1x16x22xf32>
    %388 = vector.shape_cast %387 : vector<1x16x22xf32> to vector<16x22xf32>
    %389 = vector.extract_strided_slice %388 {offsets = [0, 0], sizes = [16, 16], strides = [1, 1]} : vector<16x22xf32> to vector<16x16xf32>
    %c35 = arith.constant 35 : index
    %390 = memref.load %arg4[%c35] : memref<99xf32, #tpu.memory_space<smem>>
    %391 = vector.broadcast %390 : f32 to vector<16x16xf32>
    %392 = arith.mulf %389, %391 : vector<16x16xf32>
    %393 = arith.addf %371, %392 : vector<16x16xf32>
    %394 = vector.extract_strided_slice %388 {offsets = [0, 1], sizes = [16, 16], strides = [1, 1]} : vector<16x22xf32> to vector<16x16xf32>
    %c36 = arith.constant 36 : index
    %395 = memref.load %arg4[%c36] : memref<99xf32, #tpu.memory_space<smem>>
    %396 = vector.broadcast %395 : f32 to vector<16x16xf32>
    %397 = arith.mulf %394, %396 : vector<16x16xf32>
    %398 = arith.addf %376, %397 : vector<16x16xf32>
    %399 = vector.extract_strided_slice %388 {offsets = [0, 2], sizes = [16, 16], strides = [1, 1]} : vector<16x22xf32> to vector<16x16xf32>
    %c37 = arith.constant 37 : index
    %400 = memref.load %arg4[%c37] : memref<99xf32, #tpu.memory_space<smem>>
    %401 = vector.broadcast %400 : f32 to vector<16x16xf32>
    %402 = arith.mulf %399, %401 : vector<16x16xf32>
    %403 = arith.addf %381, %402 : vector<16x16xf32>
    %404 = vector.extract_strided_slice %388 {offsets = [0, 3], sizes = [16, 16], strides = [1, 1]} : vector<16x22xf32> to vector<16x16xf32>
    %c38 = arith.constant 38 : index
    %405 = memref.load %arg4[%c38] : memref<99xf32, #tpu.memory_space<smem>>
    %406 = vector.broadcast %405 : f32 to vector<16x16xf32>
    %407 = arith.mulf %404, %406 : vector<16x16xf32>
    %408 = arith.addf %386, %407 : vector<16x16xf32>
    %409 = vector.extract_strided_slice %388 {offsets = [0, 4], sizes = [16, 16], strides = [1, 1]} : vector<16x22xf32> to vector<16x16xf32>
    %c39 = arith.constant 39 : index
    %410 = memref.load %arg4[%c39] : memref<99xf32, #tpu.memory_space<smem>>
    %411 = vector.broadcast %410 : f32 to vector<16x16xf32>
    %412 = arith.mulf %409, %411 : vector<16x16xf32>
    %413 = arith.addf %393, %412 : vector<16x16xf32>
    %414 = vector.extract_strided_slice %388 {offsets = [0, 5], sizes = [16, 16], strides = [1, 1]} : vector<16x22xf32> to vector<16x16xf32>
    %c40 = arith.constant 40 : index
    %415 = memref.load %arg4[%c40] : memref<99xf32, #tpu.memory_space<smem>>
    %416 = vector.broadcast %415 : f32 to vector<16x16xf32>
    %417 = arith.mulf %414, %416 : vector<16x16xf32>
    %418 = arith.addf %398, %417 : vector<16x16xf32>
    %419 = vector.extract_strided_slice %388 {offsets = [0, 6], sizes = [16, 16], strides = [1, 1]} : vector<16x22xf32> to vector<16x16xf32>
    %c41 = arith.constant 41 : index
    %420 = memref.load %arg4[%c41] : memref<99xf32, #tpu.memory_space<smem>>
    %421 = vector.broadcast %420 : f32 to vector<16x16xf32>
    %422 = arith.mulf %419, %421 : vector<16x16xf32>
    %423 = arith.addf %403, %422 : vector<16x16xf32>
    %c0_171 = arith.constant 0 : index
    %c6_172 = arith.constant 6 : index
    %c0_173 = arith.constant 0 : index
    %424 = vector.load %arg6[%c0_171, %c6_172, %c0_173] : memref<2x22x22xf32, #tpu.memory_space<vmem>>, vector<1x16x22xf32>
    %425 = vector.shape_cast %424 : vector<1x16x22xf32> to vector<16x22xf32>
    %426 = vector.extract_strided_slice %425 {offsets = [0, 0], sizes = [16, 16], strides = [1, 1]} : vector<16x22xf32> to vector<16x16xf32>
    %c42 = arith.constant 42 : index
    %427 = memref.load %arg4[%c42] : memref<99xf32, #tpu.memory_space<smem>>
    %428 = vector.broadcast %427 : f32 to vector<16x16xf32>
    %429 = arith.mulf %426, %428 : vector<16x16xf32>
    %430 = arith.addf %408, %429 : vector<16x16xf32>
    %431 = vector.extract_strided_slice %425 {offsets = [0, 1], sizes = [16, 16], strides = [1, 1]} : vector<16x22xf32> to vector<16x16xf32>
    %c43 = arith.constant 43 : index
    %432 = memref.load %arg4[%c43] : memref<99xf32, #tpu.memory_space<smem>>
    %433 = vector.broadcast %432 : f32 to vector<16x16xf32>
    %434 = arith.mulf %431, %433 : vector<16x16xf32>
    %435 = arith.addf %413, %434 : vector<16x16xf32>
    %436 = vector.extract_strided_slice %425 {offsets = [0, 2], sizes = [16, 16], strides = [1, 1]} : vector<16x22xf32> to vector<16x16xf32>
    %c44 = arith.constant 44 : index
    %437 = memref.load %arg4[%c44] : memref<99xf32, #tpu.memory_space<smem>>
    %438 = vector.broadcast %437 : f32 to vector<16x16xf32>
    %439 = arith.mulf %436, %438 : vector<16x16xf32>
    %440 = arith.addf %418, %439 : vector<16x16xf32>
    %441 = vector.extract_strided_slice %425 {offsets = [0, 3], sizes = [16, 16], strides = [1, 1]} : vector<16x22xf32> to vector<16x16xf32>
    %c45 = arith.constant 45 : index
    %442 = memref.load %arg4[%c45] : memref<99xf32, #tpu.memory_space<smem>>
    %443 = vector.broadcast %442 : f32 to vector<16x16xf32>
    %444 = arith.mulf %441, %443 : vector<16x16xf32>
    %445 = arith.addf %423, %444 : vector<16x16xf32>
    %446 = vector.extract_strided_slice %425 {offsets = [0, 4], sizes = [16, 16], strides = [1, 1]} : vector<16x22xf32> to vector<16x16xf32>
    %c46 = arith.constant 46 : index
    %447 = memref.load %arg4[%c46] : memref<99xf32, #tpu.memory_space<smem>>
    %448 = vector.broadcast %447 : f32 to vector<16x16xf32>
    %449 = arith.mulf %446, %448 : vector<16x16xf32>
    %450 = arith.addf %430, %449 : vector<16x16xf32>
    %451 = vector.extract_strided_slice %425 {offsets = [0, 5], sizes = [16, 16], strides = [1, 1]} : vector<16x22xf32> to vector<16x16xf32>
    %c47 = arith.constant 47 : index
    %452 = memref.load %arg4[%c47] : memref<99xf32, #tpu.memory_space<smem>>
    %453 = vector.broadcast %452 : f32 to vector<16x16xf32>
    %454 = arith.mulf %451, %453 : vector<16x16xf32>
    %455 = arith.addf %435, %454 : vector<16x16xf32>
    %456 = vector.extract_strided_slice %425 {offsets = [0, 6], sizes = [16, 16], strides = [1, 1]} : vector<16x22xf32> to vector<16x16xf32>
    %c48 = arith.constant 48 : index
    %457 = memref.load %arg4[%c48] : memref<99xf32, #tpu.memory_space<smem>>
    %458 = vector.broadcast %457 : f32 to vector<16x16xf32>
    %459 = arith.mulf %456, %458 : vector<16x16xf32>
    %460 = arith.addf %440, %459 : vector<16x16xf32>
    %c1_174 = arith.constant 1 : index
    %c0_175 = arith.constant 0 : index
    %c0_176 = arith.constant 0 : index
    %461 = vector.load %arg6[%c1_174, %c0_175, %c0_176] : memref<2x22x22xf32, #tpu.memory_space<vmem>>, vector<1x16x22xf32>
    %462 = vector.shape_cast %461 : vector<1x16x22xf32> to vector<16x22xf32>
    %463 = vector.extract_strided_slice %462 {offsets = [0, 0], sizes = [16, 16], strides = [1, 1]} : vector<16x22xf32> to vector<16x16xf32>
    %c49 = arith.constant 49 : index
    %464 = memref.load %arg4[%c49] : memref<99xf32, #tpu.memory_space<smem>>
    %465 = vector.broadcast %464 : f32 to vector<16x16xf32>
    %466 = arith.mulf %463, %465 : vector<16x16xf32>
    %467 = arith.addf %445, %466 : vector<16x16xf32>
    %468 = vector.extract_strided_slice %462 {offsets = [0, 1], sizes = [16, 16], strides = [1, 1]} : vector<16x22xf32> to vector<16x16xf32>
    %c50 = arith.constant 50 : index
    %469 = memref.load %arg4[%c50] : memref<99xf32, #tpu.memory_space<smem>>
    %470 = vector.broadcast %469 : f32 to vector<16x16xf32>
    %471 = arith.mulf %468, %470 : vector<16x16xf32>
    %472 = arith.addf %450, %471 : vector<16x16xf32>
    %473 = vector.extract_strided_slice %462 {offsets = [0, 2], sizes = [16, 16], strides = [1, 1]} : vector<16x22xf32> to vector<16x16xf32>
    %c51 = arith.constant 51 : index
    %474 = memref.load %arg4[%c51] : memref<99xf32, #tpu.memory_space<smem>>
    %475 = vector.broadcast %474 : f32 to vector<16x16xf32>
    %476 = arith.mulf %473, %475 : vector<16x16xf32>
    %477 = arith.addf %455, %476 : vector<16x16xf32>
    %478 = vector.extract_strided_slice %462 {offsets = [0, 3], sizes = [16, 16], strides = [1, 1]} : vector<16x22xf32> to vector<16x16xf32>
    %c52 = arith.constant 52 : index
    %479 = memref.load %arg4[%c52] : memref<99xf32, #tpu.memory_space<smem>>
    %480 = vector.broadcast %479 : f32 to vector<16x16xf32>
    %481 = arith.mulf %478, %480 : vector<16x16xf32>
    %482 = arith.addf %460, %481 : vector<16x16xf32>
    %483 = vector.extract_strided_slice %462 {offsets = [0, 4], sizes = [16, 16], strides = [1, 1]} : vector<16x22xf32> to vector<16x16xf32>
    %c53 = arith.constant 53 : index
    %484 = memref.load %arg4[%c53] : memref<99xf32, #tpu.memory_space<smem>>
    %485 = vector.broadcast %484 : f32 to vector<16x16xf32>
    %486 = arith.mulf %483, %485 : vector<16x16xf32>
    %487 = arith.addf %467, %486 : vector<16x16xf32>
    %488 = vector.extract_strided_slice %462 {offsets = [0, 5], sizes = [16, 16], strides = [1, 1]} : vector<16x22xf32> to vector<16x16xf32>
    %c54 = arith.constant 54 : index
    %489 = memref.load %arg4[%c54] : memref<99xf32, #tpu.memory_space<smem>>
    %490 = vector.broadcast %489 : f32 to vector<16x16xf32>
    %491 = arith.mulf %488, %490 : vector<16x16xf32>
    %492 = arith.addf %472, %491 : vector<16x16xf32>
    %493 = vector.extract_strided_slice %462 {offsets = [0, 6], sizes = [16, 16], strides = [1, 1]} : vector<16x22xf32> to vector<16x16xf32>
    %c55 = arith.constant 55 : index
    %494 = memref.load %arg4[%c55] : memref<99xf32, #tpu.memory_space<smem>>
    %495 = vector.broadcast %494 : f32 to vector<16x16xf32>
    %496 = arith.mulf %493, %495 : vector<16x16xf32>
    %497 = arith.addf %477, %496 : vector<16x16xf32>
    %c1_177 = arith.constant 1 : index
    %c1_178 = arith.constant 1 : index
    %c0_179 = arith.constant 0 : index
    %498 = vector.load %arg6[%c1_177, %c1_178, %c0_179] : memref<2x22x22xf32, #tpu.memory_space<vmem>>, vector<1x16x22xf32>
    %499 = vector.shape_cast %498 : vector<1x16x22xf32> to vector<16x22xf32>
    %500 = vector.extract_strided_slice %499 {offsets = [0, 0], sizes = [16, 16], strides = [1, 1]} : vector<16x22xf32> to vector<16x16xf32>
    %c56 = arith.constant 56 : index
    %501 = memref.load %arg4[%c56] : memref<99xf32, #tpu.memory_space<smem>>
    %502 = vector.broadcast %501 : f32 to vector<16x16xf32>
    %503 = arith.mulf %500, %502 : vector<16x16xf32>
    %504 = arith.addf %482, %503 : vector<16x16xf32>
    %505 = vector.extract_strided_slice %499 {offsets = [0, 1], sizes = [16, 16], strides = [1, 1]} : vector<16x22xf32> to vector<16x16xf32>
    %c57 = arith.constant 57 : index
    %506 = memref.load %arg4[%c57] : memref<99xf32, #tpu.memory_space<smem>>
    %507 = vector.broadcast %506 : f32 to vector<16x16xf32>
    %508 = arith.mulf %505, %507 : vector<16x16xf32>
    %509 = arith.addf %487, %508 : vector<16x16xf32>
    %510 = vector.extract_strided_slice %499 {offsets = [0, 2], sizes = [16, 16], strides = [1, 1]} : vector<16x22xf32> to vector<16x16xf32>
    %c58 = arith.constant 58 : index
    %511 = memref.load %arg4[%c58] : memref<99xf32, #tpu.memory_space<smem>>
    %512 = vector.broadcast %511 : f32 to vector<16x16xf32>
    %513 = arith.mulf %510, %512 : vector<16x16xf32>
    %514 = arith.addf %492, %513 : vector<16x16xf32>
    %515 = vector.extract_strided_slice %499 {offsets = [0, 3], sizes = [16, 16], strides = [1, 1]} : vector<16x22xf32> to vector<16x16xf32>
    %c59 = arith.constant 59 : index
    %516 = memref.load %arg4[%c59] : memref<99xf32, #tpu.memory_space<smem>>
    %517 = vector.broadcast %516 : f32 to vector<16x16xf32>
    %518 = arith.mulf %515, %517 : vector<16x16xf32>
    %519 = arith.addf %497, %518 : vector<16x16xf32>
    %520 = vector.extract_strided_slice %499 {offsets = [0, 4], sizes = [16, 16], strides = [1, 1]} : vector<16x22xf32> to vector<16x16xf32>
    %c60 = arith.constant 60 : index
    %521 = memref.load %arg4[%c60] : memref<99xf32, #tpu.memory_space<smem>>
    %522 = vector.broadcast %521 : f32 to vector<16x16xf32>
    %523 = arith.mulf %520, %522 : vector<16x16xf32>
    %524 = arith.addf %504, %523 : vector<16x16xf32>
    %525 = vector.extract_strided_slice %499 {offsets = [0, 5], sizes = [16, 16], strides = [1, 1]} : vector<16x22xf32> to vector<16x16xf32>
    %c61 = arith.constant 61 : index
    %526 = memref.load %arg4[%c61] : memref<99xf32, #tpu.memory_space<smem>>
    %527 = vector.broadcast %526 : f32 to vector<16x16xf32>
    %528 = arith.mulf %525, %527 : vector<16x16xf32>
    %529 = arith.addf %509, %528 : vector<16x16xf32>
    %530 = vector.extract_strided_slice %499 {offsets = [0, 6], sizes = [16, 16], strides = [1, 1]} : vector<16x22xf32> to vector<16x16xf32>
    %c62 = arith.constant 62 : index
    %531 = memref.load %arg4[%c62] : memref<99xf32, #tpu.memory_space<smem>>
    %532 = vector.broadcast %531 : f32 to vector<16x16xf32>
    %533 = arith.mulf %530, %532 : vector<16x16xf32>
    %534 = arith.addf %514, %533 : vector<16x16xf32>
    %c1_180 = arith.constant 1 : index
    %c2_181 = arith.constant 2 : index
    %c0_182 = arith.constant 0 : index
    %535 = vector.load %arg6[%c1_180, %c2_181, %c0_182] : memref<2x22x22xf32, #tpu.memory_space<vmem>>, vector<1x16x22xf32>
    %536 = vector.shape_cast %535 : vector<1x16x22xf32> to vector<16x22xf32>
    %537 = vector.extract_strided_slice %536 {offsets = [0, 0], sizes = [16, 16], strides = [1, 1]} : vector<16x22xf32> to vector<16x16xf32>
    %c63 = arith.constant 63 : index
    %538 = memref.load %arg4[%c63] : memref<99xf32, #tpu.memory_space<smem>>
    %539 = vector.broadcast %538 : f32 to vector<16x16xf32>
    %540 = arith.mulf %537, %539 : vector<16x16xf32>
    %541 = arith.addf %519, %540 : vector<16x16xf32>
    %542 = vector.extract_strided_slice %536 {offsets = [0, 1], sizes = [16, 16], strides = [1, 1]} : vector<16x22xf32> to vector<16x16xf32>
    %c64 = arith.constant 64 : index
    %543 = memref.load %arg4[%c64] : memref<99xf32, #tpu.memory_space<smem>>
    %544 = vector.broadcast %543 : f32 to vector<16x16xf32>
    %545 = arith.mulf %542, %544 : vector<16x16xf32>
    %546 = arith.addf %524, %545 : vector<16x16xf32>
    %547 = vector.extract_strided_slice %536 {offsets = [0, 2], sizes = [16, 16], strides = [1, 1]} : vector<16x22xf32> to vector<16x16xf32>
    %c65 = arith.constant 65 : index
    %548 = memref.load %arg4[%c65] : memref<99xf32, #tpu.memory_space<smem>>
    %549 = vector.broadcast %548 : f32 to vector<16x16xf32>
    %550 = arith.mulf %547, %549 : vector<16x16xf32>
    %551 = arith.addf %529, %550 : vector<16x16xf32>
    %552 = vector.extract_strided_slice %536 {offsets = [0, 3], sizes = [16, 16], strides = [1, 1]} : vector<16x22xf32> to vector<16x16xf32>
    %c66 = arith.constant 66 : index
    %553 = memref.load %arg4[%c66] : memref<99xf32, #tpu.memory_space<smem>>
    %554 = vector.broadcast %553 : f32 to vector<16x16xf32>
    %555 = arith.mulf %552, %554 : vector<16x16xf32>
    %556 = arith.addf %534, %555 : vector<16x16xf32>
    %557 = vector.extract_strided_slice %536 {offsets = [0, 4], sizes = [16, 16], strides = [1, 1]} : vector<16x22xf32> to vector<16x16xf32>
    %c67 = arith.constant 67 : index
    %558 = memref.load %arg4[%c67] : memref<99xf32, #tpu.memory_space<smem>>
    %559 = vector.broadcast %558 : f32 to vector<16x16xf32>
    %560 = arith.mulf %557, %559 : vector<16x16xf32>
    %561 = arith.addf %541, %560 : vector<16x16xf32>
    %562 = vector.extract_strided_slice %536 {offsets = [0, 5], sizes = [16, 16], strides = [1, 1]} : vector<16x22xf32> to vector<16x16xf32>
    %c68 = arith.constant 68 : index
    %563 = memref.load %arg4[%c68] : memref<99xf32, #tpu.memory_space<smem>>
    %564 = vector.broadcast %563 : f32 to vector<16x16xf32>
    %565 = arith.mulf %562, %564 : vector<16x16xf32>
    %566 = arith.addf %546, %565 : vector<16x16xf32>
    %567 = vector.extract_strided_slice %536 {offsets = [0, 6], sizes = [16, 16], strides = [1, 1]} : vector<16x22xf32> to vector<16x16xf32>
    %c69 = arith.constant 69 : index
    %568 = memref.load %arg4[%c69] : memref<99xf32, #tpu.memory_space<smem>>
    %569 = vector.broadcast %568 : f32 to vector<16x16xf32>
    %570 = arith.mulf %567, %569 : vector<16x16xf32>
    %571 = arith.addf %551, %570 : vector<16x16xf32>
    %c1_183 = arith.constant 1 : index
    %c3_184 = arith.constant 3 : index
    %c0_185 = arith.constant 0 : index
    %572 = vector.load %arg6[%c1_183, %c3_184, %c0_185] : memref<2x22x22xf32, #tpu.memory_space<vmem>>, vector<1x16x22xf32>
    %573 = vector.shape_cast %572 : vector<1x16x22xf32> to vector<16x22xf32>
    %574 = vector.extract_strided_slice %573 {offsets = [0, 0], sizes = [16, 16], strides = [1, 1]} : vector<16x22xf32> to vector<16x16xf32>
    %c70 = arith.constant 70 : index
    %575 = memref.load %arg4[%c70] : memref<99xf32, #tpu.memory_space<smem>>
    %576 = vector.broadcast %575 : f32 to vector<16x16xf32>
    %577 = arith.mulf %574, %576 : vector<16x16xf32>
    %578 = arith.addf %556, %577 : vector<16x16xf32>
    %579 = vector.extract_strided_slice %573 {offsets = [0, 1], sizes = [16, 16], strides = [1, 1]} : vector<16x22xf32> to vector<16x16xf32>
    %c71 = arith.constant 71 : index
    %580 = memref.load %arg4[%c71] : memref<99xf32, #tpu.memory_space<smem>>
    %581 = vector.broadcast %580 : f32 to vector<16x16xf32>
    %582 = arith.mulf %579, %581 : vector<16x16xf32>
    %583 = arith.addf %561, %582 : vector<16x16xf32>
    %584 = vector.extract_strided_slice %573 {offsets = [0, 2], sizes = [16, 16], strides = [1, 1]} : vector<16x22xf32> to vector<16x16xf32>
    %c72 = arith.constant 72 : index
    %585 = memref.load %arg4[%c72] : memref<99xf32, #tpu.memory_space<smem>>
    %586 = vector.broadcast %585 : f32 to vector<16x16xf32>
    %587 = arith.mulf %584, %586 : vector<16x16xf32>
    %588 = arith.addf %566, %587 : vector<16x16xf32>
    %589 = vector.extract_strided_slice %573 {offsets = [0, 3], sizes = [16, 16], strides = [1, 1]} : vector<16x22xf32> to vector<16x16xf32>
    %c73 = arith.constant 73 : index
    %590 = memref.load %arg4[%c73] : memref<99xf32, #tpu.memory_space<smem>>
    %591 = vector.broadcast %590 : f32 to vector<16x16xf32>
    %592 = arith.mulf %589, %591 : vector<16x16xf32>
    %593 = arith.addf %571, %592 : vector<16x16xf32>
    %594 = vector.extract_strided_slice %573 {offsets = [0, 4], sizes = [16, 16], strides = [1, 1]} : vector<16x22xf32> to vector<16x16xf32>
    %c74 = arith.constant 74 : index
    %595 = memref.load %arg4[%c74] : memref<99xf32, #tpu.memory_space<smem>>
    %596 = vector.broadcast %595 : f32 to vector<16x16xf32>
    %597 = arith.mulf %594, %596 : vector<16x16xf32>
    %598 = arith.addf %578, %597 : vector<16x16xf32>
    %599 = vector.extract_strided_slice %573 {offsets = [0, 5], sizes = [16, 16], strides = [1, 1]} : vector<16x22xf32> to vector<16x16xf32>
    %c75 = arith.constant 75 : index
    %600 = memref.load %arg4[%c75] : memref<99xf32, #tpu.memory_space<smem>>
    %601 = vector.broadcast %600 : f32 to vector<16x16xf32>
    %602 = arith.mulf %599, %601 : vector<16x16xf32>
    %603 = arith.addf %583, %602 : vector<16x16xf32>
    %604 = vector.extract_strided_slice %573 {offsets = [0, 6], sizes = [16, 16], strides = [1, 1]} : vector<16x22xf32> to vector<16x16xf32>
    %c76 = arith.constant 76 : index
    %605 = memref.load %arg4[%c76] : memref<99xf32, #tpu.memory_space<smem>>
    %606 = vector.broadcast %605 : f32 to vector<16x16xf32>
    %607 = arith.mulf %604, %606 : vector<16x16xf32>
    %608 = arith.addf %588, %607 : vector<16x16xf32>
    %c1_186 = arith.constant 1 : index
    %c4_187 = arith.constant 4 : index
    %c0_188 = arith.constant 0 : index
    %609 = vector.load %arg6[%c1_186, %c4_187, %c0_188] : memref<2x22x22xf32, #tpu.memory_space<vmem>>, vector<1x16x22xf32>
    %610 = vector.shape_cast %609 : vector<1x16x22xf32> to vector<16x22xf32>
    %611 = vector.extract_strided_slice %610 {offsets = [0, 0], sizes = [16, 16], strides = [1, 1]} : vector<16x22xf32> to vector<16x16xf32>
    %c77 = arith.constant 77 : index
    %612 = memref.load %arg4[%c77] : memref<99xf32, #tpu.memory_space<smem>>
    %613 = vector.broadcast %612 : f32 to vector<16x16xf32>
    %614 = arith.mulf %611, %613 : vector<16x16xf32>
    %615 = arith.addf %593, %614 : vector<16x16xf32>
    %616 = vector.extract_strided_slice %610 {offsets = [0, 1], sizes = [16, 16], strides = [1, 1]} : vector<16x22xf32> to vector<16x16xf32>
    %c78 = arith.constant 78 : index
    %617 = memref.load %arg4[%c78] : memref<99xf32, #tpu.memory_space<smem>>
    %618 = vector.broadcast %617 : f32 to vector<16x16xf32>
    %619 = arith.mulf %616, %618 : vector<16x16xf32>
    %620 = arith.addf %598, %619 : vector<16x16xf32>
    %621 = vector.extract_strided_slice %610 {offsets = [0, 2], sizes = [16, 16], strides = [1, 1]} : vector<16x22xf32> to vector<16x16xf32>
    %c79 = arith.constant 79 : index
    %622 = memref.load %arg4[%c79] : memref<99xf32, #tpu.memory_space<smem>>
    %623 = vector.broadcast %622 : f32 to vector<16x16xf32>
    %624 = arith.mulf %621, %623 : vector<16x16xf32>
    %625 = arith.addf %603, %624 : vector<16x16xf32>
    %626 = vector.extract_strided_slice %610 {offsets = [0, 3], sizes = [16, 16], strides = [1, 1]} : vector<16x22xf32> to vector<16x16xf32>
    %c80 = arith.constant 80 : index
    %627 = memref.load %arg4[%c80] : memref<99xf32, #tpu.memory_space<smem>>
    %628 = vector.broadcast %627 : f32 to vector<16x16xf32>
    %629 = arith.mulf %626, %628 : vector<16x16xf32>
    %630 = arith.addf %608, %629 : vector<16x16xf32>
    %631 = vector.extract_strided_slice %610 {offsets = [0, 4], sizes = [16, 16], strides = [1, 1]} : vector<16x22xf32> to vector<16x16xf32>
    %c81 = arith.constant 81 : index
    %632 = memref.load %arg4[%c81] : memref<99xf32, #tpu.memory_space<smem>>
    %633 = vector.broadcast %632 : f32 to vector<16x16xf32>
    %634 = arith.mulf %631, %633 : vector<16x16xf32>
    %635 = arith.addf %615, %634 : vector<16x16xf32>
    %636 = vector.extract_strided_slice %610 {offsets = [0, 5], sizes = [16, 16], strides = [1, 1]} : vector<16x22xf32> to vector<16x16xf32>
    %c82 = arith.constant 82 : index
    %637 = memref.load %arg4[%c82] : memref<99xf32, #tpu.memory_space<smem>>
    %638 = vector.broadcast %637 : f32 to vector<16x16xf32>
    %639 = arith.mulf %636, %638 : vector<16x16xf32>
    %640 = arith.addf %620, %639 : vector<16x16xf32>
    %641 = vector.extract_strided_slice %610 {offsets = [0, 6], sizes = [16, 16], strides = [1, 1]} : vector<16x22xf32> to vector<16x16xf32>
    %c83 = arith.constant 83 : index
    %642 = memref.load %arg4[%c83] : memref<99xf32, #tpu.memory_space<smem>>
    %643 = vector.broadcast %642 : f32 to vector<16x16xf32>
    %644 = arith.mulf %641, %643 : vector<16x16xf32>
    %645 = arith.addf %625, %644 : vector<16x16xf32>
    %c1_189 = arith.constant 1 : index
    %c5_190 = arith.constant 5 : index
    %c0_191 = arith.constant 0 : index
    %646 = vector.load %arg6[%c1_189, %c5_190, %c0_191] : memref<2x22x22xf32, #tpu.memory_space<vmem>>, vector<1x16x22xf32>
    %647 = vector.shape_cast %646 : vector<1x16x22xf32> to vector<16x22xf32>
    %648 = vector.extract_strided_slice %647 {offsets = [0, 0], sizes = [16, 16], strides = [1, 1]} : vector<16x22xf32> to vector<16x16xf32>
    %c84 = arith.constant 84 : index
    %649 = memref.load %arg4[%c84] : memref<99xf32, #tpu.memory_space<smem>>
    %650 = vector.broadcast %649 : f32 to vector<16x16xf32>
    %651 = arith.mulf %648, %650 : vector<16x16xf32>
    %652 = arith.addf %630, %651 : vector<16x16xf32>
    %653 = vector.extract_strided_slice %647 {offsets = [0, 1], sizes = [16, 16], strides = [1, 1]} : vector<16x22xf32> to vector<16x16xf32>
    %c85 = arith.constant 85 : index
    %654 = memref.load %arg4[%c85] : memref<99xf32, #tpu.memory_space<smem>>
    %655 = vector.broadcast %654 : f32 to vector<16x16xf32>
    %656 = arith.mulf %653, %655 : vector<16x16xf32>
    %657 = arith.addf %635, %656 : vector<16x16xf32>
    %658 = vector.extract_strided_slice %647 {offsets = [0, 2], sizes = [16, 16], strides = [1, 1]} : vector<16x22xf32> to vector<16x16xf32>
    %c86 = arith.constant 86 : index
    %659 = memref.load %arg4[%c86] : memref<99xf32, #tpu.memory_space<smem>>
    %660 = vector.broadcast %659 : f32 to vector<16x16xf32>
    %661 = arith.mulf %658, %660 : vector<16x16xf32>
    %662 = arith.addf %640, %661 : vector<16x16xf32>
    %663 = vector.extract_strided_slice %647 {offsets = [0, 3], sizes = [16, 16], strides = [1, 1]} : vector<16x22xf32> to vector<16x16xf32>
    %c87 = arith.constant 87 : index
    %664 = memref.load %arg4[%c87] : memref<99xf32, #tpu.memory_space<smem>>
    %665 = vector.broadcast %664 : f32 to vector<16x16xf32>
    %666 = arith.mulf %663, %665 : vector<16x16xf32>
    %667 = arith.addf %645, %666 : vector<16x16xf32>
    %668 = vector.extract_strided_slice %647 {offsets = [0, 4], sizes = [16, 16], strides = [1, 1]} : vector<16x22xf32> to vector<16x16xf32>
    %c88 = arith.constant 88 : index
    %669 = memref.load %arg4[%c88] : memref<99xf32, #tpu.memory_space<smem>>
    %670 = vector.broadcast %669 : f32 to vector<16x16xf32>
    %671 = arith.mulf %668, %670 : vector<16x16xf32>
    %672 = arith.addf %652, %671 : vector<16x16xf32>
    %673 = vector.extract_strided_slice %647 {offsets = [0, 5], sizes = [16, 16], strides = [1, 1]} : vector<16x22xf32> to vector<16x16xf32>
    %c89 = arith.constant 89 : index
    %674 = memref.load %arg4[%c89] : memref<99xf32, #tpu.memory_space<smem>>
    %675 = vector.broadcast %674 : f32 to vector<16x16xf32>
    %676 = arith.mulf %673, %675 : vector<16x16xf32>
    %677 = arith.addf %657, %676 : vector<16x16xf32>
    %678 = vector.extract_strided_slice %647 {offsets = [0, 6], sizes = [16, 16], strides = [1, 1]} : vector<16x22xf32> to vector<16x16xf32>
    %c90 = arith.constant 90 : index
    %679 = memref.load %arg4[%c90] : memref<99xf32, #tpu.memory_space<smem>>
    %680 = vector.broadcast %679 : f32 to vector<16x16xf32>
    %681 = arith.mulf %678, %680 : vector<16x16xf32>
    %682 = arith.addf %662, %681 : vector<16x16xf32>
    %c1_192 = arith.constant 1 : index
    %c6_193 = arith.constant 6 : index
    %c0_194 = arith.constant 0 : index
    %683 = vector.load %arg6[%c1_192, %c6_193, %c0_194] : memref<2x22x22xf32, #tpu.memory_space<vmem>>, vector<1x16x22xf32>
    %684 = vector.shape_cast %683 : vector<1x16x22xf32> to vector<16x22xf32>
    %685 = vector.extract_strided_slice %684 {offsets = [0, 0], sizes = [16, 16], strides = [1, 1]} : vector<16x22xf32> to vector<16x16xf32>
    %c91 = arith.constant 91 : index
    %686 = memref.load %arg4[%c91] : memref<99xf32, #tpu.memory_space<smem>>
    %687 = vector.broadcast %686 : f32 to vector<16x16xf32>
    %688 = arith.mulf %685, %687 : vector<16x16xf32>
    %689 = arith.addf %667, %688 : vector<16x16xf32>
    %690 = vector.extract_strided_slice %684 {offsets = [0, 1], sizes = [16, 16], strides = [1, 1]} : vector<16x22xf32> to vector<16x16xf32>
    %c92 = arith.constant 92 : index
    %691 = memref.load %arg4[%c92] : memref<99xf32, #tpu.memory_space<smem>>
    %692 = vector.broadcast %691 : f32 to vector<16x16xf32>
    %693 = arith.mulf %690, %692 : vector<16x16xf32>
    %694 = arith.addf %672, %693 : vector<16x16xf32>
    %695 = vector.extract_strided_slice %684 {offsets = [0, 2], sizes = [16, 16], strides = [1, 1]} : vector<16x22xf32> to vector<16x16xf32>
    %c93 = arith.constant 93 : index
    %696 = memref.load %arg4[%c93] : memref<99xf32, #tpu.memory_space<smem>>
    %697 = vector.broadcast %696 : f32 to vector<16x16xf32>
    %698 = arith.mulf %695, %697 : vector<16x16xf32>
    %699 = arith.addf %677, %698 : vector<16x16xf32>
    %700 = vector.extract_strided_slice %684 {offsets = [0, 3], sizes = [16, 16], strides = [1, 1]} : vector<16x22xf32> to vector<16x16xf32>
    %c94 = arith.constant 94 : index
    %701 = memref.load %arg4[%c94] : memref<99xf32, #tpu.memory_space<smem>>
    %702 = vector.broadcast %701 : f32 to vector<16x16xf32>
    %703 = arith.mulf %700, %702 : vector<16x16xf32>
    %704 = arith.addf %682, %703 : vector<16x16xf32>
    %705 = vector.extract_strided_slice %684 {offsets = [0, 4], sizes = [16, 16], strides = [1, 1]} : vector<16x22xf32> to vector<16x16xf32>
    %c95 = arith.constant 95 : index
    %706 = memref.load %arg4[%c95] : memref<99xf32, #tpu.memory_space<smem>>
    %707 = vector.broadcast %706 : f32 to vector<16x16xf32>
    %708 = arith.mulf %705, %707 : vector<16x16xf32>
    %709 = arith.addf %689, %708 : vector<16x16xf32>
    %710 = vector.extract_strided_slice %684 {offsets = [0, 5], sizes = [16, 16], strides = [1, 1]} : vector<16x22xf32> to vector<16x16xf32>
    %c96 = arith.constant 96 : index
    %711 = memref.load %arg4[%c96] : memref<99xf32, #tpu.memory_space<smem>>
    %712 = vector.broadcast %711 : f32 to vector<16x16xf32>
    %713 = arith.mulf %710, %712 : vector<16x16xf32>
    %714 = arith.addf %694, %713 : vector<16x16xf32>
    %715 = vector.extract_strided_slice %684 {offsets = [0, 6], sizes = [16, 16], strides = [1, 1]} : vector<16x22xf32> to vector<16x16xf32>
    %c97 = arith.constant 97 : index
    %716 = memref.load %arg4[%c97] : memref<99xf32, #tpu.memory_space<smem>>
    %717 = vector.broadcast %716 : f32 to vector<16x16xf32>
    %718 = arith.mulf %715, %717 : vector<16x16xf32>
    %719 = arith.addf %699, %718 : vector<16x16xf32>
    %720 = arith.addf %714, %719 : vector<16x16xf32>
    %721 = arith.addf %704, %709 : vector<16x16xf32>
    %722 = arith.addf %720, %721 : vector<16x16xf32>
    %c98 = arith.constant 98 : index
    %723 = memref.load %arg4[%c98] : memref<99xf32, #tpu.memory_space<smem>>
    %724 = vector.broadcast %723 : f32 to vector<16x16xf32>
    %725 = arith.addf %722, %724 : vector<16x16xf32>
    %726 = arith.negf %725 : vector<16x16xf32>
    %727 = math.exp %726 : vector<16x16xf32>
    %cst_195 = arith.constant 1.000000e+00 : f32
    %728 = vector.broadcast %cst_195 : f32 to vector<16x16xf32>
    %729 = arith.addf %728, %727 : vector<16x16xf32>
    %730 = arith.divf %728, %729 : vector<16x16xf32>
    %731 = vector.extract_strided_slice %730 {offsets = [0, 0], sizes = [1, 16], strides = [1, 1]} : vector<16x16xf32> to vector<1x16xf32>
    %c0_196 = arith.constant 0 : index
    %c0_197 = arith.constant 0 : index
    %732 = vector.load %arg7[%c0_196, %c0_197] : memref<1x256xf32, #tpu.memory_space<vmem>>, vector<1x16xf32>
    tpu.vector_store %arg7[%c0_196, %c0_197], %731 {strides = array<i32>} : memref<1x256xf32, #tpu.memory_space<vmem>>, vector<1x16xf32>,
    %733 = vector.extract_strided_slice %730 {offsets = [1, 0], sizes = [1, 16], strides = [1, 1]} : vector<16x16xf32> to vector<1x16xf32>
    %c0_198 = arith.constant 0 : index
    %c16_199 = arith.constant 16 : index
    %734 = vector.load %arg7[%c0_198, %c16_199] : memref<1x256xf32, #tpu.memory_space<vmem>>, vector<1x16xf32>
    tpu.vector_store %arg7[%c0_198, %c16_199], %733 {strides = array<i32>} : memref<1x256xf32, #tpu.memory_space<vmem>>, vector<1x16xf32>,
    %735 = vector.extract_strided_slice %730 {offsets = [2, 0], sizes = [1, 16], strides = [1, 1]} : vector<16x16xf32> to vector<1x16xf32>
    %c0_200 = arith.constant 0 : index
    %c32_201 = arith.constant 32 : index
    %736 = vector.load %arg7[%c0_200, %c32_201] : memref<1x256xf32, #tpu.memory_space<vmem>>, vector<1x16xf32>
    tpu.vector_store %arg7[%c0_200, %c32_201], %735 {strides = array<i32>} : memref<1x256xf32, #tpu.memory_space<vmem>>, vector<1x16xf32>,
    %737 = vector.extract_strided_slice %730 {offsets = [3, 0], sizes = [1, 16], strides = [1, 1]} : vector<16x16xf32> to vector<1x16xf32>
    %c0_202 = arith.constant 0 : index
    %c48_203 = arith.constant 48 : index
    %738 = vector.load %arg7[%c0_202, %c48_203] : memref<1x256xf32, #tpu.memory_space<vmem>>, vector<1x16xf32>
    tpu.vector_store %arg7[%c0_202, %c48_203], %737 {strides = array<i32>} : memref<1x256xf32, #tpu.memory_space<vmem>>, vector<1x16xf32>,
    %739 = vector.extract_strided_slice %730 {offsets = [4, 0], sizes = [1, 16], strides = [1, 1]} : vector<16x16xf32> to vector<1x16xf32>
    %c0_204 = arith.constant 0 : index
    %c64_205 = arith.constant 64 : index
    %740 = vector.load %arg7[%c0_204, %c64_205] : memref<1x256xf32, #tpu.memory_space<vmem>>, vector<1x16xf32>
    tpu.vector_store %arg7[%c0_204, %c64_205], %739 {strides = array<i32>} : memref<1x256xf32, #tpu.memory_space<vmem>>, vector<1x16xf32>,
    %741 = vector.extract_strided_slice %730 {offsets = [5, 0], sizes = [1, 16], strides = [1, 1]} : vector<16x16xf32> to vector<1x16xf32>
    %c0_206 = arith.constant 0 : index
    %c80_207 = arith.constant 80 : index
    %742 = vector.load %arg7[%c0_206, %c80_207] : memref<1x256xf32, #tpu.memory_space<vmem>>, vector<1x16xf32>
    tpu.vector_store %arg7[%c0_206, %c80_207], %741 {strides = array<i32>} : memref<1x256xf32, #tpu.memory_space<vmem>>, vector<1x16xf32>,
    %743 = vector.extract_strided_slice %730 {offsets = [6, 0], sizes = [1, 16], strides = [1, 1]} : vector<16x16xf32> to vector<1x16xf32>
    %c0_208 = arith.constant 0 : index
    %c96_209 = arith.constant 96 : index
    %744 = vector.load %arg7[%c0_208, %c96_209] : memref<1x256xf32, #tpu.memory_space<vmem>>, vector<1x16xf32>
    tpu.vector_store %arg7[%c0_208, %c96_209], %743 {strides = array<i32>} : memref<1x256xf32, #tpu.memory_space<vmem>>, vector<1x16xf32>,
    %745 = vector.extract_strided_slice %730 {offsets = [7, 0], sizes = [1, 16], strides = [1, 1]} : vector<16x16xf32> to vector<1x16xf32>
    %c0_210 = arith.constant 0 : index
    %c112 = arith.constant 112 : index
    %746 = vector.load %arg7[%c0_210, %c112] : memref<1x256xf32, #tpu.memory_space<vmem>>, vector<1x16xf32>
    tpu.vector_store %arg7[%c0_210, %c112], %745 {strides = array<i32>} : memref<1x256xf32, #tpu.memory_space<vmem>>, vector<1x16xf32>,
    %747 = vector.extract_strided_slice %730 {offsets = [8, 0], sizes = [1, 16], strides = [1, 1]} : vector<16x16xf32> to vector<1x16xf32>
    %c0_211 = arith.constant 0 : index
    %c128 = arith.constant 128 : index
    %748 = vector.load %arg7[%c0_211, %c128] : memref<1x256xf32, #tpu.memory_space<vmem>>, vector<1x16xf32>
    tpu.vector_store %arg7[%c0_211, %c128], %747 {strides = array<i32>} : memref<1x256xf32, #tpu.memory_space<vmem>>, vector<1x16xf32>,
    %749 = vector.extract_strided_slice %730 {offsets = [9, 0], sizes = [1, 16], strides = [1, 1]} : vector<16x16xf32> to vector<1x16xf32>
    %c0_212 = arith.constant 0 : index
    %c144 = arith.constant 144 : index
    %750 = vector.load %arg7[%c0_212, %c144] : memref<1x256xf32, #tpu.memory_space<vmem>>, vector<1x16xf32>
    tpu.vector_store %arg7[%c0_212, %c144], %749 {strides = array<i32>} : memref<1x256xf32, #tpu.memory_space<vmem>>, vector<1x16xf32>,
    %751 = vector.extract_strided_slice %730 {offsets = [10, 0], sizes = [1, 16], strides = [1, 1]} : vector<16x16xf32> to vector<1x16xf32>
    %c0_213 = arith.constant 0 : index
    %c160 = arith.constant 160 : index
    %752 = vector.load %arg7[%c0_213, %c160] : memref<1x256xf32, #tpu.memory_space<vmem>>, vector<1x16xf32>
    tpu.vector_store %arg7[%c0_213, %c160], %751 {strides = array<i32>} : memref<1x256xf32, #tpu.memory_space<vmem>>, vector<1x16xf32>,
    %753 = vector.extract_strided_slice %730 {offsets = [11, 0], sizes = [1, 16], strides = [1, 1]} : vector<16x16xf32> to vector<1x16xf32>
    %c0_214 = arith.constant 0 : index
    %c176 = arith.constant 176 : index
    %754 = vector.load %arg7[%c0_214, %c176] : memref<1x256xf32, #tpu.memory_space<vmem>>, vector<1x16xf32>
    tpu.vector_store %arg7[%c0_214, %c176], %753 {strides = array<i32>} : memref<1x256xf32, #tpu.memory_space<vmem>>, vector<1x16xf32>,
    %755 = vector.extract_strided_slice %730 {offsets = [12, 0], sizes = [1, 16], strides = [1, 1]} : vector<16x16xf32> to vector<1x16xf32>
    %c0_215 = arith.constant 0 : index
    %c192 = arith.constant 192 : index
    %756 = vector.load %arg7[%c0_215, %c192] : memref<1x256xf32, #tpu.memory_space<vmem>>, vector<1x16xf32>
    tpu.vector_store %arg7[%c0_215, %c192], %755 {strides = array<i32>} : memref<1x256xf32, #tpu.memory_space<vmem>>, vector<1x16xf32>,
    %757 = vector.extract_strided_slice %730 {offsets = [13, 0], sizes = [1, 16], strides = [1, 1]} : vector<16x16xf32> to vector<1x16xf32>
    %c0_216 = arith.constant 0 : index
    %c208 = arith.constant 208 : index
    %758 = vector.load %arg7[%c0_216, %c208] : memref<1x256xf32, #tpu.memory_space<vmem>>, vector<1x16xf32>
    tpu.vector_store %arg7[%c0_216, %c208], %757 {strides = array<i32>} : memref<1x256xf32, #tpu.memory_space<vmem>>, vector<1x16xf32>,
    %759 = vector.extract_strided_slice %730 {offsets = [14, 0], sizes = [1, 16], strides = [1, 1]} : vector<16x16xf32> to vector<1x16xf32>
    %c0_217 = arith.constant 0 : index
    %c224 = arith.constant 224 : index
    %760 = vector.load %arg7[%c0_217, %c224] : memref<1x256xf32, #tpu.memory_space<vmem>>, vector<1x16xf32>
    tpu.vector_store %arg7[%c0_217, %c224], %759 {strides = array<i32>} : memref<1x256xf32, #tpu.memory_space<vmem>>, vector<1x16xf32>,
    %761 = vector.extract_strided_slice %730 {offsets = [15, 0], sizes = [1, 16], strides = [1, 1]} : vector<16x16xf32> to vector<1x16xf32>
    %c0_218 = arith.constant 0 : index
    %c240 = arith.constant 240 : index
    %762 = vector.load %arg7[%c0_218, %c240] : memref<1x256xf32, #tpu.memory_space<vmem>>, vector<1x16xf32>
    tpu.vector_store %arg7[%c0_218, %c240], %761 {strides = array<i32>} : memref<1x256xf32, #tpu.memory_space<vmem>>, vector<1x16xf32>,
    %c0_219 = arith.constant 0 : index
    %c0_220 = arith.constant 0 : index
    %763 = vector.load %arg7[%c0_219, %c0_220] : memref<1x256xf32, #tpu.memory_space<vmem>>, vector<1x256xf32>
    %764 = vector.broadcast %763 : vector<1x256xf32> to vector<32x256xf32>
    %765 = arith.mulf %31, %764 : vector<32x256xf32>
    %c0_221 = arith.constant 0 : index
    %c0_222 = arith.constant 0 : index
    %c0_223 = arith.constant 0 : index
    %766 = vector.load %arg5[%c0_221, %c0_222, %c0_223] : memref<1x32x256xf32, #tpu.memory_space<vmem>>, vector<1x32x256xf32>
    %767 = vector.shape_cast %766 : vector<1x32x256xf32> to vector<32x256xf32>
    %768 = vector.shape_cast %765 : vector<32x256xf32> to vector<1x32x256xf32>
    tpu.vector_store %arg5[%c0_221, %c0_222, %c0_223], %768 {strides = array<i32>} : memref<1x32x256xf32, #tpu.memory_space<vmem>>, vector<1x32x256xf32>,
    return
  }
  func.func @transform_0(%arg0: i32) -> (i32, i32, i32) {
    %c0_i32 = arith.constant 0 : i32
    %c0_i32_0 = arith.constant 0 : i32
    %c0_i32_1 = arith.constant 0 : i32
    return %arg0, %c0_i32, %c0_i32_0 : i32, i32, i32
  }
  func.func @transform_1(%arg0: i32) -> (i32, i32) {
    %c0_i32 = arith.constant 0 : i32
    %c0_i32_0 = arith.constant 0 : i32
    %c0_i32_1 = arith.constant 0 : i32
    return %c0_i32, %c0_i32_0 : i32, i32
  }
  func.func @transform_2(%arg0: i32) -> (i32, i32) {
    %c0_i32 = arith.constant 0 : i32
    %c0_i32_0 = arith.constant 0 : i32
    %c0_i32_1 = arith.constant 0 : i32
    return %c0_i32, %c0_i32_0 : i32, i32
  }
  func.func @transform_3(%arg0: i32) -> i32 {
    %c0_i32 = arith.constant 0 : i32
    %c0_i32_0 = arith.constant 0 : i32
    return %c0_i32 : i32
  }
  func.func @transform_4(%arg0: i32) -> (i32, i32, i32) {
    %c0_i32 = arith.constant 0 : i32
    %c0_i32_0 = arith.constant 0 : i32
    %c0_i32_1 = arith.constant 0 : i32
    return %arg0, %c0_i32, %c0_i32_0 : i32, i32, i32
  }
}

</mosaic_0001>

<llo_original>
// kernel: cbam_forward.1
$region0: #{cbam_forward.1}
  #allocation0 [shape = 'u32[]', space=smem, size = 0x4, offset = 0x4, fixed_abs, tag = 'smem constant byte address 0x4 - core index']
  #allocation1 [shape = 'u32[144,128]{1,0:T(1,128)}', space=vmem, size = 0x12000, scoped, tag = 'internal scratch']
  #allocation2 [shape = 'f32[2,22,22]{2,1,0:T(8,128)}', space=vmem, size = 0x6000, scoped, tag = 'scratch operand']
  #allocation3 [shape = 'f32[1,256]{1,0:T(1,128)}', space=vmem, size = 0x400, scoped, tag = 'scratch operand']
  %s0 = inlined_call_operand.vmem [shape: f32[2,32,256], index: 0, kind: input, shape index: {}]
  %s1 = inlined_call_operand.vmem [shape: f32[2,33], index: 1, kind: input, shape index: {}]
  %s2 = inlined_call_operand.vmem [shape: f32[32,3], index: 2, kind: input, shape index: {}]
  %s3 = inlined_call_operand.vmem [shape: f32[99], index: 3, kind: input, shape index: {}]
  %s4 = inlined_call_operand.vmem [shape: f32[2,32,256], index: 4, kind: output, shape index: {}]
  %s5 = sld [smem:[#allocation0]]
  $region53: #{cbam_forward.1} parent=0
    _
  %s7 = ssub.s32 1, %s5
  %s8 = scalar_select 0, %s7, %s5
  $region1: #{cbam_forward.1} parent=0
    #allocation4 [shape = 'u8[512]{0}', space=smem, size = 0x200, scoped, tag = 'input window, operand 3, single buffered']
    #allocation5 [shape = 's32[2]{0}', space=sflag, size = 0x8, scoped, tag = 'scoped memory for cbam_forward.1']
    %9 = vsyncpa [#allocation5], 0
    loop: start=0, step=1, limit=4
    $region2: #{cbam_forward.1} parent=1 // loop_pre_header
      _
    $region3: #{cbam_forward.1} parent=1 // loop_header
      %s11 = sphi 0, %s15
      %p12 = scmp.ge.s32.totalorder %s11, 4
      %s21 = sphi 0, %s23
      %s24 = sphi 0, %s21
      %s25 = sphi 0, %s24
      %s41 = sphi 0, %s25
      %s45 = sphi 0, %s45
      %s47 = sphi 0, %s45
      %s48 = sphi 0, %s47
      %s62 = sphi 0, %s48
      %s66 = sphi 0, %s66
      %s68 = sphi 0, %s66
      %s69 = sphi 0, %s68
      %s83 = sphi 0, %s69
      %s87 = sphi 0, %s87
      %s89 = sphi 0, %s87
      %s90 = sphi 0, %s89
      %s104 = sphi 0, %s90
      %s110 = sphi 0, %s112
      %s113 = sphi 0, %s110
      %s114 = sphi 0, %s113
      %s130 = sphi 0, %s114
    $region4: #{cbam_forward.1} parent=1 // loop_header_branch
      %14 = sbr.rel (%p12) target = $region8
    $region5: #{cbam_forward.1} parent=1 // loop_body
      %s16 = ssub.s32 %s11, 1
      %s17 = ssub.s32 %s11, 2
      %s18 = sadd.s32 %s11, 1
      %s19 = ssub.s32 %s11, %s18
      %p20 = scmp.eq.s32.totalorder %s19, 0
      %s22 = sadd.s32 %s21, 1
      %s23 = scalar_select %p20, %s21, %s22
      %p26 = pneg %p20
      %p27 = scmp.eq.s32.totalorder %s11, 1
      %p28 = por %p26, %p27
      %p29 = scmp.ne.s32.totalorder %s21, %s24
      %p30 = scmp.eq.s32.totalorder %s11, 0
      %p31 = por %p29, %p30
      %p32 = scmp.ne.s32.totalorder %s21, %s24
      %p33 = scmp.eq.s32.totalorder %s16, 1
      %p34 = por %p32, %p33
      %p35 = scmp.ne.s32.totalorder %s24, %s25
      %p36 = scmp.eq.s32.totalorder %s16, 0
      %p37 = por %p35, %p36
      %p38 = scmp.ne.s32.totalorder %s24, %s25
      %p39 = scmp.eq.s32.totalorder %s17, 1
      %p40 = por %p38, %p39
      %p42 = scmp.ne.s32.totalorder %s25, %s41
      %p43 = scmp.eq.s32.totalorder %s17, 0
      %p44 = por %p42, %p43
      %s46 = sadd.s32 %s45, 1
      %p49 = scmp.eq.s32.totalorder %s11, 1
      %p50 = scmp.ne.s32.totalorder %s45, %s47
      %p51 = scmp.eq.s32.totalorder %s11, 0
      %p52 = por %p50, %p51
      %p53 = scmp.ne.s32.totalorder %s45, %s47
      %p54 = scmp.eq.s32.totalorder %s16, 1
      %p55 = por %p53, %p54
      %p56 = scmp.ne.s32.totalorder %s47, %s48
      %p57 = scmp.eq.s32.totalorder %s16, 0
      %p58 = por %p56, %p57
      %p59 = scmp.ne.s32.totalorder %s47, %s48
      %p60 = scmp.eq.s32.totalorder %s17, 1
      %p61 = por %p59, %p60
      %p63 = scmp.ne.s32.totalorder %s48, %s62
      %p64 = scmp.eq.s32.totalorder %s17, 0
      %p65 = por %p63, %p64
      %s67 = sadd.s32 %s66, 1
      %p70 = scmp.eq.s32.totalorder %s11, 1
      %p71 = scmp.ne.s32.totalorder %s66, %s68
      %p72 = scmp.eq.s32.totalorder %s11, 0
      %p73 = por %p71, %p72
      %p74 = scmp.ne.s32.totalorder %s66, %s68
      %p75 = scmp.eq.s32.totalorder %s16, 1
      %p76 = por %p74, %p75
      %p77 = scmp.ne.s32.totalorder %s68, %s69
      %p78 = scmp.eq.s32.totalorder %s16, 0
      %p79 = por %p77, %p78
      %p80 = scmp.ne.s32.totalorder %s68, %s69
      %p81 = scmp.eq.s32.totalorder %s17, 1
      %p82 = por %p80, %p81
      %p84 = scmp.ne.s32.totalorder %s69, %s83
      %p85 = scmp.eq.s32.totalorder %s17, 0
      %p86 = por %p84, %p85
      %s88 = sadd.s32 %s87, 1
      %p91 = scmp.eq.s32.totalorder %s11, 1
      %p92 = scmp.ne.s32.totalorder %s87, %s89
      %p93 = scmp.eq.s32.totalorder %s11, 0
      %p94 = por %p92, %p93
      %p95 = scmp.ne.s32.totalorder %s87, %s89
      %p96 = scmp.eq.s32.totalorder %s16, 1
      %p97 = por %p95, %p96
      %p98 = scmp.ne.s32.totalorder %s89, %s90
      %p99 = scmp.eq.s32.totalorder %s16, 0
      %p100 = por %p98, %p99
      %p101 = scmp.ne.s32.totalorder %s89, %s90
      %p102 = scmp.eq.s32.totalorder %s17, 1
      %p103 = por %p101, %p102
      %p105 = scmp.ne.s32.totalorder %s90, %s104
      %p106 = scmp.eq.s32.totalorder %s17, 0
      %p107 = por %p105, %p106
      %s108 = ssub.s32 %s11, %s18
      %p109 = scmp.eq.s32.totalorder %s108, 0
      %s111 = sadd.s32 %s110, 1
      %s112 = scalar_select %p109, %s110, %s111
      %p115 = pneg %p109
      %p116 = scmp.eq.s32.totalorder %s11, 1
      %p117 = por %p115, %p116
      %p118 = scmp.ne.s32.totalorder %s110, %s113
      %p119 = scmp.eq.s32.totalorder %s11, 0
      %p120 = por %p118, %p119
      %p121 = scmp.ne.s32.totalorder %s110, %s113
      %p122 = scmp.eq.s32.totalorder %s16, 1
      %p123 = por %p121, %p122
      %p124 = scmp.ne.s32.totalorder %s113, %s114
      %p125 = scmp.eq.s32.totalorder %s16, 0
      %p126 = por %p124, %p125
      %p127 = scmp.ne.s32.totalorder %s113, %s114
      %p128 = scmp.eq.s32.totalorder %s17, 1
      %p129 = por %p127, %p128
      %p131 = scmp.ne.s32.totalorder %s114, %s130
      %p132 = scmp.eq.s32.totalorder %s17, 0
      %p133 = por %p131, %p132
      %p134 = scmp.le.s32.totalorder 1, %s11
      %p135 = scmp.lt.s32.totalorder %s11, 3
      %p136 = pnand %p134, %p135
      %p137 = pneg %p136
      // Predicated region
      $region9: #{cbam_forward.1} parent=5 // pred_check
        _
      $region10: #{cbam_forward.1} parent=5 // pred_check_branch
        %139 = sbr.rel (%p136) target = $region12
      $region11: #{cbam_forward.1} parent=5 // pred_region
        %s140 = ssub.s32 %s11, 1
        // Predicated region
        $region13: #{cbam_forward.1} parent=11 // pred_check
          %p141 = pneg %p58
        $region14: #{cbam_forward.1} parent=11 // pred_check_branch
          %143 = sbr.rel (%p141) target = $region16
        $region15: #{cbam_forward.1} parent=11 // pred_region
          _
        $region16: #{cbam_forward.1} parent=11 // pred_fallthru
          _
        // Predicated region
        $region17: #{cbam_forward.1} parent=11 // pred_check
          %p144 = pneg %p79
        $region18: #{cbam_forward.1} parent=11 // pred_check_branch
          %146 = sbr.rel (%p144) target = $region20
        $region19: #{cbam_forward.1} parent=11 // pred_region
          _
        $region20: #{cbam_forward.1} parent=11 // pred_fallthru
          _
        // Predicated region
        $region21: #{cbam_forward.1} parent=11 // pred_check
          %p147 = pneg %p100
        $region22: #{cbam_forward.1} parent=11 // pred_check_branch
          %149 = sbr.rel (%p147) target = $region24
        $region23: #{cbam_forward.1} parent=11 // pred_region
          %s151 = ssub.s32 16, 16
          %152 = vsyncadd [#allocation5], %s151
          %s154 = sshll.u32 %s3, 4
          %s155 = int_to_ptr.vmem [resolvable:$true] %s154
          %157 = dma.vmem_to_smem %s155, 16, [#allocation4], [#allocation5]
        $region24: #{cbam_forward.1} parent=11 // pred_fallthru
          _
      $region12: #{cbam_forward.1} parent=5 // pred_fallthru
        _
      %p158 = scmp.lt.s32.totalorder %s11, 2
      // Predicated region
      $region25: #{cbam_forward.1} parent=5 // pred_check
        %p159 = pneg %p158
      $region26: #{cbam_forward.1} parent=5 // pred_check_branch
        %161 = sbr.rel (%p159) target = $region28
      $region27: #{cbam_forward.1} parent=5 // pred_region
        // Predicated region
        $region29: #{cbam_forward.1} parent=27 // pred_check
          %p162 = pneg %p31
        $region30: #{cbam_forward.1} parent=27 // pred_check_branch
          %164 = sbr.rel (%p162) target = $region32
        $region31: #{cbam_forward.1} parent=27 // pred_region
          %p165 = scmp.lt.s32.totalorder %s11, 1
          %s166 = scalar_select %p165, %s11, 1
          %s167 = smul.addr %s166, 8
          %s168 = smul.addr %s167, 8
          %s169 = scalar_lea.vmem %s0, %s168
        $region32: #{cbam_forward.1} parent=27 // pred_fallthru
          _
      $region28: #{cbam_forward.1} parent=5 // pred_fallthru
        _
      %p170 = scmp.le.s32.totalorder 1, %s11
      %p171 = scmp.lt.s32.totalorder %s11, 3
      %p172 = pnand %p170, %p171
      %p173 = pneg %p172
      // Predicated region
      $region33: #{cbam_forward.1} parent=5 // pred_check
        _
      $region34: #{cbam_forward.1} parent=5 // pred_check_branch
        %175 = sbr.rel (%p172) target = $region36
      $region35: #{cbam_forward.1} parent=5 // pred_region
        %s176 = ssub.s32 %s11, 1
        // Predicated region
        $region37: #{cbam_forward.1} parent=35 // pred_check
          %p177 = pneg %p100
        $region38: #{cbam_forward.1} parent=35 // pred_check_branch
          %179 = sbr.rel (%p177) target = $region40
        $region39: #{cbam_forward.1} parent=35 // pred_region
          %180 = dma.done [#allocation5], 16
        $region40: #{cbam_forward.1} parent=35 // pred_fallthru
          _
        %181 = sfence
        %p182 = scmp.lt.s32.totalorder %s16, 1
        %s183 = scalar_select %p182, %s16, 1
        %s184 = smul.addr %s183, 8
        %s185 = smul.addr %s184, 8
        %s186 = scalar_lea.vmem %s0, %s185
        %p187 = pneg %p37
        %p188 = pneg %p34
        %p189 = pneg %p58
        %p190 = pneg %p55
        %p191 = pneg %p79
        %p192 = pneg %p76
        %p193 = pneg %p100
        %p194 = pneg %p97
        %p195 = pneg %p126
        %p196 = pneg %p123
        %p197 = scmp.lt.s32.totalorder %s16, 1
        %s198 = scalar_select %p197, %s16, 1
        %s199 = smul.addr %s198, 8
        %s200 = smul.addr %s199, 8
        %s201 = scalar_lea.vmem %s4, %s200
        %p202 = scmp.lt.s32.totalorder %s16, 1
        %s203 = scalar_select %p202, %s16, 1
        %s204 = smul.addr %s203, 8
        %s205 = smul.addr %s204, 8
        %s206 = scalar_lea.vmem %s0, %s205
        %p207 = scmp.lt.s32.totalorder %s16, 1
        %s208 = scalar_select %p207, %s16, 1
        %s209 = smul.addr %s208, 8
        %s210 = smul.addr %s209, 8
        %s211 = scalar_lea.vmem %s4, %s210
        %v212 = vld [vmem:[%s206] sm:$0xff]
        %v213 = vld [vmem:[%s206 + $0x8] sm:$0xff]
        %v214 = vld [vmem:[%s206 + $0x10] sm:$0xff]
        %v215 = vld [vmem:[%s206 + $0x18] sm:$0xff]
        %v216 = vld [vmem:[%s206 + $0x20] sm:$0xff]
        %v217 = vld [vmem:[%s206 + $0x28] sm:$0xff]
        %v218 = vld [vmem:[%s206 + $0x30] sm:$0xff]
        %v219 = vld [vmem:[%s206 + $0x38] sm:$0xff]
        %v220 = vadd.f32 %v212, %v213
        %221 = vadd.xlane.f32.xlu0 %v220
        %v222 = vpop.xlane.xlu0 %221
        %v223 = vadd.f32 %v214, %v215
        %224 = vadd.xlane.f32.xlu0 %v223
        %v225 = vpop.xlane.xlu0 %224
        %v226 = vadd.f32 %v216, %v217
        %227 = vadd.xlane.f32.xlu0 %v226
        %v228 = vpop.xlane.xlu0 %227
        %v229 = vadd.f32 %v218, %v219
        %230 = vadd.xlane.f32.xlu0 %v229
        %v231 = vpop.xlane.xlu0 %230
        %v232 = vmul.f32 %v222, 0.00390625
        %v233 = vmul.f32 %v225, 0.00390625
        %v234 = vmul.f32 %v228, 0.00390625
        %v235 = vmul.f32 %v231, 0.00390625
        %v236 = vmax.f32 %v212, %v213
        %237 = vmax.xlane.f32.xlu0 %v236
        %v238 = vpop.xlane.xlu0 %237
        %v239 = vmax.f32 %v214, %v215
        %240 = vmax.xlane.f32.xlu0 %v239
        %v241 = vpop.xlane.xlu0 %240
        %v242 = vmax.f32 %v216, %v217
        %243 = vmax.xlane.f32.xlu0 %v242
        %v244 = vpop.xlane.xlu0 %243
        %v245 = vmax.f32 %v218, %v219
        %246 = vmax.xlane.f32.xlu0 %v245
        %v247 = vpop.xlane.xlu0 %246
        %vm248 = vcmask 7168
        %v249 = vsel %vm248, %v232, %v238
        %v250 = vsel %vm248, %v233, %v241
        %v251 = vsel %vm248, %v234, %v244
        %v252 = vsel %vm248, %v235, %v247
        %v253 = vld [vmem:[%s1] sm:$0x3]
        %v254 = vld [vmem:[%s2] sm:$0xff]
        %v255 = vld [vmem:[%s2 + $0x8] sm:$0xff]
        %v256 = vld [vmem:[%s2 + $0x10] sm:$0xff]
        %v257 = vld [vmem:[%s2 + $0x18] sm:$0xff]
        %259 = vset.pattern.permute.xlu0 32
        %260 = vperm.xlu0 %259, %v253
        %v261 = vpop.permute.xlu0 %260
        %vm263 = vcmask 261120
        %v264 = vsel %vm263, %v253, 0
        %266 = vmatprep.subr.mxu0 0.0
        %267 = vmatpush1.msra.mxu0 %v249
        %268 = vmatprep.subr.mxu0 0.0
        %269 = vmatpush1.msra.mxu0 %v250
        %270 = vmatprep.subr.mxu0 0.0
        %271 = vmatpush1.msra.mxu0 %v251
        %272 = vmatprep.subr.mxu0 0.0
        %273 = vmatpush1.msra.mxu0 %v252
        %274 = vmatprep.subr.mxu0 0.0
        %275 = vmatpush1.msra.mxu0 0.0
        %276 = vmatprep.subr.mxu0 0.0
        %277 = vmatpush1.msra.mxu0 0.0
        %278 = vmatprep.subr.mxu0 0.0
        %279 = vmatpush1.msra.mxu0 0.0
        %280 = vmatprep.subr.mxu0 0.0
        %281 = vmatpush1.msra.mxu0 0.0
        %282 = vmatprep.subr.mxu0 0.0
        %283 = vmatpush1.msra.mxu0 0.0
        %284 = vmatprep.subr.mxu0 0.0
        %285 = vmatpush1.msra.mxu0 0.0
        %286 = vmatprep.subr.mxu0 0.0
        %287 = vmatpush1.msra.mxu0 0.0
        %288 = vmatprep.subr.mxu0 0.0
        %289 = vmatpush1.msra.mxu0 0.0
        %290 = vmatprep.subr.mxu0 0.0
        %291 = vmatpush1.msra.mxu0 0.0
        %292 = vmatprep.subr.mxu0 0.0
        %293 = vmatpush1.msra.mxu0 0.0
        %294 = vmatprep.subr.mxu0 0.0
        %295 = vmatpush1.msra.mxu0 0.0
        %296 = vmatprep.subr.mxu0 0.0
        %297 = vmatpush1.msra.mxu0 0.0
        %298 = vmatprep.subr.mxu0 0.0
        %299 = vmatpush1.msra.mxu0 0.0
        %300 = vmatprep.subr.mxu0 0.0
        %301 = vmatpush1.msra.mxu0 0.0
        %302 = vmatprep.subr.mxu0 0.0
        %303 = vmatpush1.msra.mxu0 0.0
        %304 = vmatprep.subr.mxu0 0.0
        %305 = vmatpush1.msra.mxu0 0.0
        %306 = vmatprep.subr.mxu0 0.0
        %307 = vmatpush1.msra.mxu0 0.0
        %308 = vmatprep.subr.mxu0 0.0
        %309 = vmatpush1.msra.mxu0 0.0
        %310 = vmatprep.subr.mxu0 0.0
        %311 = vmatpush1.msra.mxu0 0.0
        %312 = vmatprep.subr.mxu0 0.0
        %313 = vmatpush1.msra.mxu0 0.0
        %314 = vmatprep.subr.mxu0 0.0
        %315 = vmatpush1.msra.mxu0 0.0
        %316 = vmatprep.subr.mxu0 0.0
        %317 = vmatpush1.msra.mxu0 0.0
        %318 = vmatprep.subr.mxu0 0.0
        %319 = vmatpush1.msra.mxu0 0.0
        %320 = vmatprep.subr.mxu0 0.0
        %321 = vmatpush1.msra.mxu0 0.0
        %322 = vmatprep.subr.mxu0 0.0
        %323 = vmatpush1.msra.mxu0 0.0
        %324 = vmatprep.subr.mxu0 0.0
        %325 = vmatpush1.msra.mxu0 0.0
        %326 = vmatprep.subr.mxu0 0.0
        %327 = vmatpush1.msra.mxu0 0.0
        %328 = vmatprep.subr.mxu0 0.0
        %329 = vmatpush1.msra.mxu0 0.0
        %330 = vmatprep.mubr.f32.mxu0 0.0
        %331 = vmatmul.mubr.f32.gmra.mrb[0].mxu0 %v264
        %v332 = vpop.f32.mrb[0].mxu0
        %v333 = vadd.f32 %v261, %v332
        %v334 = vpop.f32.mrb[0].mxu0
        %335 = vdwg.mxu0
        %v336 = vmax.f32 %v333, 0.0
        %vm337 = vcmask 15360
        %v339 = vsel %vm337, %v254, 0
        %v342 = vsel %vm337, %v255, 0
        %v345 = vsel %vm337, %v256, 0
        %v348 = vsel %vm337, %v257, 0
        %vm350 = vcmask 1041408
        %v352 = vsel %vm350, %v336, 0
        %354 = vmatprep.subr.mxu0 0.0
        %355 = vmatpush1.msra.mxu0 %v352
        %356 = vmatprep.subr.mxu0 0.0
        %357 = vmatpush1.msra.mxu0 0.0
        %358 = vmatprep.subr.mxu0 0.0
        %359 = vmatpush1.msra.mxu0 0.0
        %360 = vmatprep.subr.mxu0 0.0
        %361 = vmatpush1.msra.mxu0 0.0
        %362 = vmatprep.subr.mxu0 0.0
        %363 = vmatpush1.msra.mxu0 0.0
        %364 = vmatprep.subr.mxu0 0.0
        %365 = vmatpush1.msra.mxu0 0.0
        %366 = vmatprep.subr.mxu0 0.0
        %367 = vmatpush1.msra.mxu0 0.0
        %368 = vmatprep.subr.mxu0 0.0
        %369 = vmatpush1.msra.mxu0 0.0
        %370 = vmatprep.subr.mxu0 0.0
        %371 = vmatpush1.msra.mxu0 0.0
        %372 = vmatprep.subr.mxu0 0.0
        %373 = vmatpush1.msra.mxu0 0.0
        %374 = vmatprep.subr.mxu0 0.0
        %375 = vmatpush1.msra.mxu0 0.0
        %376 = vmatprep.subr.mxu0 0.0
        %377 = vmatpush1.msra.mxu0 0.0
        %378 = vmatprep.subr.mxu0 0.0
        %379 = vmatpush1.msra.mxu0 0.0
        %380 = vmatprep.subr.mxu0 0.0
        %381 = vmatpush1.msra.mxu0 0.0
        %382 = vmatprep.subr.mxu0 0.0
        %383 = vmatpush1.msra.mxu0 0.0
        %384 = vmatprep.subr.mxu0 0.0
        %385 = vmatpush1.msra.mxu0 0.0
        %386 = vmatprep.subr.mxu0 0.0
        %387 = vmatpush1.msra.mxu0 0.0
        %388 = vmatprep.subr.mxu0 0.0
        %389 = vmatpush1.msra.mxu0 0.0
        %390 = vmatprep.subr.mxu0 0.0
        %391 = vmatpush1.msra.mxu0 0.0
        %392 = vmatprep.subr.mxu0 0.0
        %393 = vmatpush1.msra.mxu0 0.0
        %394 = vmatprep.subr.mxu0 0.0
        %395 = vmatpush1.msra.mxu0 0.0
        %396 = vmatprep.subr.mxu0 0.0
        %397 = vmatpush1.msra.mxu0 0.0
        %398 = vmatprep.subr.mxu0 0.0
        %399 = vmatpush1.msra.mxu0 0.0
        %400 = vmatprep.subr.mxu0 0.0
        %401 = vmatpush1.msra.mxu0 0.0
        %402 = vmatprep.subr.mxu0 0.0
        %403 = vmatpush1.msra.mxu0 0.0
        %404 = vmatprep.subr.mxu0 0.0
        %405 = vmatpush1.msra.mxu0 0.0
        %406 = vmatprep.subr.mxu0 0.0
        %407 = vmatpush1.msra.mxu0 0.0
        %408 = vmatprep.subr.mxu0 0.0
        %409 = vmatpush1.msra.mxu0 0.0
        %410 = vmatprep.subr.mxu0 0.0
        %411 = vmatpush1.msra.mxu0 0.0
        %412 = vmatprep.subr.mxu0 0.0
        %413 = vmatpush1.msra.mxu0 0.0
        %414 = vmatprep.subr.mxu0 0.0
        %415 = vmatpush1.msra.mxu0 0.0
        %416 = vmatprep.subr.mxu0 0.0
        %417 = vmatpush1.msra.mxu0 0.0
        %418 = vmatprep.mubr.f32.mxu0 0.0
        %419 = vmatmul.mubr.f32.gmra.mrb[0].mxu0 %v339
        %v420 = vpop.f32.mrb[0].mxu0
        %v421 = vadd.f32 0.0, %v420
        %v422 = vpop.f32.mrb[0].mxu0
        %423 = vmatprep.mubr.f32.mxu0 0.0
        %424 = vmatmul.mubr.f32.gmra.mrb[0].mxu0 %v342
        %v425 = vpop.f32.mrb[0].mxu0
        %v426 = vadd.f32 0.0, %v425
        %v427 = vpop.f32.mrb[0].mxu0
        %428 = vmatprep.mubr.f32.mxu0 0.0
        %429 = vmatmul.mubr.f32.gmra.mrb[0].mxu0 %v345
        %v430 = vpop.f32.mrb[0].mxu0
        %v431 = vadd.f32 0.0, %v430
        %v432 = vpop.f32.mrb[0].mxu0
        %433 = vmatprep.mubr.f32.mxu0 0.0
        %434 = vmatmul.mubr.f32.gmra.mrb[0].mxu0 %v348
        %v435 = vpop.f32.mrb[0].mxu0
        %v436 = vadd.f32 0.0, %v435
        %v437 = vpop.f32.mrb[0].mxu0
        %438 = vdwg.mxu0
        %443 = vrot.lane.b32.xlu0 %v421, 127
        %v444 = vpop.permute.xlu0 %443
        %445 = vrot.lane.b32.xlu0 %v426, 127
        %v446 = vpop.permute.xlu0 %445
        %447 = vrot.lane.b32.xlu0 %v431, 127
        %v448 = vpop.permute.xlu0 %447
        %449 = vrot.lane.b32.xlu0 %v436, 127
        %v450 = vpop.permute.xlu0 %449
        %v455 = vadd.f32 %v421, %v444
        %v456 = vadd.f32 %v426, %v446
        %v457 = vadd.f32 %v431, %v448
        %v458 = vadd.f32 %v436, %v450
        %v459 = vmul.f32 %v254, 2.0
        %v460 = vmul.f32 %v255, 2.0
        %v461 = vmul.f32 %v256, 2.0
        %v462 = vmul.f32 %v257, 2.0
        %467 = vrot.lane.b32.xlu0 %v459, 126
        %v468 = vpop.permute.xlu0 %467
        %469 = vrot.lane.b32.xlu0 %v460, 126
        %v470 = vpop.permute.xlu0 %469
        %471 = vrot.lane.b32.xlu0 %v461, 126
        %v472 = vpop.permute.xlu0 %471
        %473 = vrot.lane.b32.xlu0 %v462, 126
        %v474 = vpop.permute.xlu0 %473
        %v479 = vadd.f32 %v455, %v468
        %v480 = vadd.f32 %v456, %v470
        %v481 = vadd.f32 %v457, %v472
        %v482 = vadd.f32 %v458, %v474
        %v483 = vxor.u32 %v479, 2147483648
        %v484 = vxor.u32 %v480, 2147483648
        %v485 = vxor.u32 %v481, 2147483648
        %v486 = vxor.u32 %v482, 2147483648
        %v487 = vmul.f32 %v483, 1.442695
        %v488 = vpow.pop %v487
        %v489 = vmul.f32 %v484, 1.442695
        %v490 = vpow.pop %v489
        %v491 = vmul.f32 %v485, 1.442695
        %v492 = vpow.pop %v491
        %v493 = vmul.f32 %v486, 1.442695
        %v494 = vpow.pop %v493
        %v495 = vadd.f32 %v488, 1.0
        %v496 = vadd.f32 %v490, 1.0
        %v497 = vadd.f32 %v492, 1.0
        %v498 = vadd.f32 %v494, 1.0
        %v499 = vrcp.pop %v495
        %v500 = vmul.f32 1.0, %v499
        %v501 = vrcp.pop %v496
        %v502 = vmul.f32 1.0, %v501
        %v503 = vrcp.pop %v497
        %v504 = vmul.f32 1.0, %v503
        %v505 = vrcp.pop %v498
        %v506 = vmul.f32 1.0, %v505
        %508 = vset.pattern.permute.xlu0 0
        %509 = vperm.xlu0 %508, %v500
        %v510 = vpop.permute.xlu0 %509
        %513 = vset.pattern.permute.xlu0 0
        %514 = vperm.xlu0 %513, %v502
        %v515 = vpop.permute.xlu0 %514
        %518 = vset.pattern.permute.xlu0 0
        %519 = vperm.xlu0 %518, %v504
        %v520 = vpop.permute.xlu0 %519
        %523 = vset.pattern.permute.xlu0 0
        %524 = vperm.xlu0 %523, %v506
        %v525 = vpop.permute.xlu0 %524
        %v527 = vmul.f32 %v212, %v510
        %v528 = vmul.f32 %v213, %v510
        %v529 = vmul.f32 %v214, %v515
        %v530 = vmul.f32 %v215, %v515
        %v531 = vmul.f32 %v216, %v520
        %v532 = vmul.f32 %v217, %v520
        %v533 = vmul.f32 %v218, %v525
        %v534 = vmul.f32 %v219, %v525
        %v535 = vmax.f32 %v527, %v531
        %v536 = vmax.f32 %v529, %v533
        %v537 = vmax.f32 %v535, %v536
        %v538 = vrot.slane %v537, 4
        %v539 = vmax.f32 %v537, %v538
        %v540 = vrot.slane %v539, 2
        %v541 = vmax.f32 %v539, %v540
        %v542 = vrot.slane %v541, 1
        %v543 = vmax.f32 %v541, %v542
        %v544 = vmax.f32 %v528, %v532
        %v545 = vmax.f32 %v530, %v534
        %v546 = vmax.f32 %v544, %v545
        %v547 = vrot.slane %v546, 4
        %v548 = vmax.f32 %v546, %v547
        %v549 = vrot.slane %v548, 2
        %v550 = vmax.f32 %v548, %v549
        %v551 = vrot.slane %v550, 1
        %v552 = vmax.f32 %v550, %v551
        %v553 = vadd.f32 %v527, %v529
        %v554 = vadd.f32 %v553, %v531
        %v555 = vadd.f32 %v554, %v533
        %v556 = vrot.slane %v555, 4
        %v557 = vadd.f32 %v555, %v556
        %v558 = vrot.slane %v557, 2
        %v559 = vadd.f32 %v557, %v558
        %v560 = vrot.slane %v559, 1
        %v561 = vadd.f32 %v559, %v560
        %v562 = vadd.f32 %v528, %v530
        %v563 = vadd.f32 %v562, %v532
        %v564 = vadd.f32 %v563, %v534
        %v565 = vrot.slane %v564, 4
        %v566 = vadd.f32 %v564, %v565
        %v567 = vrot.slane %v566, 2
        %v568 = vadd.f32 %v566, %v567
        %v569 = vrot.slane %v568, 1
        %v570 = vadd.f32 %v568, %v569
        %v571 = vmul.f32 %v561, 0.03125
        %v572 = vmul.f32 %v570, 0.03125
        %vm573 = vcmask 174080
        %574 = vst.msk [vmem:[#allocation2] sm:$0x7] %vm573, 0.0
        %575 = vst.msk [vmem:[#allocation2 + $0x13] sm:$0x7] %vm573, 0.0
        %vm576 = vcmask 23552
        %577 = vst.msk [vmem:[#allocation2] sm:$0xff] %vm576, 0.0
        %578 = vst.msk [vmem:[#allocation2 + $0x8] sm:$0xff] %vm576, 0.0
        %vm579 = vcmask 21504
        %580 = vst.msk [vmem:[#allocation2 + $0x10] sm:$0x3f] %vm579, 0.0
        %vm581 = vcmask 179352
        %582 = vst.msk [vmem:[#allocation2] sm:$0xff] %vm581, 0.0
        %583 = vst.msk [vmem:[#allocation2 + $0x8] sm:$0xff] %vm581, 0.0
        %vm584 = vcmask 177304
        %585 = vst.msk [vmem:[#allocation2 + $0x10] sm:$0x3f] %vm584, 0.0
        %s586 = scalar_lea.vmem [#allocation2], 24
        %587 = vst.msk [vmem:[%s586] sm:$0x7] %vm573, 0.0
        %588 = vst.msk [vmem:[%s586 + $0x13] sm:$0x7] %vm573, 0.0
        %589 = vst.msk [vmem:[%s586] sm:$0xff] %vm576, 0.0
        %590 = vst.msk [vmem:[%s586 + $0x8] sm:$0xff] %vm576, 0.0
        %591 = vst.msk [vmem:[%s586 + $0x10] sm:$0x3f] %vm579, 0.0
        %592 = vst.msk [vmem:[%s586] sm:$0xff] %vm581, 0.0
        %593 = vst.msk [vmem:[%s586 + $0x8] sm:$0xff] %vm581, 0.0
        %594 = vst.msk [vmem:[%s586 + $0x10] sm:$0x3f] %vm584, 0.0
        %596 = vrot.lane.b32.xlu0 %v543, 3
        %v597 = vpop.permute.xlu0 %596
        %vm599 = vcmask 147480
        %600 = vst.msk [vmem:[#allocation2 + $0x3] sm:$0x1] %vm599, %v597
        %602 = vrot.lane.b32.xlu0 %v571, 3
        %v603 = vpop.permute.xlu0 %602
        %605 = vst.msk [vmem:[%s586 + $0x3] sm:$0x1] %vm599, %v603
        %606 = vrot.lane.b32.xlu0 %v543, 115
        %v607 = vpop.permute.xlu0 %606
        %609 = vst.msk [vmem:[#allocation2 + $0x4] sm:$0x1] %vm599, %v607
        %610 = vrot.lane.b32.xlu0 %v571, 115
        %v611 = vpop.permute.xlu0 %610
        %613 = vst.msk [vmem:[%s586 + $0x4] sm:$0x1] %vm599, %v611
        %614 = vrot.lane.b32.xlu0 %v543, 99
        %v615 = vpop.permute.xlu0 %614
        %617 = vst.msk [vmem:[#allocation2 + $0x5] sm:$0x1] %vm599, %v615
        %618 = vrot.lane.b32.xlu0 %v571, 99
        %v619 = vpop.permute.xlu0 %618
        %621 = vst.msk [vmem:[%s586 + $0x5] sm:$0x1] %vm599, %v619
        %622 = vrot.lane.b32.xlu0 %v543, 83
        %v623 = vpop.permute.xlu0 %622
        %625 = vst.msk [vmem:[#allocation2 + $0x6] sm:$0x1] %vm599, %v623
        %626 = vrot.lane.b32.xlu0 %v571, 83
        %v627 = vpop.permute.xlu0 %626
        %629 = vst.msk [vmem:[%s586 + $0x6] sm:$0x1] %vm599, %v627
        %630 = vrot.lane.b32.xlu0 %v543, 67
        %v631 = vpop.permute.xlu0 %630
        %633 = vst.msk [vmem:[#allocation2 + $0x7] sm:$0x1] %vm599, %v631
        %634 = vrot.lane.b32.xlu0 %v571, 67
        %v635 = vpop.permute.xlu0 %634
        %637 = vst.msk [vmem:[%s586 + $0x7] sm:$0x1] %vm599, %v635
        %638 = vrot.lane.b32.xlu0 %v543, 51
        %v639 = vpop.permute.xlu0 %638
        %641 = vst.msk [vmem:[#allocation2 + $0x8] sm:$0x1] %vm599, %v639
        %642 = vrot.lane.b32.xlu0 %v571, 51
        %v643 = vpop.permute.xlu0 %642
        %645 = vst.msk [vmem:[%s586 + $0x8] sm:$0x1] %vm599, %v643
        %646 = vrot.lane.b32.xlu0 %v543, 35
        %v647 = vpop.permute.xlu0 %646
        %649 = vst.msk [vmem:[#allocation2 + $0x9] sm:$0x1] %vm599, %v647
        %650 = vrot.lane.b32.xlu0 %v571, 35
        %v651 = vpop.permute.xlu0 %650
        %653 = vst.msk [vmem:[%s586 + $0x9] sm:$0x1] %vm599, %v651
        %654 = vrot.lane.b32.xlu0 %v543, 19
        %v655 = vpop.permute.xlu0 %654
        %657 = vst.msk [vmem:[#allocation2 + $0xa] sm:$0x1] %vm599, %v655
        %658 = vrot.lane.b32.xlu0 %v571, 19
        %v659 = vpop.permute.xlu0 %658
        %661 = vst.msk [vmem:[%s586 + $0xa] sm:$0x1] %vm599, %v659
        %663 = vrot.lane.b32.xlu0 %v552, 3
        %v664 = vpop.permute.xlu0 %663
        %666 = vst.msk [vmem:[#allocation2 + $0xb] sm:$0x1] %vm599, %v664
        %668 = vrot.lane.b32.xlu0 %v572, 3
        %v669 = vpop.permute.xlu0 %668
        %671 = vst.msk [vmem:[%s586 + $0xb] sm:$0x1] %vm599, %v669
        %672 = vrot.lane.b32.xlu0 %v552, 115
        %v673 = vpop.permute.xlu0 %672
        %675 = vst.msk [vmem:[#allocation2 + $0xc] sm:$0x1] %vm599, %v673
        %676 = vrot.lane.b32.xlu0 %v572, 115
        %v677 = vpop.permute.xlu0 %676
        %679 = vst.msk [vmem:[%s586 + $0xc] sm:$0x1] %vm599, %v677
        %680 = vrot.lane.b32.xlu0 %v552, 99
        %v681 = vpop.permute.xlu0 %680
        %683 = vst.msk [vmem:[#allocation2 + $0xd] sm:$0x1] %vm599, %v681
        %684 = vrot.lane.b32.xlu0 %v572, 99
        %v685 = vpop.permute.xlu0 %684
        %687 = vst.msk [vmem:[%s586 + $0xd] sm:$0x1] %vm599, %v685
        %688 = vrot.lane.b32.xlu0 %v552, 83
        %v689 = vpop.permute.xlu0 %688
        %691 = vst.msk [vmem:[#allocation2 + $0xe] sm:$0x1] %vm599, %v689
        %692 = vrot.lane.b32.xlu0 %v572, 83
        %v693 = vpop.permute.xlu0 %692
        %695 = vst.msk [vmem:[%s586 + $0xe] sm:$0x1] %vm599, %v693
        %696 = vrot.lane.b32.xlu0 %v552, 67
        %v697 = vpop.permute.xlu0 %696
        %699 = vst.msk [vmem:[#allocation2 + $0xf] sm:$0x1] %vm599, %v697
        %700 = vrot.lane.b32.xlu0 %v572, 67
        %v701 = vpop.permute.xlu0 %700
        %703 = vst.msk [vmem:[%s586 + $0xf] sm:$0x1] %vm599, %v701
        %704 = vrot.lane.b32.xlu0 %v552, 51
        %v705 = vpop.permute.xlu0 %704
        %707 = vst.msk [vmem:[#allocation2 + $0x10] sm:$0x1] %vm599, %v705
        %708 = vrot.lane.b32.xlu0 %v572, 51
        %v709 = vpop.permute.xlu0 %708
        %711 = vst.msk [vmem:[%s586 + $0x10] sm:$0x1] %vm599, %v709
        %712 = vrot.lane.b32.xlu0 %v552, 35
        %v713 = vpop.permute.xlu0 %712
        %715 = vst.msk [vmem:[#allocation2 + $0x11] sm:$0x1] %vm599, %v713
        %716 = vrot.lane.b32.xlu0 %v572, 35
        %v717 = vpop.permute.xlu0 %716
        %719 = vst.msk [vmem:[%s586 + $0x11] sm:$0x1] %vm599, %v717
        %720 = vrot.lane.b32.xlu0 %v552, 19
        %v721 = vpop.permute.xlu0 %720
        %723 = vst.msk [vmem:[#allocation2 + $0x12] sm:$0x1] %vm599, %v721
        %724 = vrot.lane.b32.xlu0 %v572, 19
        %v725 = vpop.permute.xlu0 %724
        %727 = vst.msk [vmem:[%s586 + $0x12] sm:$0x1] %vm599, %v725
        %v728 = vld [vmem:[#allocation2] sm:$0xff]
        %v729 = vld [vmem:[#allocation2 + $0x8] sm:$0xff]
        %s730 = sld [smem:[#allocation4]]
        %v731 = vstv %s730
        %v732 = vmul.f32 %v728, %v731
        %v733 = vmul.f32 %v729, %v731
        %v734 = vadd.f32 %v732, 0.0
        %v735 = vadd.f32 %v733, 0.0
        %s736 = sld [smem:[#allocation4 + $0x1]]
        %v737 = vstv %s736
        %v738 = vmul.f32 %v728, %v737
        %v739 = vmul.f32 %v729, %v737
        %v740 = vadd.f32 %v738, 0.0
        %v741 = vadd.f32 %v739, 0.0
        %s742 = sld [smem:[#allocation4 + $0x2]]
        %v743 = vstv %s742
        %v744 = vmul.f32 %v728, %v743
        %v745 = vmul.f32 %v729, %v743
        %v746 = vadd.f32 %v744, 0.0
        %v747 = vadd.f32 %v745, 0.0
        %s748 = sld [smem:[#allocation4 + $0x3]]
        %v749 = vstv %s748
        %v750 = vmul.f32 %v728, %v749
        %v751 = vmul.f32 %v729, %v749
        %v752 = vadd.f32 %v750, 0.0
        %v753 = vadd.f32 %v751, 0.0
        %s754 = sld [smem:[#allocation4 + $0x4]]
        %v755 = vstv %s754
        %v756 = vmul.f32 %v728, %v755
        %v757 = vmul.f32 %v729, %v755
        %760 = vrot.lane.b32.xlu0 %v756, 124
        %v761 = vpop.permute.xlu0 %760
        %762 = vrot.lane.b32.xlu0 %v757, 124
        %v763 = vpop.permute.xlu0 %762
        %v766 = vadd.f32 %v734, %v761
        %v767 = vadd.f32 %v735, %v763
        %s768 = sld [smem:[#allocation4 + $0x5]]
        %v769 = vstv %s768
        %v770 = vmul.f32 %v728, %v769
        %v771 = vmul.f32 %v729, %v769
        %774 = vrot.lane.b32.xlu0 %v770, 124
        %v775 = vpop.permute.xlu0 %774
        %776 = vrot.lane.b32.xlu0 %v771, 124
        %v777 = vpop.permute.xlu0 %776
        %v780 = vadd.f32 %v740, %v775
        %v781 = vadd.f32 %v741, %v777
        %s782 = sld [smem:[#allocation4 + $0x6]]
        %v783 = vstv %s782
        %v784 = vmul.f32 %v728, %v783
        %v785 = vmul.f32 %v729, %v783
        %788 = vrot.lane.b32.xlu0 %v784, 124
        %v789 = vpop.permute.xlu0 %788
        %790 = vrot.lane.b32.xlu0 %v785, 124
        %v791 = vpop.permute.xlu0 %790
        %v794 = vadd.f32 %v746, %v789
        %v795 = vadd.f32 %v747, %v791
        %v796 = vld [vmem:[#allocation2 + $0x1] sm:$0xff]
        %v797 = vld [vmem:[#allocation2 + $0x9] sm:$0xff]
        %s798 = sld [smem:[#allocation4 + $0x7]]
        %v799 = vstv %s798
        %v800 = vmul.f32 %v796, %v799
        %v801 = vmul.f32 %v797, %v799
        %804 = vrot.lane.b32.xlu0 %v800, 3
        %v805 = vpop.permute.xlu0 %804
        %806 = vrot.lane.b32.xlu0 %v801, 3
        %v807 = vpop.permute.xlu0 %806
        %v810 = vadd.f32 %v752, %v805
        %v811 = vadd.f32 %v753, %v807
        %s812 = sld [smem:[#allocation4 + $0x8]]
        %v813 = vstv %s812
        %v814 = vmul.f32 %v796, %v813
        %v815 = vmul.f32 %v797, %v813
        %818 = vrot.lane.b32.xlu0 %v814, 127
        %v819 = vpop.permute.xlu0 %818
        %820 = vrot.lane.b32.xlu0 %v815, 127
        %v821 = vpop.permute.xlu0 %820
        %v824 = vadd.f32 %v766, %v819
        %v825 = vadd.f32 %v767, %v821
        %s826 = sld [smem:[#allocation4 + $0x9]]
        %v827 = vstv %s826
        %v828 = vmul.f32 %v796, %v827
        %v829 = vmul.f32 %v797, %v827
        %832 = vrot.lane.b32.xlu0 %v828, 127
        %v833 = vpop.permute.xlu0 %832
        %834 = vrot.lane.b32.xlu0 %v829, 127
        %v835 = vpop.permute.xlu0 %834
        %v838 = vadd.f32 %v780, %v833
        %v839 = vadd.f32 %v781, %v835
        %s840 = sld [smem:[#allocation4 + $0xa]]
        %v841 = vstv %s840
        %v842 = vmul.f32 %v796, %v841
        %v843 = vmul.f32 %v797, %v841
        %846 = vrot.lane.b32.xlu0 %v842, 127
        %v847 = vpop.permute.xlu0 %846
        %848 = vrot.lane.b32.xlu0 %v843, 127
        %v849 = vpop.permute.xlu0 %848
        %v852 = vadd.f32 %v794, %v847
        %v853 = vadd.f32 %v795, %v849
        %s854 = sld [smem:[#allocation4 + $0xb]]
        %v855 = vstv %s854
        %v856 = vmul.f32 %v796, %v855
        %v857 = vmul.f32 %v797, %v855
        %860 = vrot.lane.b32.xlu0 %v856, 127
        %v861 = vpop.permute.xlu0 %860
        %862 = vrot.lane.b32.xlu0 %v857, 127
        %v863 = vpop.permute.xlu0 %862
        %v866 = vadd.f32 %v810, %v861
        %v867 = vadd.f32 %v811, %v863
        %s868 = sld [smem:[#allocation4 + $0xc]]
        %v869 = vstv %s868
        %v870 = vmul.f32 %v796, %v869
        %v871 = vmul.f32 %v797, %v869
        %874 = vrot.lane.b32.xlu0 %v870, 123
        %v875 = vpop.permute.xlu0 %874
        %876 = vrot.lane.b32.xlu0 %v871, 123
        %v877 = vpop.permute.xlu0 %876
        %v880 = vadd.f32 %v824, %v875
        %v881 = vadd.f32 %v825, %v877
        %s882 = sld [smem:[#allocation4 + $0xd]]
        %v883 = vstv %s882
        %v884 = vmul.f32 %v796, %v883
        %v885 = vmul.f32 %v797, %v883
        %888 = vrot.lane.b32.xlu0 %v884, 123
        %v889 = vpop.permute.xlu0 %888
        %890 = vrot.lane.b32.xlu0 %v885, 123
        %v891 = vpop.permute.xlu0 %890
        %v894 = vadd.f32 %v838, %v889
        %v895 = vadd.f32 %v839, %v891
        %v896 = vld [vmem:[#allocation2 + $0x2] sm:$0xff]
        %v897 = vld [vmem:[#allocation2 + $0xa] sm:$0xff]
        %s898 = sld [smem:[#allocation4 + $0xe]]
        %v899 = vstv %s898
        %v900 = vmul.f32 %v896, %v899
        %v901 = vmul.f32 %v897, %v899
        %904 = vrot.lane.b32.xlu0 %v900, 2
        %v905 = vpop.permute.xlu0 %904
        %906 = vrot.lane.b32.xlu0 %v901, 2
        %v907 = vpop.permute.xlu0 %906
        %v910 = vadd.f32 %v852, %v905
        %v911 = vadd.f32 %v853, %v907
        %s912 = sld [smem:[#allocation4 + $0xf]]
        %v913 = vstv %s912
        %v914 = vmul.f32 %v896, %v913
        %v915 = vmul.f32 %v897, %v913
        %918 = vrot.lane.b32.xlu0 %v914, 2
        %v919 = vpop.permute.xlu0 %918
        %920 = vrot.lane.b32.xlu0 %v915, 2
        %v921 = vpop.permute.xlu0 %920
        %v924 = vadd.f32 %v866, %v919
        %v925 = vadd.f32 %v867, %v921
        %s926 = sld [smem:[#allocation4 + $0x10]]
        %v927 = vstv %s926
        %v928 = vmul.f32 %v896, %v927
        %v929 = vmul.f32 %v897, %v927
        %932 = vrot.lane.b32.xlu0 %v928, 126
        %v933 = vpop.permute.xlu0 %932
        %934 = vrot.lane.b32.xlu0 %v929, 126
        %v935 = vpop.permute.xlu0 %934
        %v938 = vadd.f32 %v880, %v933
        %v939 = vadd.f32 %v881, %v935
        %s940 = sld [smem:[#allocation4 + $0x11]]
        %v941 = vstv %s940
        %v942 = vmul.f32 %v896, %v941
        %v943 = vmul.f32 %v897, %v941
        %946 = vrot.lane.b32.xlu0 %v942, 126
        %v947 = vpop.permute.xlu0 %946
        %948 = vrot.lane.b32.xlu0 %v943, 126
        %v949 = vpop.permute.xlu0 %948
        %v952 = vadd.f32 %v894, %v947
        %v953 = vadd.f32 %v895, %v949
        %s954 = sld [smem:[#allocation4 + $0x12]]
        %v955 = vstv %s954
        %v956 = vmul.f32 %v896, %v955
        %v957 = vmul.f32 %v897, %v955
        %960 = vrot.lane.b32.xlu0 %v956, 126
        %v961 = vpop.permute.xlu0 %960
        %962 = vrot.lane.b32.xlu0 %v957, 126
        %v963 = vpop.permute.xlu0 %962
        %v966 = vadd.f32 %v910, %v961
        %v967 = vadd.f32 %v911, %v963
        %s968 = sld [smem:[#allocation4 + $0x13]]
        %v969 = vstv %s968
        %v970 = vmul.f32 %v896, %v969
        %v971 = vmul.f32 %v897, %v969
        %974 = vrot.lane.b32.xlu0 %v970, 126
        %v975 = vpop.permute.xlu0 %974
        %976 = vrot.lane.b32.xlu0 %v971, 126
        %v977 = vpop.permute.xlu0 %976
        %v980 = vadd.f32 %v924, %v975
        %v981 = vadd.f32 %v925, %v977
        %s982 = sld [smem:[#allocation4 + $0x14]]
        %v983 = vstv %s982
        %v984 = vmul.f32 %v896, %v983
        %v985 = vmul.f32 %v897, %v983
        %988 = vrot.lane.b32.xlu0 %v984, 122
        %v989 = vpop.permute.xlu0 %988
        %990 = vrot.lane.b32.xlu0 %v985, 122
        %v991 = vpop.permute.xlu0 %990
        %v994 = vadd.f32 %v938, %v989
        %v995 = vadd.f32 %v939, %v991
        %v996 = vld [vmem:[#allocation2 + $0x3] sm:$0xff]
        %v997 = vld [vmem:[#allocation2 + $0xb] sm:$0xff]
        %s998 = sld [smem:[#allocation4 + $0x15]]
        %v999 = vstv %s998
        %v1000 = vmul.f32 %v996, %v999
        %v1001 = vmul.f32 %v997, %v999
        %1004 = vrot.lane.b32.xlu0 %v1000, 1
        %v1005 = vpop.permute.xlu0 %1004
        %1006 = vrot.lane.b32.xlu0 %v1001, 1
        %v1007 = vpop.permute.xlu0 %1006
        %v1010 = vadd.f32 %v952, %v1005
        %v1011 = vadd.f32 %v953, %v1007
        %s1012 = sld [smem:[#allocation4 + $0x16]]
        %v1013 = vstv %s1012
        %v1014 = vmul.f32 %v996, %v1013
        %v1015 = vmul.f32 %v997, %v1013
        %1018 = vrot.lane.b32.xlu0 %v1014, 1
        %v1019 = vpop.permute.xlu0 %1018
        %1020 = vrot.lane.b32.xlu0 %v1015, 1
        %v1021 = vpop.permute.xlu0 %1020
        %v1024 = vadd.f32 %v966, %v1019
        %v1025 = vadd.f32 %v967, %v1021
        %s1026 = sld [smem:[#allocation4 + $0x17]]
        %v1027 = vstv %s1026
        %v1028 = vmul.f32 %v996, %v1027
        %v1029 = vmul.f32 %v997, %v1027
        %1032 = vrot.lane.b32.xlu0 %v1028, 1
        %v1033 = vpop.permute.xlu0 %1032
        %1034 = vrot.lane.b32.xlu0 %v1029, 1
        %v1035 = vpop.permute.xlu0 %1034
        %v1038 = vadd.f32 %v980, %v1033
        %v1039 = vadd.f32 %v981, %v1035
        %s1040 = sld [smem:[#allocation4 + $0x18]]
        %v1041 = vstv %s1040
        %v1042 = vmul.f32 %v996, %v1041
        %v1043 = vmul.f32 %v997, %v1041
        %1046 = vrot.lane.b32.xlu0 %v1042, 125
        %v1047 = vpop.permute.xlu0 %1046
        %1048 = vrot.lane.b32.xlu0 %v1043, 125
        %v1049 = vpop.permute.xlu0 %1048
        %v1052 = vadd.f32 %v994, %v1047
        %v1053 = vadd.f32 %v995, %v1049
        %s1054 = sld [smem:[#allocation4 + $0x19]]
        %v1055 = vstv %s1054
        %v1056 = vmul.f32 %v996, %v1055
        %v1057 = vmul.f32 %v997, %v1055
        %1060 = vrot.lane.b32.xlu0 %v1056, 125
        %v1061 = vpop.permute.xlu0 %1060
        %1062 = vrot.lane.b32.xlu0 %v1057, 125
        %v1063 = vpop.permute.xlu0 %1062
        %v1066 = vadd.f32 %v1010, %v1061
        %v1067 = vadd.f32 %v1011, %v1063
        %s1068 = sld [smem:[#allocation4 + $0x1a]]
        %v1069 = vstv %s1068
        %v1070 = vmul.f32 %v996, %v1069
        %v1071 = vmul.f32 %v997, %v1069
        %1074 = vrot.lane.b32.xlu0 %v1070, 125
        %v1075 = vpop.permute.xlu0 %1074
        %1076 = vrot.lane.b32.xlu0 %v1071, 125
        %v1077 = vpop.permute.xlu0 %1076
        %v1080 = vadd.f32 %v1024, %v1075
        %v1081 = vadd.f32 %v1025, %v1077
        %s1082 = sld [smem:[#allocation4 + $0x1b]]
        %v1083 = vstv %s1082
        %v1084 = vmul.f32 %v996, %v1083
        %v1085 = vmul.f32 %v997, %v1083
        %1088 = vrot.lane.b32.xlu0 %v1084, 125
        %v1089 = vpop.permute.xlu0 %1088
        %1090 = vrot.lane.b32.xlu0 %v1085, 125
        %v1091 = vpop.permute.xlu0 %1090
        %v1094 = vadd.f32 %v1038, %v1089
        %v1095 = vadd.f32 %v1039, %v1091
        %v1096 = vld [vmem:[#allocation2 + $0x4] sm:$0xff]
        %v1097 = vld [vmem:[#allocation2 + $0xc] sm:$0xff]
        %s1098 = sld [smem:[#allocation4 + $0x1c]]
        %v1099 = vstv %s1098
        %v1100 = vmul.f32 %v1096, %v1099
        %v1101 = vmul.f32 %v1097, %v1099
        %v1102 = vadd.f32 %v1052, %v1100
        %v1103 = vadd.f32 %v1053, %v1101
        %s1104 = sld [smem:[#allocation4 + $0x1d]]
        %v1105 = vstv %s1104
        %v1106 = vmul.f32 %v1096, %v1105
        %v1107 = vmul.f32 %v1097, %v1105
        %v1108 = vadd.f32 %v1066, %v1106
        %v1109 = vadd.f32 %v1067, %v1107
        %s1110 = sld [smem:[#allocation4 + $0x1e]]
        %v1111 = vstv %s1110
        %v1112 = vmul.f32 %v1096, %v1111
        %v1113 = vmul.f32 %v1097, %v1111
        %v1114 = vadd.f32 %v1080, %v1112
        %v1115 = vadd.f32 %v1081, %v1113
        %s1116 = sld [smem:[#allocation4 + $0x1f]]
        %v1117 = vstv %s1116
        %v1118 = vmul.f32 %v1096, %v1117
        %v1119 = vmul.f32 %v1097, %v1117
        %v1120 = vadd.f32 %v1094, %v1118
        %v1121 = vadd.f32 %v1095, %v1119
        %s1122 = sld [smem:[#allocation4 + $0x20]]
        %v1123 = vstv %s1122
        %v1124 = vmul.f32 %v1096, %v1123
        %v1125 = vmul.f32 %v1097, %v1123
        %1128 = vrot.lane.b32.xlu0 %v1124, 124
        %v1129 = vpop.permute.xlu0 %1128
        %1130 = vrot.lane.b32.xlu0 %v1125, 124
        %v1131 = vpop.permute.xlu0 %1130
        %v1134 = vadd.f32 %v1102, %v1129
        %v1135 = vadd.f32 %v1103, %v1131
        %s1136 = sld [smem:[#allocation4 + $0x21]]
        %v1137 = vstv %s1136
        %v1138 = vmul.f32 %v1096, %v1137
        %v1139 = vmul.f32 %v1097, %v1137
        %1142 = vrot.lane.b32.xlu0 %v1138, 124
        %v1143 = vpop.permute.xlu0 %1142
        %1144 = vrot.lane.b32.xlu0 %v1139, 124
        %v1145 = vpop.permute.xlu0 %1144
        %v1148 = vadd.f32 %v1108, %v1143
        %v1149 = vadd.f32 %v1109, %v1145
        %s1150 = sld [smem:[#allocation4 + $0x22]]
        %v1151 = vstv %s1150
        %v1152 = vmul.f32 %v1096, %v1151
        %v1153 = vmul.f32 %v1097, %v1151
        %1156 = vrot.lane.b32.xlu0 %v1152, 124
        %v1157 = vpop.permute.xlu0 %1156
        %1158 = vrot.lane.b32.xlu0 %v1153, 124
        %v1159 = vpop.permute.xlu0 %1158
        %v1162 = vadd.f32 %v1114, %v1157
        %v1163 = vadd.f32 %v1115, %v1159
        %v1164 = vld [vmem:[#allocation2 + $0x5] sm:$0xff]
        %v1165 = vld [vmem:[#allocation2 + $0xd] sm:$0xff]
        %s1166 = sld [smem:[#allocation4 + $0x23]]
        %v1167 = vstv %s1166
        %v1168 = vmul.f32 %v1164, %v1167
        %v1169 = vmul.f32 %v1165, %v1167
        %1172 = vrot.lane.b32.xlu0 %v1168, 3
        %v1173 = vpop.permute.xlu0 %1172
        %1174 = vrot.lane.b32.xlu0 %v1169, 3
        %v1175 = vpop.permute.xlu0 %1174
        %v1178 = vadd.f32 %v1120, %v1173
        %v1179 = vadd.f32 %v1121, %v1175
        %s1180 = sld [smem:[#allocation4 + $0x24]]
        %v1181 = vstv %s1180
        %v1182 = vmul.f32 %v1164, %v1181
        %v1183 = vmul.f32 %v1165, %v1181
        %1186 = vrot.lane.b32.xlu0 %v1182, 127
        %v1187 = vpop.permute.xlu0 %1186
        %1188 = vrot.lane.b32.xlu0 %v1183, 127
        %v1189 = vpop.permute.xlu0 %1188
        %v1192 = vadd.f32 %v1134, %v1187
        %v1193 = vadd.f32 %v1135, %v1189
        %s1194 = sld [smem:[#allocation4 + $0x25]]
        %v1195 = vstv %s1194
        %v1196 = vmul.f32 %v1164, %v1195
        %v1197 = vmul.f32 %v1165, %v1195
        %1200 = vrot.lane.b32.xlu0 %v1196, 127
        %v1201 = vpop.permute.xlu0 %1200
        %1202 = vrot.lane.b32.xlu0 %v1197, 127
        %v1203 = vpop.permute.xlu0 %1202
        %v1206 = vadd.f32 %v1148, %v1201
        %v1207 = vadd.f32 %v1149, %v1203
        %s1208 = sld [smem:[#allocation4 + $0x26]]
        %v1209 = vstv %s1208
        %v1210 = vmul.f32 %v1164, %v1209
        %v1211 = vmul.f32 %v1165, %v1209
        %1214 = vrot.lane.b32.xlu0 %v1210, 127
        %v1215 = vpop.permute.xlu0 %1214
        %1216 = vrot.lane.b32.xlu0 %v1211, 127
        %v1217 = vpop.permute.xlu0 %1216
        %v1220 = vadd.f32 %v1162, %v1215
        %v1221 = vadd.f32 %v1163, %v1217
        %s1222 = sld [smem:[#allocation4 + $0x27]]
        %v1223 = vstv %s1222
        %v1224 = vmul.f32 %v1164, %v1223
        %v1225 = vmul.f32 %v1165, %v1223
        %1228 = vrot.lane.b32.xlu0 %v1224, 127
        %v1229 = vpop.permute.xlu0 %1228
        %1230 = vrot.lane.b32.xlu0 %v1225, 127
        %v1231 = vpop.permute.xlu0 %1230
        %v1234 = vadd.f32 %v1178, %v1229
        %v1235 = vadd.f32 %v1179, %v1231
        %s1236 = sld [smem:[#allocation4 + $0x28]]
        %v1237 = vstv %s1236
        %v1238 = vmul.f32 %v1164, %v1237
        %v1239 = vmul.f32 %v1165, %v1237
        %1242 = vrot.lane.b32.xlu0 %v1238, 123
        %v1243 = vpop.permute.xlu0 %1242
        %1244 = vrot.lane.b32.xlu0 %v1239, 123
        %v1245 = vpop.permute.xlu0 %1244
        %v1248 = vadd.f32 %v1192, %v1243
        %v1249 = vadd.f32 %v1193, %v1245
        %s1250 = sld [smem:[#allocation4 + $0x29]]
        %v1251 = vstv %s1250
        %v1252 = vmul.f32 %v1164, %v1251
        %v1253 = vmul.f32 %v1165, %v1251
        %1256 = vrot.lane.b32.xlu0 %v1252, 123
        %v1257 = vpop.permute.xlu0 %1256
        %1258 = vrot.lane.b32.xlu0 %v1253, 123
        %v1259 = vpop.permute.xlu0 %1258
        %v1262 = vadd.f32 %v1206, %v1257
        %v1263 = vadd.f32 %v1207, %v1259
        %v1264 = vld [vmem:[#allocation2 + $0x6] sm:$0xff]
        %v1265 = vld [vmem:[#allocation2 + $0xe] sm:$0xff]
        %s1266 = sld [smem:[#allocation4 + $0x2a]]
        %v1267 = vstv %s1266
        %v1268 = vmul.f32 %v1264, %v1267
        %v1269 = vmul.f32 %v1265, %v1267
        %1272 = vrot.lane.b32.xlu0 %v1268, 2
        %v1273 = vpop.permute.xlu0 %1272
        %1274 = vrot.lane.b32.xlu0 %v1269, 2
        %v1275 = vpop.permute.xlu0 %1274
        %v1278 = vadd.f32 %v1220, %v1273
        %v1279 = vadd.f32 %v1221, %v1275
        %s1280 = sld [smem:[#allocation4 + $0x2b]]
        %v1281 = vstv %s1280
        %v1282 = vmul.f32 %v1264, %v1281
        %v1283 = vmul.f32 %v1265, %v1281
        %1286 = vrot.lane.b32.xlu0 %v1282, 2
        %v1287 = vpop.permute.xlu0 %1286
        %1288 = vrot.lane.b32.xlu0 %v1283, 2
        %v1289 = vpop.permute.xlu0 %1288
        %v1292 = vadd.f32 %v1234, %v1287
        %v1293 = vadd.f32 %v1235, %v1289
        %s1294 = sld [smem:[#allocation4 + $0x2c]]
        %v1295 = vstv %s1294
        %v1296 = vmul.f32 %v1264, %v1295
        %v1297 = vmul.f32 %v1265, %v1295
        %1300 = vrot.lane.b32.xlu0 %v1296, 126
        %v1301 = vpop.permute.xlu0 %1300
        %1302 = vrot.lane.b32.xlu0 %v1297, 126
        %v1303 = vpop.permute.xlu0 %1302
        %v1306 = vadd.f32 %v1248, %v1301
        %v1307 = vadd.f32 %v1249, %v1303
        %s1308 = sld [smem:[#allocation4 + $0x2d]]
        %v1309 = vstv %s1308
        %v1310 = vmul.f32 %v1264, %v1309
        %v1311 = vmul.f32 %v1265, %v1309
        %1314 = vrot.lane.b32.xlu0 %v1310, 126
        %v1315 = vpop.permute.xlu0 %1314
        %1316 = vrot.lane.b32.xlu0 %v1311, 126
        %v1317 = vpop.permute.xlu0 %1316
        %v1320 = vadd.f32 %v1262, %v1315
        %v1321 = vadd.f32 %v1263, %v1317
        %s1322 = sld [smem:[#allocation4 + $0x2e]]
        %v1323 = vstv %s1322
        %v1324 = vmul.f32 %v1264, %v1323
        %v1325 = vmul.f32 %v1265, %v1323
        %1328 = vrot.lane.b32.xlu0 %v1324, 126
        %v1329 = vpop.permute.xlu0 %1328
        %1330 = vrot.lane.b32.xlu0 %v1325, 126
        %v1331 = vpop.permute.xlu0 %1330
        %v1334 = vadd.f32 %v1278, %v1329
        %v1335 = vadd.f32 %v1279, %v1331
        %s1336 = sld [smem:[#allocation4 + $0x2f]]
        %v1337 = vstv %s1336
        %v1338 = vmul.f32 %v1264, %v1337
        %v1339 = vmul.f32 %v1265, %v1337
        %1342 = vrot.lane.b32.xlu0 %v1338, 126
        %v1343 = vpop.permute.xlu0 %1342
        %1344 = vrot.lane.b32.xlu0 %v1339, 126
        %v1345 = vpop.permute.xlu0 %1344
        %v1348 = vadd.f32 %v1292, %v1343
        %v1349 = vadd.f32 %v1293, %v1345
        %s1350 = sld [smem:[#allocation4 + $0x30]]
        %v1351 = vstv %s1350
        %v1352 = vmul.f32 %v1264, %v1351
        %v1353 = vmul.f32 %v1265, %v1351
        %1356 = vrot.lane.b32.xlu0 %v1352, 122
        %v1357 = vpop.permute.xlu0 %1356
        %1358 = vrot.lane.b32.xlu0 %v1353, 122
        %v1359 = vpop.permute.xlu0 %1358
        %v1362 = vadd.f32 %v1306, %v1357
        %v1363 = vadd.f32 %v1307, %v1359
        %v1364 = vld [vmem:[%s586] sm:$0xff]
        %v1365 = vld [vmem:[%s586 + $0x8] sm:$0xff]
        %s1366 = sld [smem:[#allocation4 + $0x31]]
        %v1367 = vstv %s1366
        %v1368 = vmul.f32 %v1364, %v1367
        %v1369 = vmul.f32 %v1365, %v1367
        %1372 = vrot.lane.b32.xlu0 %v1368, 1
        %v1373 = vpop.permute.xlu0 %1372
        %1374 = vrot.lane.b32.xlu0 %v1369, 1
        %v1375 = vpop.permute.xlu0 %1374
        %v1378 = vadd.f32 %v1320, %v1373
        %v1379 = vadd.f32 %v1321, %v1375
        %s1380 = sld [smem:[#allocation4 + $0x32]]
        %v1381 = vstv %s1380
        %v1382 = vmul.f32 %v1364, %v1381
        %v1383 = vmul.f32 %v1365, %v1381
        %1386 = vrot.lane.b32.xlu0 %v1382, 1
        %v1387 = vpop.permute.xlu0 %1386
        %1388 = vrot.lane.b32.xlu0 %v1383, 1
        %v1389 = vpop.permute.xlu0 %1388
        %v1392 = vadd.f32 %v1334, %v1387
        %v1393 = vadd.f32 %v1335, %v1389
        %s1394 = sld [smem:[#allocation4 + $0x33]]
        %v1395 = vstv %s1394
        %v1396 = vmul.f32 %v1364, %v1395
        %v1397 = vmul.f32 %v1365, %v1395
        %1400 = vrot.lane.b32.xlu0 %v1396, 1
        %v1401 = vpop.permute.xlu0 %1400
        %1402 = vrot.lane.b32.xlu0 %v1397, 1
        %v1403 = vpop.permute.xlu0 %1402
        %v1406 = vadd.f32 %v1348, %v1401
        %v1407 = vadd.f32 %v1349, %v1403
        %s1408 = sld [smem:[#allocation4 + $0x34]]
        %v1409 = vstv %s1408
        %v1410 = vmul.f32 %v1364, %v1409
        %v1411 = vmul.f32 %v1365, %v1409
        %1414 = vrot.lane.b32.xlu0 %v1410, 125
        %v1415 = vpop.permute.xlu0 %1414
        %1416 = vrot.lane.b32.xlu0 %v1411, 125
        %v1417 = vpop.permute.xlu0 %1416
        %v1420 = vadd.f32 %v1362, %v1415
        %v1421 = vadd.f32 %v1363, %v1417
        %s1422 = sld [smem:[#allocation4 + $0x35]]
        %v1423 = vstv %s1422
        %v1424 = vmul.f32 %v1364, %v1423
        %v1425 = vmul.f32 %v1365, %v1423
        %1428 = vrot.lane.b32.xlu0 %v1424, 125
        %v1429 = vpop.permute.xlu0 %1428
        %1430 = vrot.lane.b32.xlu0 %v1425, 125
        %v1431 = vpop.permute.xlu0 %1430
        %v1434 = vadd.f32 %v1378, %v1429
        %v1435 = vadd.f32 %v1379, %v1431
        %s1436 = sld [smem:[#allocation4 + $0x36]]
        %v1437 = vstv %s1436
        %v1438 = vmul.f32 %v1364, %v1437
        %v1439 = vmul.f32 %v1365, %v1437
        %1442 = vrot.lane.b32.xlu0 %v1438, 125
        %v1443 = vpop.permute.xlu0 %1442
        %1444 = vrot.lane.b32.xlu0 %v1439, 125
        %v1445 = vpop.permute.xlu0 %1444
        %v1448 = vadd.f32 %v1392, %v1443
        %v1449 = vadd.f32 %v1393, %v1445
        %s1450 = sld [smem:[#allocation4 + $0x37]]
        %v1451 = vstv %s1450
        %v1452 = vmul.f32 %v1364, %v1451
        %v1453 = vmul.f32 %v1365, %v1451
        %1456 = vrot.lane.b32.xlu0 %v1452, 125
        %v1457 = vpop.permute.xlu0 %1456
        %1458 = vrot.lane.b32.xlu0 %v1453, 125
        %v1459 = vpop.permute.xlu0 %1458
        %v1462 = vadd.f32 %v1406, %v1457
        %v1463 = vadd.f32 %v1407, %v1459
        %v1464 = vld [vmem:[%s586 + $0x1] sm:$0xff]
        %v1465 = vld [vmem:[%s586 + $0x9] sm:$0xff]
        %s1466 = sld [smem:[#allocation4 + $0x38]]
        %v1467 = vstv %s1466
        %v1468 = vmul.f32 %v1464, %v1467
        %v1469 = vmul.f32 %v1465, %v1467
        %v1470 = vadd.f32 %v1420, %v1468
        %v1471 = vadd.f32 %v1421, %v1469
        %s1472 = sld [smem:[#allocation4 + $0x39]]
        %v1473 = vstv %s1472
        %v1474 = vmul.f32 %v1464, %v1473
        %v1475 = vmul.f32 %v1465, %v1473
        %v1476 = vadd.f32 %v1434, %v1474
        %v1477 = vadd.f32 %v1435, %v1475
        %s1478 = sld [smem:[#allocation4 + $0x3a]]
        %v1479 = vstv %s1478
        %v1480 = vmul.f32 %v1464, %v1479
        %v1481 = vmul.f32 %v1465, %v1479
        %v1482 = vadd.f32 %v1448, %v1480
        %v1483 = vadd.f32 %v1449, %v1481
        %s1484 = sld [smem:[#allocation4 + $0x3b]]
        %v1485 = vstv %s1484
        %v1486 = vmul.f32 %v1464, %v1485
        %v1487 = vmul.f32 %v1465, %v1485
        %v1488 = vadd.f32 %v1462, %v1486
        %v1489 = vadd.f32 %v1463, %v1487
        %s1490 = sld [smem:[#allocation4 + $0x3c]]
        %v1491 = vstv %s1490
        %v1492 = vmul.f32 %v1464, %v1491
        %v1493 = vmul.f32 %v1465, %v1491
        %1496 = vrot.lane.b32.xlu0 %v1492, 124
        %v1497 = vpop.permute.xlu0 %1496
        %1498 = vrot.lane.b32.xlu0 %v1493, 124
        %v1499 = vpop.permute.xlu0 %1498
        %v1502 = vadd.f32 %v1470, %v1497
        %v1503 = vadd.f32 %v1471, %v1499
        %s1504 = sld [smem:[#allocation4 + $0x3d]]
        %v1505 = vstv %s1504
        %v1506 = vmul.f32 %v1464, %v1505
        %v1507 = vmul.f32 %v1465, %v1505
        %1510 = vrot.lane.b32.xlu0 %v1506, 124
        %v1511 = vpop.permute.xlu0 %1510
        %1512 = vrot.lane.b32.xlu0 %v1507, 124
        %v1513 = vpop.permute.xlu0 %1512
        %v1516 = vadd.f32 %v1476, %v1511
        %v1517 = vadd.f32 %v1477, %v1513
        %s1518 = sld [smem:[#allocation4 + $0x3e]]
        %v1519 = vstv %s1518
        %v1520 = vmul.f32 %v1464, %v1519
        %v1521 = vmul.f32 %v1465, %v1519
        %1524 = vrot.lane.b32.xlu0 %v1520, 124
        %v1525 = vpop.permute.xlu0 %1524
        %1526 = vrot.lane.b32.xlu0 %v1521, 124
        %v1527 = vpop.permute.xlu0 %1526
        %v1530 = vadd.f32 %v1482, %v1525
        %v1531 = vadd.f32 %v1483, %v1527
        %v1532 = vld [vmem:[%s586 + $0x2] sm:$0xff]
        %v1533 = vld [vmem:[%s586 + $0xa] sm:$0xff]
        %s1534 = sld [smem:[#allocation4 + $0x3f]]
        %v1535 = vstv %s1534
        %v1536 = vmul.f32 %v1532, %v1535
        %v1537 = vmul.f32 %v1533, %v1535
        %1540 = vrot.lane.b32.xlu0 %v1536, 3
        %v1541 = vpop.permute.xlu0 %1540
        %1542 = vrot.lane.b32.xlu0 %v1537, 3
        %v1543 = vpop.permute.xlu0 %1542
        %v1546 = vadd.f32 %v1488, %v1541
        %v1547 = vadd.f32 %v1489, %v1543
        %s1548 = sld [smem:[#allocation4 + $0x40]]
        %v1549 = vstv %s1548
        %v1550 = vmul.f32 %v1532, %v1549
        %v1551 = vmul.f32 %v1533, %v1549
        %1554 = vrot.lane.b32.xlu0 %v1550, 127
        %v1555 = vpop.permute.xlu0 %1554
        %1556 = vrot.lane.b32.xlu0 %v1551, 127
        %v1557 = vpop.permute.xlu0 %1556
        %v1560 = vadd.f32 %v1502, %v1555
        %v1561 = vadd.f32 %v1503, %v1557
        %s1562 = sld [smem:[#allocation4 + $0x41]]
        %v1563 = vstv %s1562
        %v1564 = vmul.f32 %v1532, %v1563
        %v1565 = vmul.f32 %v1533, %v1563
        %1568 = vrot.lane.b32.xlu0 %v1564, 127
        %v1569 = vpop.permute.xlu0 %1568
        %1570 = vrot.lane.b32.xlu0 %v1565, 127
        %v1571 = vpop.permute.xlu0 %1570
        %v1574 = vadd.f32 %v1516, %v1569
        %v1575 = vadd.f32 %v1517, %v1571
        %s1576 = sld [smem:[#allocation4 + $0x42]]
        %v1577 = vstv %s1576
        %v1578 = vmul.f32 %v1532, %v1577
        %v1579 = vmul.f32 %v1533, %v1577
        %1582 = vrot.lane.b32.xlu0 %v1578, 127
        %v1583 = vpop.permute.xlu0 %1582
        %1584 = vrot.lane.b32.xlu0 %v1579, 127
        %v1585 = vpop.permute.xlu0 %1584
        %v1588 = vadd.f32 %v1530, %v1583
        %v1589 = vadd.f32 %v1531, %v1585
        %s1590 = sld [smem:[#allocation4 + $0x43]]
        %v1591 = vstv %s1590
        %v1592 = vmul.f32 %v1532, %v1591
        %v1593 = vmul.f32 %v1533, %v1591
        %1596 = vrot.lane.b32.xlu0 %v1592, 127
        %v1597 = vpop.permute.xlu0 %1596
        %1598 = vrot.lane.b32.xlu0 %v1593, 127
        %v1599 = vpop.permute.xlu0 %1598
        %v1602 = vadd.f32 %v1546, %v1597
        %v1603 = vadd.f32 %v1547, %v1599
        %s1604 = sld [smem:[#allocation4 + $0x44]]
        %v1605 = vstv %s1604
        %v1606 = vmul.f32 %v1532, %v1605
        %v1607 = vmul.f32 %v1533, %v1605
        %1610 = vrot.lane.b32.xlu0 %v1606, 123
        %v1611 = vpop.permute.xlu0 %1610
        %1612 = vrot.lane.b32.xlu0 %v1607, 123
        %v1613 = vpop.permute.xlu0 %1612
        %v1616 = vadd.f32 %v1560, %v1611
        %v1617 = vadd.f32 %v1561, %v1613
        %s1618 = sld [smem:[#allocation4 + $0x45]]
        %v1619 = vstv %s1618
        %v1620 = vmul.f32 %v1532, %v1619
        %v1621 = vmul.f32 %v1533, %v1619
        %1624 = vrot.lane.b32.xlu0 %v1620, 123
        %v1625 = vpop.permute.xlu0 %1624
        %1626 = vrot.lane.b32.xlu0 %v1621, 123
        %v1627 = vpop.permute.xlu0 %1626
        %v1630 = vadd.f32 %v1574, %v1625
        %v1631 = vadd.f32 %v1575, %v1627
        %v1632 = vld [vmem:[%s586 + $0x3] sm:$0xff]
        %v1633 = vld [vmem:[%s586 + $0xb] sm:$0xff]
        %s1634 = sld [smem:[#allocation4 + $0x46]]
        %v1635 = vstv %s1634
        %v1636 = vmul.f32 %v1632, %v1635
        %v1637 = vmul.f32 %v1633, %v1635
        %1640 = vrot.lane.b32.xlu0 %v1636, 2
        %v1641 = vpop.permute.xlu0 %1640
        %1642 = vrot.lane.b32.xlu0 %v1637, 2
        %v1643 = vpop.permute.xlu0 %1642
        %v1646 = vadd.f32 %v1588, %v1641
        %v1647 = vadd.f32 %v1589, %v1643
        %s1648 = sld [smem:[#allocation4 + $0x47]]
        %v1649 = vstv %s1648
        %v1650 = vmul.f32 %v1632, %v1649
        %v1651 = vmul.f32 %v1633, %v1649
        %1654 = vrot.lane.b32.xlu0 %v1650, 2
        %v1655 = vpop.permute.xlu0 %1654
        %1656 = vrot.lane.b32.xlu0 %v1651, 2
        %v1657 = vpop.permute.xlu0 %1656
        %v1660 = vadd.f32 %v1602, %v1655
        %v1661 = vadd.f32 %v1603, %v1657
        %s1662 = sld [smem:[#allocation4 + $0x48]]
        %v1663 = vstv %s1662
        %v1664 = vmul.f32 %v1632, %v1663
        %v1665 = vmul.f32 %v1633, %v1663
        %1668 = vrot.lane.b32.xlu0 %v1664, 126
        %v1669 = vpop.permute.xlu0 %1668
        %1670 = vrot.lane.b32.xlu0 %v1665, 126
        %v1671 = vpop.permute.xlu0 %1670
        %v1674 = vadd.f32 %v1616, %v1669
        %v1675 = vadd.f32 %v1617, %v1671
        %s1676 = sld [smem:[#allocation4 + $0x49]]
        %v1677 = vstv %s1676
        %v1678 = vmul.f32 %v1632, %v1677
        %v1679 = vmul.f32 %v1633, %v1677
        %1682 = vrot.lane.b32.xlu0 %v1678, 126
        %v1683 = vpop.permute.xlu0 %1682
        %1684 = vrot.lane.b32.xlu0 %v1679, 126
        %v1685 = vpop.permute.xlu0 %1684
        %v1688 = vadd.f32 %v1630, %v1683
        %v1689 = vadd.f32 %v1631, %v1685
        %s1690 = sld [smem:[#allocation4 + $0x4a]]
        %v1691 = vstv %s1690
        %v1692 = vmul.f32 %v1632, %v1691
        %v1693 = vmul.f32 %v1633, %v1691
        %1696 = vrot.lane.b32.xlu0 %v1692, 126
        %v1697 = vpop.permute.xlu0 %1696
        %1698 = vrot.lane.b32.xlu0 %v1693, 126
        %v1699 = vpop.permute.xlu0 %1698
        %v1702 = vadd.f32 %v1646, %v1697
        %v1703 = vadd.f32 %v1647, %v1699
        %s1704 = sld [smem:[#allocation4 + $0x4b]]
        %v1705 = vstv %s1704
        %v1706 = vmul.f32 %v1632, %v1705
        %v1707 = vmul.f32 %v1633, %v1705
        %1710 = vrot.lane.b32.xlu0 %v1706, 126
        %v1711 = vpop.permute.xlu0 %1710
        %1712 = vrot.lane.b32.xlu0 %v1707, 126
        %v1713 = vpop.permute.xlu0 %1712
        %v1716 = vadd.f32 %v1660, %v1711
        %v1717 = vadd.f32 %v1661, %v1713
        %s1718 = sld [smem:[#allocation4 + $0x4c]]
        %v1719 = vstv %s1718
        %v1720 = vmul.f32 %v1632, %v1719
        %v1721 = vmul.f32 %v1633, %v1719
        %1724 = vrot.lane.b32.xlu0 %v1720, 122
        %v1725 = vpop.permute.xlu0 %1724
        %1726 = vrot.lane.b32.xlu0 %v1721, 122
        %v1727 = vpop.permute.xlu0 %1726
        %v1730 = vadd.f32 %v1674, %v1725
        %v1731 = vadd.f32 %v1675, %v1727
        %v1732 = vld [vmem:[%s586 + $0x4] sm:$0xff]
        %v1733 = vld [vmem:[%s586 + $0xc] sm:$0xff]
        %s1734 = sld [smem:[#allocation4 + $0x4d]]
        %v1735 = vstv %s1734
        %v1736 = vmul.f32 %v1732, %v1735
        %v1737 = vmul.f32 %v1733, %v1735
        %1740 = vrot.lane.b32.xlu0 %v1736, 1
        %v1741 = vpop.permute.xlu0 %1740
        %1742 = vrot.lane.b32.xlu0 %v1737, 1
        %v1743 = vpop.permute.xlu0 %1742
        %v1746 = vadd.f32 %v1688, %v1741
        %v1747 = vadd.f32 %v1689, %v1743
        %s1748 = sld [smem:[#allocation4 + $0x4e]]
        %v1749 = vstv %s1748
        %v1750 = vmul.f32 %v1732, %v1749
        %v1751 = vmul.f32 %v1733, %v1749
        %1754 = vrot.lane.b32.xlu0 %v1750, 1
        %v1755 = vpop.permute.xlu0 %1754
        %1756 = vrot.lane.b32.xlu0 %v1751, 1
        %v1757 = vpop.permute.xlu0 %1756
        %v1760 = vadd.f32 %v1702, %v1755
        %v1761 = vadd.f32 %v1703, %v1757
        %s1762 = sld [smem:[#allocation4 + $0x4f]]
        %v1763 = vstv %s1762
        %v1764 = vmul.f32 %v1732, %v1763
        %v1765 = vmul.f32 %v1733, %v1763
        %1768 = vrot.lane.b32.xlu0 %v1764, 1
        %v1769 = vpop.permute.xlu0 %1768
        %1770 = vrot.lane.b32.xlu0 %v1765, 1
        %v1771 = vpop.permute.xlu0 %1770
        %v1774 = vadd.f32 %v1716, %v1769
        %v1775 = vadd.f32 %v1717, %v1771
        %s1776 = sld [smem:[#allocation4 + $0x50]]
        %v1777 = vstv %s1776
        %v1778 = vmul.f32 %v1732, %v1777
        %v1779 = vmul.f32 %v1733, %v1777
        %1782 = vrot.lane.b32.xlu0 %v1778, 125
        %v1783 = vpop.permute.xlu0 %1782
        %1784 = vrot.lane.b32.xlu0 %v1779, 125
        %v1785 = vpop.permute.xlu0 %1784
        %v1788 = vadd.f32 %v1730, %v1783
        %v1789 = vadd.f32 %v1731, %v1785
        %s1790 = sld [smem:[#allocation4 + $0x51]]
        %v1791 = vstv %s1790
        %v1792 = vmul.f32 %v1732, %v1791
        %v1793 = vmul.f32 %v1733, %v1791
        %1796 = vrot.lane.b32.xlu0 %v1792, 125
        %v1797 = vpop.permute.xlu0 %1796
        %1798 = vrot.lane.b32.xlu0 %v1793, 125
        %v1799 = vpop.permute.xlu0 %1798
        %v1802 = vadd.f32 %v1746, %v1797
        %v1803 = vadd.f32 %v1747, %v1799
        %s1804 = sld [smem:[#allocation4 + $0x52]]
        %v1805 = vstv %s1804
        %v1806 = vmul.f32 %v1732, %v1805
        %v1807 = vmul.f32 %v1733, %v1805
        %1810 = vrot.lane.b32.xlu0 %v1806, 125
        %v1811 = vpop.permute.xlu0 %1810
        %1812 = vrot.lane.b32.xlu0 %v1807, 125
        %v1813 = vpop.permute.xlu0 %1812
        %v1816 = vadd.f32 %v1760, %v1811
        %v1817 = vadd.f32 %v1761, %v1813
        %s1818 = sld [smem:[#allocation4 + $0x53]]
        %v1819 = vstv %s1818
        %v1820 = vmul.f32 %v1732, %v1819
        %v1821 = vmul.f32 %v1733, %v1819
        %1824 = vrot.lane.b32.xlu0 %v1820, 125
        %v1825 = vpop.permute.xlu0 %1824
        %1826 = vrot.lane.b32.xlu0 %v1821, 125
        %v1827 = vpop.permute.xlu0 %1826
        %v1830 = vadd.f32 %v1774, %v1825
        %v1831 = vadd.f32 %v1775, %v1827
        %v1832 = vld [vmem:[%s586 + $0x5] sm:$0xff]
        %v1833 = vld [vmem:[%s586 + $0xd] sm:$0xff]
        %s1834 = sld [smem:[#allocation4 + $0x54]]
        %v1835 = vstv %s1834
        %v1836 = vmul.f32 %v1832, %v1835
        %v1837 = vmul.f32 %v1833, %v1835
        %v1838 = vadd.f32 %v1788, %v1836
        %v1839 = vadd.f32 %v1789, %v1837
        %s1840 = sld [smem:[#allocation4 + $0x55]]
        %v1841 = vstv %s1840
        %v1842 = vmul.f32 %v1832, %v1841
        %v1843 = vmul.f32 %v1833, %v1841
        %v1844 = vadd.f32 %v1802, %v1842
        %v1845 = vadd.f32 %v1803, %v1843
        %s1846 = sld [smem:[#allocation4 + $0x56]]
        %v1847 = vstv %s1846
        %v1848 = vmul.f32 %v1832, %v1847
        %v1849 = vmul.f32 %v1833, %v1847
        %v1850 = vadd.f32 %v1816, %v1848
        %v1851 = vadd.f32 %v1817, %v1849
        %s1852 = sld [smem:[#allocation4 + $0x57]]
        %v1853 = vstv %s1852
        %v1854 = vmul.f32 %v1832, %v1853
        %v1855 = vmul.f32 %v1833, %v1853
        %v1856 = vadd.f32 %v1830, %v1854
        %v1857 = vadd.f32 %v1831, %v1855
        %s1858 = sld [smem:[#allocation4 + $0x58]]
        %v1859 = vstv %s1858
        %v1860 = vmul.f32 %v1832, %v1859
        %v1861 = vmul.f32 %v1833, %v1859
        %1864 = vrot.lane.b32.xlu0 %v1860, 124
        %v1865 = vpop.permute.xlu0 %1864
        %1866 = vrot.lane.b32.xlu0 %v1861, 124
        %v1867 = vpop.permute.xlu0 %1866
        %v1870 = vadd.f32 %v1838, %v1865
        %v1871 = vadd.f32 %v1839, %v1867
        %s1872 = sld [smem:[#allocation4 + $0x59]]
        %v1873 = vstv %s1872
        %v1874 = vmul.f32 %v1832, %v1873
        %v1875 = vmul.f32 %v1833, %v1873
        %1878 = vrot.lane.b32.xlu0 %v1874, 124
        %v1879 = vpop.permute.xlu0 %1878
        %1880 = vrot.lane.b32.xlu0 %v1875, 124
        %v1881 = vpop.permute.xlu0 %1880
        %v1884 = vadd.f32 %v1844, %v1879
        %v1885 = vadd.f32 %v1845, %v1881
        %s1886 = sld [smem:[#allocation4 + $0x5a]]
        %v1887 = vstv %s1886
        %v1888 = vmul.f32 %v1832, %v1887
        %v1889 = vmul.f32 %v1833, %v1887
        %1892 = vrot.lane.b32.xlu0 %v1888, 124
        %v1893 = vpop.permute.xlu0 %1892
        %1894 = vrot.lane.b32.xlu0 %v1889, 124
        %v1895 = vpop.permute.xlu0 %1894
        %v1898 = vadd.f32 %v1850, %v1893
        %v1899 = vadd.f32 %v1851, %v1895
        %v1900 = vld [vmem:[%s586 + $0x6] sm:$0xff]
        %v1901 = vld [vmem:[%s586 + $0xe] sm:$0xff]
        %s1902 = sld [smem:[#allocation4 + $0x5b]]
        %v1903 = vstv %s1902
        %v1904 = vmul.f32 %v1900, %v1903
        %v1905 = vmul.f32 %v1901, %v1903
        %1908 = vrot.lane.b32.xlu0 %v1904, 3
        %v1909 = vpop.permute.xlu0 %1908
        %1910 = vrot.lane.b32.xlu0 %v1905, 3
        %v1911 = vpop.permute.xlu0 %1910
        %v1914 = vadd.f32 %v1856, %v1909
        %v1915 = vadd.f32 %v1857, %v1911
        %s1916 = sld [smem:[#allocation4 + $0x5c]]
        %v1917 = vstv %s1916
        %v1918 = vmul.f32 %v1900, %v1917
        %v1919 = vmul.f32 %v1901, %v1917
        %1922 = vrot.lane.b32.xlu0 %v1918, 127
        %v1923 = vpop.permute.xlu0 %1922
        %1924 = vrot.lane.b32.xlu0 %v1919, 127
        %v1925 = vpop.permute.xlu0 %1924
        %v1928 = vadd.f32 %v1870, %v1923
        %v1929 = vadd.f32 %v1871, %v1925
        %s1930 = sld [smem:[#allocation4 + $0x5d]]
        %v1931 = vstv %s1930
        %v1932 = vmul.f32 %v1900, %v1931
        %v1933 = vmul.f32 %v1901, %v1931
        %1936 = vrot.lane.b32.xlu0 %v1932, 127
        %v1937 = vpop.permute.xlu0 %1936
        %1938 = vrot.lane.b32.xlu0 %v1933, 127
        %v1939 = vpop.permute.xlu0 %1938
        %v1942 = vadd.f32 %v1884, %v1937
        %v1943 = vadd.f32 %v1885, %v1939
        %s1944 = sld [smem:[#allocation4 + $0x5e]]
        %v1945 = vstv %s1944
        %v1946 = vmul.f32 %v1900, %v1945
        %v1947 = vmul.f32 %v1901, %v1945
        %1950 = vrot.lane.b32.xlu0 %v1946, 127
        %v1951 = vpop.permute.xlu0 %1950
        %1952 = vrot.lane.b32.xlu0 %v1947, 127
        %v1953 = vpop.permute.xlu0 %1952
        %v1956 = vadd.f32 %v1898, %v1951
        %v1957 = vadd.f32 %v1899, %v1953
        %s1958 = sld [smem:[#allocation4 + $0x5f]]
        %v1959 = vstv %s1958
        %v1960 = vmul.f32 %v1900, %v1959
        %v1961 = vmul.f32 %v1901, %v1959
        %1964 = vrot.lane.b32.xlu0 %v1960, 127
        %v1965 = vpop.permute.xlu0 %1964
        %1966 = vrot.lane.b32.xlu0 %v1961, 127
        %v1967 = vpop.permute.xlu0 %1966
        %v1970 = vadd.f32 %v1914, %v1965
        %v1971 = vadd.f32 %v1915, %v1967
        %s1972 = sld [smem:[#allocation4 + $0x60]]
        %v1973 = vstv %s1972
        %v1974 = vmul.f32 %v1900, %v1973
        %v1975 = vmul.f32 %v1901, %v1973
        %1978 = vrot.lane.b32.xlu0 %v1974, 123
        %v1979 = vpop.permute.xlu0 %1978
        %1980 = vrot.lane.b32.xlu0 %v1975, 123
        %v1981 = vpop.permute.xlu0 %1980
        %v1984 = vadd.f32 %v1928, %v1979
        %v1985 = vadd.f32 %v1929, %v1981
        %s1986 = sld [smem:[#allocation4 + $0x61]]
        %v1987 = vstv %s1986
        %v1988 = vmul.f32 %v1900, %v1987
        %v1989 = vmul.f32 %v1901, %v1987
        %1992 = vrot.lane.b32.xlu0 %v1988, 123
        %v1993 = vpop.permute.xlu0 %1992
        %1994 = vrot.lane.b32.xlu0 %v1989, 123
        %v1995 = vpop.permute.xlu0 %1994
        %v1998 = vadd.f32 %v1942, %v1993
        %v1999 = vadd.f32 %v1943, %v1995
        %2002 = vrot.lane.b32.xlu0 %v1998, 127
        %v2003 = vpop.permute.xlu0 %2002
        %2004 = vrot.lane.b32.xlu0 %v1999, 127
        %v2005 = vpop.permute.xlu0 %2004
        %v2008 = vadd.f32 %v1984, %v2003
        %v2009 = vadd.f32 %v1985, %v2005
        %2012 = vrot.lane.b32.xlu0 %v1970, 127
        %v2013 = vpop.permute.xlu0 %2012
        %2014 = vrot.lane.b32.xlu0 %v1971, 127
        %v2015 = vpop.permute.xlu0 %2014
        %v2018 = vadd.f32 %v1956, %v2013
        %v2019 = vadd.f32 %v1957, %v2015
        %2022 = vrot.lane.b32.xlu0 %v2018, 126
        %v2023 = vpop.permute.xlu0 %2022
        %2024 = vrot.lane.b32.xlu0 %v2019, 126
        %v2025 = vpop.permute.xlu0 %2024
        %v2028 = vadd.f32 %v2008, %v2023
        %v2029 = vadd.f32 %v2009, %v2025
        %s2030 = sld [smem:[#allocation4 + $0x62]]
        %v2031 = vstv %s2030
        %v2032 = vadd.f32 %v2028, %v2031
        %v2033 = vadd.f32 %v2029, %v2031
        %v2034 = vxor.u32 %v2032, 2147483648
        %v2035 = vxor.u32 %v2033, 2147483648
        %v2036 = vmul.f32 %v2034, 1.442695
        %v2037 = vpow.pop %v2036
        %v2038 = vmul.f32 %v2035, 1.442695
        %v2039 = vpow.pop %v2038
        %v2040 = vadd.f32 %v2037, 1.0
        %v2041 = vadd.f32 %v2039, 1.0
        %v2042 = vrcp.pop %v2040
        %v2043 = vmul.f32 1.0, %v2042
        %v2044 = vrcp.pop %v2041
        %v2045 = vmul.f32 1.0, %v2044
        %v2046 = vlaneseq
        %vm2047 = vcmp.ge.s32.totalorder %v2046, 0
        %vm2048 = vcmp.lt.s32.totalorder %v2046, 16
        %vm2049 = vmand %vm2047, %vm2048
        %2050 = vst.msk [vmem:[#allocation3] sm:$0x1] %vm2049, %v2043
        %v2053 = vunpack.c.l.s4 1966171168
        %v2054 = vunpack.c.0.s8 %v2053
        %v2055 = vlaneseq
        %v2056 = vshrl.u32 %v2055, 7
        %v2057 = vsub.s32 %v2054, %v2056
        %v2058 = vrot.slane %v2043, %v2057
        %v2059 = vcombine.high %v2058, %v2058
        %v2061 = vunpack.c.l.s4 1966171168
        %v2062 = vunpack.c.0.s8 %v2061
        %v2063 = vlaneseq
        %v2064 = vshrl.u32 %v2063, 7
        %v2065 = vsub.s32 %v2062, %v2064
        %v2066 = vrot.slane %v2058, %v2065
        %v2068 = vunpack.c.l.s4 1966171168
        %v2069 = vunpack.c.0.s8 %v2068
        %v2070 = vlaneseq
        %v2071 = vshrl.u32 %v2070, 7
        %v2072 = vsub.s32 %v2069, %v2071
        %v2073 = vrot.slane %v2059, %v2072
        %2074 = vrot.lane.b32.xlu0 %v2073, 16
        %v2075 = vpop.permute.xlu0 %2074
        %vm2077 = vcmp.ge.s32.totalorder %v2046, 16
        %vm2078 = vcmp.lt.s32.totalorder %v2046, 32
        %vm2079 = vmand %vm2077, %vm2078
        %2080 = vst.msk [vmem:[#allocation3] sm:$0x1] %vm2079, %v2075
        %v2081 = vcombine.high %v2066, %v2066
        %2082 = vrot.lane.b32.xlu0 %v2081, 32
        %v2083 = vpop.permute.xlu0 %2082
        %vm2085 = vcmp.ge.s32.totalorder %v2046, 32
        %vm2086 = vcmp.lt.s32.totalorder %v2046, 48
        %vm2087 = vmand %vm2085, %vm2086
        %2088 = vst.msk [vmem:[#allocation3] sm:$0x1] %vm2087, %v2083
        %v2089 = vcombine.high %v2073, %v2073
        %2090 = vrot.lane.b32.xlu0 %v2089, 48
        %v2091 = vpop.permute.xlu0 %2090
        %vm2093 = vcmp.ge.s32.totalorder %v2046, 48
        %vm2094 = vcmp.lt.s32.totalorder %v2046, 64
        %vm2095 = vmand %vm2093, %vm2094
        %2096 = vst.msk [vmem:[#allocation3] sm:$0x1] %vm2095, %v2091
        %v2097 = vcombine.high %v2043, %v2043
        %v2099 = vunpack.c.l.s4 1966171168
        %v2100 = vunpack.c.0.s8 %v2099
        %v2101 = vlaneseq
        %v2102 = vshrl.u32 %v2101, 7
        %v2103 = vsub.s32 %v2100, %v2102
        %v2104 = vrot.slane %v2097, %v2103
        %v2106 = vunpack.c.l.s4 1966171168
        %v2107 = vunpack.c.0.s8 %v2106
        %v2108 = vlaneseq
        %v2109 = vshrl.u32 %v2108, 7
        %v2110 = vsub.s32 %v2107, %v2109
        %v2111 = vrot.slane %v2104, %v2110
        %2112 = vrot.lane.b32.xlu0 %v2111, 64
        %v2113 = vpop.permute.xlu0 %2112
        %vm2115 = vcmp.ge.s32.totalorder %v2046, 64
        %vm2116 = vcmp.lt.s32.totalorder %v2046, 80
        %vm2117 = vmand %vm2115, %vm2116
        %2118 = vst.msk [vmem:[#allocation3] sm:$0x1] %vm2117, %v2113
        %v2119 = vcombine.high %v2104, %v2104
        %v2121 = vunpack.c.l.s4 1966171168
        %v2122 = vunpack.c.0.s8 %v2121
        %v2123 = vlaneseq
        %v2124 = vshrl.u32 %v2123, 7
        %v2125 = vsub.s32 %v2122, %v2124
        %v2126 = vrot.slane %v2119, %v2125
        %2127 = vrot.lane.b32.xlu0 %v2126, 80
        %v2128 = vpop.permute.xlu0 %2127
        %vm2130 = vcmp.ge.s32.totalorder %v2046, 80
        %vm2131 = vcmp.lt.s32.totalorder %v2046, 96
        %vm2132 = vmand %vm2130, %vm2131
        %2133 = vst.msk [vmem:[#allocation3] sm:$0x1] %vm2132, %v2128
        %v2134 = vcombine.high %v2111, %v2111
        %2135 = vrot.lane.b32.xlu0 %v2134, 96
        %v2136 = vpop.permute.xlu0 %2135
        %vm2138 = vcmp.ge.s32.totalorder %v2046, 96
        %vm2139 = vcmp.lt.s32.totalorder %v2046, 112
        %vm2140 = vmand %vm2138, %vm2139
        %2141 = vst.msk [vmem:[#allocation3] sm:$0x1] %vm2140, %v2136
        %v2142 = vcombine.high %v2126, %v2126
        %2143 = vrot.lane.b32.xlu0 %v2142, 112
        %v2144 = vpop.permute.xlu0 %2143
        %vm2146 = vcmp.ge.s32.totalorder %v2046, 112
        %vm2147 = vcmp.lt.s32.totalorder %v2046, 128
        %vm2148 = vmand %vm2146, %vm2147
        %2149 = vst.msk [vmem:[#allocation3] sm:$0x1] %vm2148, %v2144
        %2150 = vst.msk [vmem:[#allocation3 + $0x1] sm:$0x1] %vm2049, %v2045
        %v2153 = vunpack.c.l.s4 1966171168
        %v2154 = vunpack.c.0.s8 %v2153
        %v2155 = vlaneseq
        %v2156 = vshrl.u32 %v2155, 7
        %v2157 = vsub.s32 %v2154, %v2156
        %v2158 = vrot.slane %v2045, %v2157
        %v2159 = vcombine.high %v2158, %v2158
        %v2161 = vunpack.c.l.s4 1966171168
        %v2162 = vunpack.c.0.s8 %v2161
        %v2163 = vlaneseq
        %v2164 = vshrl.u32 %v2163, 7
        %v2165 = vsub.s32 %v2162, %v2164
        %v2166 = vrot.slane %v2158, %v2165
        %v2168 = vunpack.c.l.s4 1966171168
        %v2169 = vunpack.c.0.s8 %v2168
        %v2170 = vlaneseq
        %v2171 = vshrl.u32 %v2170, 7
        %v2172 = vsub.s32 %v2169, %v2171
        %v2173 = vrot.slane %v2159, %v2172
        %2174 = vrot.lane.b32.xlu0 %v2173, 16
        %v2175 = vpop.permute.xlu0 %2174
        %2177 = vst.msk [vmem:[#allocation3 + $0x1] sm:$0x1] %vm2079, %v2175
        %v2178 = vcombine.high %v2166, %v2166
        %2179 = vrot.lane.b32.xlu0 %v2178, 32
        %v2180 = vpop.permute.xlu0 %2179
        %2182 = vst.msk [vmem:[#allocation3 + $0x1] sm:$0x1] %vm2087, %v2180
        %v2183 = vcombine.high %v2173, %v2173
        %2184 = vrot.lane.b32.xlu0 %v2183, 48
        %v2185 = vpop.permute.xlu0 %2184
        %2187 = vst.msk [vmem:[#allocation3 + $0x1] sm:$0x1] %vm2095, %v2185
        %v2188 = vcombine.high %v2045, %v2045
        %v2190 = vunpack.c.l.s4 1966171168
        %v2191 = vunpack.c.0.s8 %v2190
        %v2192 = vlaneseq
        %v2193 = vshrl.u32 %v2192, 7
        %v2194 = vsub.s32 %v2191, %v2193
        %v2195 = vrot.slane %v2188, %v2194
        %v2197 = vunpack.c.l.s4 1966171168
        %v2198 = vunpack.c.0.s8 %v2197
        %v2199 = vlaneseq
        %v2200 = vshrl.u32 %v2199, 7
        %v2201 = vsub.s32 %v2198, %v2200
        %v2202 = vrot.slane %v2195, %v2201
        %2203 = vrot.lane.b32.xlu0 %v2202, 64
        %v2204 = vpop.permute.xlu0 %2203
        %2206 = vst.msk [vmem:[#allocation3 + $0x1] sm:$0x1] %vm2117, %v2204
        %v2207 = vcombine.high %v2195, %v2195
        %v2209 = vunpack.c.l.s4 1966171168
        %v2210 = vunpack.c.0.s8 %v2209
        %v2211 = vlaneseq
        %v2212 = vshrl.u32 %v2211, 7
        %v2213 = vsub.s32 %v2210, %v2212
        %v2214 = vrot.slane %v2207, %v2213
        %2215 = vrot.lane.b32.xlu0 %v2214, 80
        %v2216 = vpop.permute.xlu0 %2215
        %2218 = vst.msk [vmem:[#allocation3 + $0x1] sm:$0x1] %vm2132, %v2216
        %v2219 = vcombine.high %v2202, %v2202
        %2220 = vrot.lane.b32.xlu0 %v2219, 96
        %v2221 = vpop.permute.xlu0 %2220
        %2223 = vst.msk [vmem:[#allocation3 + $0x1] sm:$0x1] %vm2140, %v2221
        %v2224 = vcombine.high %v2214, %v2214
        %2225 = vrot.lane.b32.xlu0 %v2224, 112
        %v2226 = vpop.permute.xlu0 %2225
        %2228 = vst.msk [vmem:[#allocation3 + $0x1] sm:$0x1] %vm2148, %v2226
        %v2229 = vld [vmem:[#allocation3] sm:$0x3]
        %v2231 = vlaneseq
        %v2232 = vshrl.u32 %v2231, 7
        %v2233 = vsub.s32 0, %v2232
        %v2234 = vrot.slane %v2229, %v2233
        %v2235 = vlaneseq
        %v2236 = vshrl.u32 %v2235, 7
        %v2237 = vsub.s32 1, %v2236
        %v2238 = vrot.slane %v2229, %v2237
        %v2241 = vmul.f32 %v527, %v2234
        %v2242 = vmul.f32 %v528, %v2238
        %v2243 = vmul.f32 %v529, %v2234
        %v2244 = vmul.f32 %v530, %v2238
        %v2245 = vmul.f32 %v531, %v2234
        %v2246 = vmul.f32 %v532, %v2238
        %v2247 = vmul.f32 %v533, %v2234
        %v2248 = vmul.f32 %v534, %v2238
        %2249 = vst [vmem:[%s211] sm:$0xff] %v2241
        %2250 = vst [vmem:[%s211 + $0x8] sm:$0xff] %v2242
        %2251 = vst [vmem:[%s211 + $0x10] sm:$0xff] %v2243
        %2252 = vst [vmem:[%s211 + $0x18] sm:$0xff] %v2244
        %2253 = vst [vmem:[%s211 + $0x20] sm:$0xff] %v2245
        %2254 = vst [vmem:[%s211 + $0x28] sm:$0xff] %v2246
        %2255 = vst [vmem:[%s211 + $0x30] sm:$0xff] %v2247
        %2256 = vst [vmem:[%s211 + $0x38] sm:$0xff] %v2248
        %p2257 = scmp.lt.s32.totalorder %s16, 1
        %s2258 = scalar_select %p2257, %s16, 1
        %s2259 = smul.addr %s2258, 8
        %s2260 = smul.addr %s2259, 8
        %s2261 = scalar_lea.vmem %s4, %s2260
        // Predicated region
        $region41: #{cbam_forward.1} parent=35 // pred_check
          %p2262 = pneg %p123
        $region42: #{cbam_forward.1} parent=35 // pred_check_branch
          %2264 = sbr.rel (%p2262) target = $region44
        $region43: #{cbam_forward.1} parent=35 // pred_region
          _
        $region44: #{cbam_forward.1} parent=35 // pred_fallthru
          _
      $region36: #{cbam_forward.1} parent=5 // pred_fallthru
        _
      %p2265 = scmp.le.s32.totalorder 2, %s11
      // Predicated region
      $region45: #{cbam_forward.1} parent=5 // pred_check
        %p2266 = pneg %p2265
      $region46: #{cbam_forward.1} parent=5 // pred_check_branch
        %2268 = sbr.rel (%p2266) target = $region48
      $region47: #{cbam_forward.1} parent=5 // pred_region
        %s2269 = ssub.s32 %s11, 2
        // Predicated region
        $region49: #{cbam_forward.1} parent=47 // pred_check
          %p2270 = pneg %p129
        $region50: #{cbam_forward.1} parent=47 // pred_check_branch
          %2272 = sbr.rel (%p2270) target = $region52
        $region51: #{cbam_forward.1} parent=47 // pred_region
          %p2273 = scmp.lt.s32.totalorder %s17, 1
          %s2274 = scalar_select %p2273, %s17, 1
          %s2275 = smul.addr %s2274, 8
          %s2276 = smul.addr %s2275, 8
          %s2277 = scalar_lea.vmem %s4, %s2276
        $region52: #{cbam_forward.1} parent=47 // pred_fallthru
          _
      $region48: #{cbam_forward.1} parent=5 // pred_fallthru
        _
    $region6: #{cbam_forward.1} parent=1 // loop_footer
      %s15 = sadd.s32 1, %s11
    $region7: #{cbam_forward.1} parent=1 // loop_footer_branch
      %10 = sbr.rel target = $region3
    $region8: #{cbam_forward.1} parent=1 // loop_exit
      _
    %2278 = vsyncpa [#allocation5], 1
    %s2279 = scalar_lea.sflag [#allocation5], 1
    %2280 = vsyncpa %s2279, 1

</llo_original>
